<compile_context>
chip_gen: v7x
topology: tpu7x:2x2x1
jax: 0.10.0
libtpu: 0.0.40
codegen_flags: <defaults>
</compile_context>

<pallas_src>
import functools

import jax
import jax.numpy as jnp
from jax.experimental import pallas as pl
from jax.experimental.pallas import tpu as pltpu


_FRAME = 15                     # spatial frame size (input is 15x15)
_NPIX = _FRAME * _FRAME         # 225 flat positions per image
_XPAD_L, _XPAD_R = 128, 48      # conv1 tap shifts are in [-16, 48]
_APAD_L, _APAD_R = 128, 16      # conv2 tap shifts are in [-16, 16]


def _net_kernel(x_ref, mask_ref, w1_ref, b1_ref, w2_ref, b2_ref, w3_ref,
                b3_ref, o_ref, xpad_ref, apad_ref, *, depth, npos):
    """Fused forward pass for one batch tile.

    x_ref    : (1, Cp, NP)        input images, flat frames on the lane axis
    mask_ref : (1, NP)            1.0 at interior frame positions, 0.0 on ring
    w1_ref   : (25, F, Cp)        conv1 weights, one (F, Cp) slab per 5x5 tap
    b1_ref   : (F, 1)
    w2_ref   : (max(1,depth-1)*9, F, F)   conv2 weights, (F, F) per 3x3 tap
    b2_ref   : (max(1,depth-1), F, 1)
    w3_ref   : (1, F)             conv3 (1x1) weights
    b3_ref   : (1, 1)
    o_ref    : (1, 1, NP)         conv3 result, lane-dense flat frames
    xpad_ref : (Cp, XPAD_L + NP + XPAD_R)  zero-guarded input frame (VMEM)
    apad_ref : (F,  APAD_L + NP + APAD_R)  zero-guarded activation frame (VMEM)
    """
    NP = npos
    F = w1_ref.shape[1]
    mask = mask_ref[...]                                   # (1, NP)

    # Stage the input in a zero-guarded VMEM frame (guards give every tap a
    # valid, constant lane shift; garbage only feeds masked ring outputs).
    xpad_ref[...] = jnp.zeros(xpad_ref.shape, jnp.float32)
    xpad_ref[:, _XPAD_L:_XPAD_L + NP] = x_ref[0]

    # conv1: 5x5 valid -> one (F, Cp) @ (Cp, NP) matmul per tap, 25 taps.
    acc = jnp.zeros((F, NP), jnp.float32)
    for kh in range(5):
        for kw in range(5):
            s = _XPAD_L + (kh - 1) * _FRAME + (kw - 1)
            acc = acc + jnp.dot(w1_ref[kh * 5 + kw],
                                xpad_ref[:, s:s + NP],
                                preferred_element_type=jnp.float32)
    act = jnp.maximum(acc + b1_ref[...], 0.0) * mask       # ReLU + zero ring

    # conv2 layers: 3x3 SAME; the masked zero ring provides the padding.
    apad_ref[...] = jnp.zeros(apad_ref.shape, jnp.float32)
    for li in range(depth - 1):
        apad_ref[:, _APAD_L:_APAD_L + NP] = act
        acc = jnp.zeros((F, NP), jnp.float32)
        for kh in range(3):
            for kw in range(3):
                s = _APAD_L + (kh - 1) * _FRAME + (kw - 1)
                acc = acc + jnp.dot(w2_ref[li * 9 + kh * 3 + kw],
                                    apad_ref[:, s:s + NP],
                                    preferred_element_type=jnp.float32)
        act = jnp.maximum(acc + b2_ref[li], 0.0) * mask

    # conv3: 1x1, F -> 1.  Result is a lane-dense (1, NP) row.
    y = jnp.dot(w3_ref[...], act,
                preferred_element_type=jnp.float32) + b3_ref[...]
    o_ref[0] = y


def net_forward(x_nchw, params, depth, *, batch_tile=None):
    """PyTorch-equivalent forward; returns (N, 121)."""
    N, Cin, H, W = x_nchw.shape
    if (H, W) != (_FRAME, _FRAME):
        raise ValueError("Net requires 15x15 inputs so that view(-1,121) holds")
    F = params["conv1"][0].shape[-1]

    if batch_tile is None:
        batch_tile = max(1, -(-N // 2))      # <= 2 grid steps (v7x: both TCs)
    n_tiles = -(-N // batch_tile)
    n_pad = n_tiles * batch_tile
    NP = batch_tile * _NPIX
    Cp = ((Cin + 7) // 8) * 8                # pad channels to a sublane multiple

    # ---- input layout: (n_tiles, Cp, batch_tile*225), image-major flat frames
    x = x_nchw.astype(jnp.float32)
    if n_pad != N:
        x = jnp.pad(x, ((0, n_pad - N), (0, 0), (0, 0), (0, 0)))
    if Cp != Cin:
        x = jnp.pad(x, ((0, 0), (0, Cp - Cin), (0, 0), (0, 0)))
    x_tiles = (x.reshape(n_tiles, batch_tile, Cp, _NPIX)
                 .transpose(0, 2, 1, 3)
                 .reshape(n_tiles, Cp, NP))

    # ---- interior mask: 1.0 where frame (r, c) with r, c in [1, 11]
    rc = jnp.arange(_FRAME)
    v = ((rc >= 1) & (rc <= 11)).astype(jnp.float32)
    frame_mask = (v[:, None] * v[None, :]).reshape(1, _NPIX)
    mask = jnp.tile(frame_mask, (1, batch_tile))            # (1, NP)

    # ---- weights: tap-major 2D slabs (Cout rows, Cin cols)
    w1, b1 = params["conv1"]                                 # (5,5,Cin,F), (1,F)
    w1_t = jnp.transpose(w1, (0, 1, 3, 2)).reshape(25, F, Cin)
    if Cp != Cin:
        w1_t = jnp.pad(w1_t, ((0, 0), (0, 0), (0, Cp - Cin)))
    b1_t = b1.reshape(F, 1)
    if depth > 1:
        w2_t = jnp.stack([jnp.transpose(w, (0, 1, 3, 2)).reshape(9, F, F)
                          for (w, _) in params["conv2"]]
                         ).reshape((depth - 1) * 9, F, F)
        b2_t = jnp.stack([b.reshape(F, 1) for (_, b) in params["conv2"]])
    else:
        w2_t = jnp.zeros((9, F, F), jnp.float32)
        b2_t = jnp.zeros((1, F, 1), jnp.float32)
    w3, b3 = params["conv3"]                                 # (1,1,F,1), (1,1)
    w3_t = w3.reshape(1, F)
    b3_t = b3.reshape(1, 1)

    kernel = functools.partial(_net_kernel, depth=depth, npos=NP)
    out = pl.pallas_call(
        kernel,
        out_shape=jax.ShapeDtypeStruct((n_tiles, 1, NP), jnp.float32),
        grid=(n_tiles,),
        in_specs=[
            pl.BlockSpec((1, Cp, NP), lambda i: (i, 0, 0)),
            pl.BlockSpec((1, NP), lambda i: (0, 0)),
            pl.BlockSpec((25, F, Cp), lambda i: (0, 0, 0)),
            pl.BlockSpec((F, 1), lambda i: (0, 0)),
            pl.BlockSpec(w2_t.shape, lambda i: (0, 0, 0)),
            pl.BlockSpec(b2_t.shape, lambda i: (0, 0, 0)),
            pl.BlockSpec((1, F), lambda i: (0, 0)),
            pl.BlockSpec((1, 1), lambda i: (0, 0)),
        ],
        out_specs=pl.BlockSpec((1, 1, NP), lambda i: (i, 0, 0)),
        scratch_shapes=[
            pltpu.VMEM((Cp, _XPAD_L + NP + _XPAD_R), jnp.float32),
            pltpu.VMEM((F, _APAD_L + NP + _APAD_R), jnp.float32),
        ],
        compiler_params=pltpu.CompilerParams(
            dimension_semantics=("parallel",)),
    )(x_tiles, mask, w1_t, b1_t, w2_t, b2_t, w3_t, b3_t)

    # Extract the valid 11x11 interior of each frame -> (N, 121)  (== view(-1,121))
    out = out.reshape(n_pad, _FRAME, _FRAME)[:N, 1:12, 1:12].reshape(N, 121)
    return out


def init_params(key, depth, filters_count, in_channel):
    k = key

    def nxt():
        nonlocal k
        k, sub = jax.random.split(k)
        return sub

    params = {
        "conv1": (
            0.1 * jax.random.normal(nxt(), (5, 5, in_channel, filters_count),
                                    jnp.float32),
            0.1 * jax.random.normal(nxt(), (1, filters_count), jnp.float32),
        ),
        "conv2": [
            (
                0.1 * jax.random.normal(nxt(),
                                        (3, 3, filters_count, filters_count),
                                        jnp.float32),
                0.1 * jax.random.normal(nxt(), (1, filters_count),
                                        jnp.float32),
            )
            for _ in range(depth - 1)
        ],
        "conv3": (
            0.1 * jax.random.normal(nxt(), (1, 1, filters_count, 1),
                                    jnp.float32),
            0.1 * jax.random.normal(nxt(), (1, 1), jnp.float32),
        ),
    }
    return params


def net_forward_reference(x_nchw, params, depth):
    """Pure-JAX reference using lax.conv for correctness checking."""
    dn = ("NHWC", "HWIO", "NHWC")
    x = jnp.transpose(x_nchw, (0, 2, 3, 1)).astype(jnp.float32)

    def conv(x, w, b, pad):
        y = jax.lax.conv_general_dilated(x, w, (1, 1), pad,
                                         dimension_numbers=dn)
        return y + b[0]

    w1, b1 = params["conv1"]
    x = jax.nn.relu(conv(x, w1, b1, "VALID"))
    for i in range(depth - 1):
        w, b = params["conv2"][i]
        x = jax.nn.relu(conv(x, w, b, "SAME"))
    w3, b3 = params["conv3"]
    x = conv(x, w3, b3, "VALID")
    return x.reshape(-1, 121)


if __name__ == "__main__":
    depth = 3
    filters_count = 8
    in_channel = 3
    batch = 2
    H = W = 15  # required so that view(-1, 121) is valid (11x11 after conv1)

    key = jax.random.PRNGKey(0)
    key_x, key_p = jax.random.split(key)
    x = jax.random.normal(key_x, (batch, in_channel, H, W), jnp.float32)
    params = init_params(key_p, depth, filters_count, in_channel)

    out = net_forward(x, params, depth)
    out = jax.block_until_ready(out)

    assert out.shape == (batch, 121), out.shape

    ref = jax.block_until_ready(net_forward_reference(x, params, depth))
    assert jnp.allclose(out, ref, atol=1e-4, rtol=1e-4), (
        float(jnp.max(jnp.abs(out - ref))))

    print("KERNEL_OK")
</pallas_src>

<mosaic_0001>
module attributes {stable_mosaic.version = 11 : i64} {
  func.func @_net_kernel(%arg0: i32, %arg1: memref<1x8x225xf32, #tpu.memory_space<vmem>>, %arg2: memref<1x225xf32, #tpu.memory_space<vmem>>, %arg3: memref<25x8x8xf32, #tpu.memory_space<vmem>>, %arg4: memref<8x1xf32, #tpu.memory_space<vmem>>, %arg5: memref<18x8x8xf32, #tpu.memory_space<vmem>>, %arg6: memref<2x8x1xf32, #tpu.memory_space<vmem>>, %arg7: memref<1x8xf32, #tpu.memory_space<vmem>>, %arg8: memref<1x1xf32, #tpu.memory_space<vmem>>, %arg9: memref<1x1x225xf32, #tpu.memory_space<vmem>>, %arg10: memref<8x401xf32, #tpu.memory_space<vmem>>, %arg11: memref<8x369xf32, #tpu.memory_space<vmem>>) attributes {dimension_semantics = [#tpu.dimension_semantics<parallel>], iteration_bounds = array<i64: 2>, scalar_prefetch = 0 : i64, scratch_operands = 2 : i64, tpu.core_type = #tpu.core_type<tc>, window_params = [{transform_indices = @transform_0, window_bounds = array<i64: 1, 8, 225>}, {pipeline_mode = #tpu.pipeline_mode<synchronous>, transform_indices = @transform_1, window_bounds = array<i64: 1, 225>}, {pipeline_mode = #tpu.pipeline_mode<synchronous>, transform_indices = @transform_2, window_bounds = array<i64: 25, 8, 8>}, {pipeline_mode = #tpu.pipeline_mode<synchronous>, transform_indices = @transform_3, window_bounds = array<i64: 8, 1>}, {pipeline_mode = #tpu.pipeline_mode<synchronous>, transform_indices = @transform_4, window_bounds = array<i64: 18, 8, 8>}, {pipeline_mode = #tpu.pipeline_mode<synchronous>, transform_indices = @transform_5, window_bounds = array<i64: 2, 8, 1>}, {pipeline_mode = #tpu.pipeline_mode<synchronous>, transform_indices = @transform_6, window_bounds = array<i64: 1, 8>}, {pipeline_mode = #tpu.pipeline_mode<synchronous>, transform_indices = @transform_7, window_bounds = array<i64: 1, 1>}, {transform_indices = @transform_8, window_bounds = array<i64: 1, 1, 225>}]} {
    %c0 = arith.constant 0 : index
    %c0_0 = arith.constant 0 : index
    %0 = vector.load %arg2[%c0, %c0_0] : memref<1x225xf32, #tpu.memory_space<vmem>>, vector<1x225xf32>
    %cst = arith.constant 0.000000e+00 : f32
    %1 = vector.broadcast %cst : f32 to vector<8x401xf32>
    %c0_1 = arith.constant 0 : index
    %c0_2 = arith.constant 0 : index
    %2 = vector.load %arg10[%c0_1, %c0_2] : memref<8x401xf32, #tpu.memory_space<vmem>>, vector<8x401xf32>
    tpu.vector_store %arg10[%c0_1, %c0_2], %1 {strides = array<i32>} : memref<8x401xf32, #tpu.memory_space<vmem>>, vector<8x401xf32>,
    %c0_3 = arith.constant 0 : index
    %c0_4 = arith.constant 0 : index
    %c0_5 = arith.constant 0 : index
    %3 = vector.load %arg1[%c0_3, %c0_4, %c0_5] : memref<1x8x225xf32, #tpu.memory_space<vmem>>, vector<1x8x225xf32>
    %4 = vector.shape_cast %3 : vector<1x8x225xf32> to vector<8x225xf32>
    %c0_6 = arith.constant 0 : index
    %c128 = arith.constant 128 : index
    %5 = vector.load %arg10[%c0_6, %c128] : memref<8x401xf32, #tpu.memory_space<vmem>>, vector<8x225xf32>
    tpu.vector_store %arg10[%c0_6, %c128], %4 {strides = array<i32>} : memref<8x401xf32, #tpu.memory_space<vmem>>, vector<8x225xf32>,
    %cst_7 = arith.constant 0.000000e+00 : f32
    %6 = vector.broadcast %cst_7 : f32 to vector<8x225xf32>
    %c0_8 = arith.constant 0 : index
    %c0_9 = arith.constant 0 : index
    %c0_10 = arith.constant 0 : index
    %7 = vector.load %arg3[%c0_8, %c0_9, %c0_10] : memref<25x8x8xf32, #tpu.memory_space<vmem>>, vector<1x8x8xf32>
    %8 = vector.shape_cast %7 : vector<1x8x8xf32> to vector<8x8xf32>
    %c0_11 = arith.constant 0 : index
    %c112 = arith.constant 112 : index
    %9 = vector.load %arg10[%c0_11, %c112] : memref<8x401xf32, #tpu.memory_space<vmem>>, vector<8x225xf32>
    %cst_12 = arith.constant dense<0.000000e+00> : vector<8x225xf32>
    %10 = tpu.matmul %8, %9, %cst_12 {dimension_numbers = #tpu.dot_dimension_numbers<[1], [0], [0], [1], [0, 0, 1, 1], [], []>} : vector<8x8xf32>, vector<8x225xf32>, vector<8x225xf32> -> vector<8x225xf32>
    %11 = arith.addf %6, %10 : vector<8x225xf32>
    %c1 = arith.constant 1 : index
    %c0_13 = arith.constant 0 : index
    %c0_14 = arith.constant 0 : index
    %12 = vector.load %arg3[%c1, %c0_13, %c0_14] : memref<25x8x8xf32, #tpu.memory_space<vmem>>, vector<1x8x8xf32>
    %13 = vector.shape_cast %12 : vector<1x8x8xf32> to vector<8x8xf32>
    %c0_15 = arith.constant 0 : index
    %c113 = arith.constant 113 : index
    %14 = vector.load %arg10[%c0_15, %c113] : memref<8x401xf32, #tpu.memory_space<vmem>>, vector<8x225xf32>
    %cst_16 = arith.constant dense<0.000000e+00> : vector<8x225xf32>
    %15 = tpu.matmul %13, %14, %cst_16 {dimension_numbers = #tpu.dot_dimension_numbers<[1], [0], [0], [1], [0, 0, 1, 1], [], []>} : vector<8x8xf32>, vector<8x225xf32>, vector<8x225xf32> -> vector<8x225xf32>
    %16 = arith.addf %11, %15 : vector<8x225xf32>
    %c2 = arith.constant 2 : index
    %c0_17 = arith.constant 0 : index
    %c0_18 = arith.constant 0 : index
    %17 = vector.load %arg3[%c2, %c0_17, %c0_18] : memref<25x8x8xf32, #tpu.memory_space<vmem>>, vector<1x8x8xf32>
    %18 = vector.shape_cast %17 : vector<1x8x8xf32> to vector<8x8xf32>
    %c0_19 = arith.constant 0 : index
    %c114 = arith.constant 114 : index
    %19 = vector.load %arg10[%c0_19, %c114] : memref<8x401xf32, #tpu.memory_space<vmem>>, vector<8x225xf32>
    %cst_20 = arith.constant dense<0.000000e+00> : vector<8x225xf32>
    %20 = tpu.matmul %18, %19, %cst_20 {dimension_numbers = #tpu.dot_dimension_numbers<[1], [0], [0], [1], [0, 0, 1, 1], [], []>} : vector<8x8xf32>, vector<8x225xf32>, vector<8x225xf32> -> vector<8x225xf32>
    %21 = arith.addf %16, %20 : vector<8x225xf32>
    %c3 = arith.constant 3 : index
    %c0_21 = arith.constant 0 : index
    %c0_22 = arith.constant 0 : index
    %22 = vector.load %arg3[%c3, %c0_21, %c0_22] : memref<25x8x8xf32, #tpu.memory_space<vmem>>, vector<1x8x8xf32>
    %23 = vector.shape_cast %22 : vector<1x8x8xf32> to vector<8x8xf32>
    %c0_23 = arith.constant 0 : index
    %c115 = arith.constant 115 : index
    %24 = vector.load %arg10[%c0_23, %c115] : memref<8x401xf32, #tpu.memory_space<vmem>>, vector<8x225xf32>
    %cst_24 = arith.constant dense<0.000000e+00> : vector<8x225xf32>
    %25 = tpu.matmul %23, %24, %cst_24 {dimension_numbers = #tpu.dot_dimension_numbers<[1], [0], [0], [1], [0, 0, 1, 1], [], []>} : vector<8x8xf32>, vector<8x225xf32>, vector<8x225xf32> -> vector<8x225xf32>
    %26 = arith.addf %21, %25 : vector<8x225xf32>
    %c4 = arith.constant 4 : index
    %c0_25 = arith.constant 0 : index
    %c0_26 = arith.constant 0 : index
    %27 = vector.load %arg3[%c4, %c0_25, %c0_26] : memref<25x8x8xf32, #tpu.memory_space<vmem>>, vector<1x8x8xf32>
    %28 = vector.shape_cast %27 : vector<1x8x8xf32> to vector<8x8xf32>
    %c0_27 = arith.constant 0 : index
    %c116 = arith.constant 116 : index
    %29 = vector.load %arg10[%c0_27, %c116] : memref<8x401xf32, #tpu.memory_space<vmem>>, vector<8x225xf32>
    %cst_28 = arith.constant dense<0.000000e+00> : vector<8x225xf32>
    %30 = tpu.matmul %28, %29, %cst_28 {dimension_numbers = #tpu.dot_dimension_numbers<[1], [0], [0], [1], [0, 0, 1, 1], [], []>} : vector<8x8xf32>, vector<8x225xf32>, vector<8x225xf32> -> vector<8x225xf32>
    %31 = arith.addf %26, %30 : vector<8x225xf32>
    %c5 = arith.constant 5 : index
    %c0_29 = arith.constant 0 : index
    %c0_30 = arith.constant 0 : index
    %32 = vector.load %arg3[%c5, %c0_29, %c0_30] : memref<25x8x8xf32, #tpu.memory_space<vmem>>, vector<1x8x8xf32>
    %33 = vector.shape_cast %32 : vector<1x8x8xf32> to vector<8x8xf32>
    %c0_31 = arith.constant 0 : index
    %c127 = arith.constant 127 : index
    %34 = vector.load %arg10[%c0_31, %c127] : memref<8x401xf32, #tpu.memory_space<vmem>>, vector<8x225xf32>
    %cst_32 = arith.constant dense<0.000000e+00> : vector<8x225xf32>
    %35 = tpu.matmul %33, %34, %cst_32 {dimension_numbers = #tpu.dot_dimension_numbers<[1], [0], [0], [1], [0, 0, 1, 1], [], []>} : vector<8x8xf32>, vector<8x225xf32>, vector<8x225xf32> -> vector<8x225xf32>
    %36 = arith.addf %31, %35 : vector<8x225xf32>
    %c6 = arith.constant 6 : index
    %c0_33 = arith.constant 0 : index
    %c0_34 = arith.constant 0 : index
    %37 = vector.load %arg3[%c6, %c0_33, %c0_34] : memref<25x8x8xf32, #tpu.memory_space<vmem>>, vector<1x8x8xf32>
    %38 = vector.shape_cast %37 : vector<1x8x8xf32> to vector<8x8xf32>
    %c0_35 = arith.constant 0 : index
    %c128_36 = arith.constant 128 : index
    %39 = vector.load %arg10[%c0_35, %c128_36] : memref<8x401xf32, #tpu.memory_space<vmem>>, vector<8x225xf32>
    %cst_37 = arith.constant dense<0.000000e+00> : vector<8x225xf32>
    %40 = tpu.matmul %38, %39, %cst_37 {dimension_numbers = #tpu.dot_dimension_numbers<[1], [0], [0], [1], [0, 0, 1, 1], [], []>} : vector<8x8xf32>, vector<8x225xf32>, vector<8x225xf32> -> vector<8x225xf32>
    %41 = arith.addf %36, %40 : vector<8x225xf32>
    %c7 = arith.constant 7 : index
    %c0_38 = arith.constant 0 : index
    %c0_39 = arith.constant 0 : index
    %42 = vector.load %arg3[%c7, %c0_38, %c0_39] : memref<25x8x8xf32, #tpu.memory_space<vmem>>, vector<1x8x8xf32>
    %43 = vector.shape_cast %42 : vector<1x8x8xf32> to vector<8x8xf32>
    %c0_40 = arith.constant 0 : index
    %c129 = arith.constant 129 : index
    %44 = vector.load %arg10[%c0_40, %c129] : memref<8x401xf32, #tpu.memory_space<vmem>>, vector<8x225xf32>
    %cst_41 = arith.constant dense<0.000000e+00> : vector<8x225xf32>
    %45 = tpu.matmul %43, %44, %cst_41 {dimension_numbers = #tpu.dot_dimension_numbers<[1], [0], [0], [1], [0, 0, 1, 1], [], []>} : vector<8x8xf32>, vector<8x225xf32>, vector<8x225xf32> -> vector<8x225xf32>
    %46 = arith.addf %41, %45 : vector<8x225xf32>
    %c8 = arith.constant 8 : index
    %c0_42 = arith.constant 0 : index
    %c0_43 = arith.constant 0 : index
    %47 = vector.load %arg3[%c8, %c0_42, %c0_43] : memref<25x8x8xf32, #tpu.memory_space<vmem>>, vector<1x8x8xf32>
    %48 = vector.shape_cast %47 : vector<1x8x8xf32> to vector<8x8xf32>
    %c0_44 = arith.constant 0 : index
    %c130 = arith.constant 130 : index
    %49 = vector.load %arg10[%c0_44, %c130] : memref<8x401xf32, #tpu.memory_space<vmem>>, vector<8x225xf32>
    %cst_45 = arith.constant dense<0.000000e+00> : vector<8x225xf32>
    %50 = tpu.matmul %48, %49, %cst_45 {dimension_numbers = #tpu.dot_dimension_numbers<[1], [0], [0], [1], [0, 0, 1, 1], [], []>} : vector<8x8xf32>, vector<8x225xf32>, vector<8x225xf32> -> vector<8x225xf32>
    %51 = arith.addf %46, %50 : vector<8x225xf32>
    %c9 = arith.constant 9 : index
    %c0_46 = arith.constant 0 : index
    %c0_47 = arith.constant 0 : index
    %52 = vector.load %arg3[%c9, %c0_46, %c0_47] : memref<25x8x8xf32, #tpu.memory_space<vmem>>, vector<1x8x8xf32>
    %53 = vector.shape_cast %52 : vector<1x8x8xf32> to vector<8x8xf32>
    %c0_48 = arith.constant 0 : index
    %c131 = arith.constant 131 : index
    %54 = vector.load %arg10[%c0_48, %c131] : memref<8x401xf32, #tpu.memory_space<vmem>>, vector<8x225xf32>
    %cst_49 = arith.constant dense<0.000000e+00> : vector<8x225xf32>
    %55 = tpu.matmul %53, %54, %cst_49 {dimension_numbers = #tpu.dot_dimension_numbers<[1], [0], [0], [1], [0, 0, 1, 1], [], []>} : vector<8x8xf32>, vector<8x225xf32>, vector<8x225xf32> -> vector<8x225xf32>
    %56 = arith.addf %51, %55 : vector<8x225xf32>
    %c10 = arith.constant 10 : index
    %c0_50 = arith.constant 0 : index
    %c0_51 = arith.constant 0 : index
    %57 = vector.load %arg3[%c10, %c0_50, %c0_51] : memref<25x8x8xf32, #tpu.memory_space<vmem>>, vector<1x8x8xf32>
    %58 = vector.shape_cast %57 : vector<1x8x8xf32> to vector<8x8xf32>
    %c0_52 = arith.constant 0 : index
    %c142 = arith.constant 142 : index
    %59 = vector.load %arg10[%c0_52, %c142] : memref<8x401xf32, #tpu.memory_space<vmem>>, vector<8x225xf32>
    %cst_53 = arith.constant dense<0.000000e+00> : vector<8x225xf32>
    %60 = tpu.matmul %58, %59, %cst_53 {dimension_numbers = #tpu.dot_dimension_numbers<[1], [0], [0], [1], [0, 0, 1, 1], [], []>} : vector<8x8xf32>, vector<8x225xf32>, vector<8x225xf32> -> vector<8x225xf32>
    %61 = arith.addf %56, %60 : vector<8x225xf32>
    %c11 = arith.constant 11 : index
    %c0_54 = arith.constant 0 : index
    %c0_55 = arith.constant 0 : index
    %62 = vector.load %arg3[%c11, %c0_54, %c0_55] : memref<25x8x8xf32, #tpu.memory_space<vmem>>, vector<1x8x8xf32>
    %63 = vector.shape_cast %62 : vector<1x8x8xf32> to vector<8x8xf32>
    %c0_56 = arith.constant 0 : index
    %c143 = arith.constant 143 : index
    %64 = vector.load %arg10[%c0_56, %c143] : memref<8x401xf32, #tpu.memory_space<vmem>>, vector<8x225xf32>
    %cst_57 = arith.constant dense<0.000000e+00> : vector<8x225xf32>
    %65 = tpu.matmul %63, %64, %cst_57 {dimension_numbers = #tpu.dot_dimension_numbers<[1], [0], [0], [1], [0, 0, 1, 1], [], []>} : vector<8x8xf32>, vector<8x225xf32>, vector<8x225xf32> -> vector<8x225xf32>
    %66 = arith.addf %61, %65 : vector<8x225xf32>
    %c12 = arith.constant 12 : index
    %c0_58 = arith.constant 0 : index
    %c0_59 = arith.constant 0 : index
    %67 = vector.load %arg3[%c12, %c0_58, %c0_59] : memref<25x8x8xf32, #tpu.memory_space<vmem>>, vector<1x8x8xf32>
    %68 = vector.shape_cast %67 : vector<1x8x8xf32> to vector<8x8xf32>
    %c0_60 = arith.constant 0 : index
    %c144 = arith.constant 144 : index
    %69 = vector.load %arg10[%c0_60, %c144] : memref<8x401xf32, #tpu.memory_space<vmem>>, vector<8x225xf32>
    %cst_61 = arith.constant dense<0.000000e+00> : vector<8x225xf32>
    %70 = tpu.matmul %68, %69, %cst_61 {dimension_numbers = #tpu.dot_dimension_numbers<[1], [0], [0], [1], [0, 0, 1, 1], [], []>} : vector<8x8xf32>, vector<8x225xf32>, vector<8x225xf32> -> vector<8x225xf32>
    %71 = arith.addf %66, %70 : vector<8x225xf32>
    %c13 = arith.constant 13 : index
    %c0_62 = arith.constant 0 : index
    %c0_63 = arith.constant 0 : index
    %72 = vector.load %arg3[%c13, %c0_62, %c0_63] : memref<25x8x8xf32, #tpu.memory_space<vmem>>, vector<1x8x8xf32>
    %73 = vector.shape_cast %72 : vector<1x8x8xf32> to vector<8x8xf32>
    %c0_64 = arith.constant 0 : index
    %c145 = arith.constant 145 : index
    %74 = vector.load %arg10[%c0_64, %c145] : memref<8x401xf32, #tpu.memory_space<vmem>>, vector<8x225xf32>
    %cst_65 = arith.constant dense<0.000000e+00> : vector<8x225xf32>
    %75 = tpu.matmul %73, %74, %cst_65 {dimension_numbers = #tpu.dot_dimension_numbers<[1], [0], [0], [1], [0, 0, 1, 1], [], []>} : vector<8x8xf32>, vector<8x225xf32>, vector<8x225xf32> -> vector<8x225xf32>
    %76 = arith.addf %71, %75 : vector<8x225xf32>
    %c14 = arith.constant 14 : index
    %c0_66 = arith.constant 0 : index
    %c0_67 = arith.constant 0 : index
    %77 = vector.load %arg3[%c14, %c0_66, %c0_67] : memref<25x8x8xf32, #tpu.memory_space<vmem>>, vector<1x8x8xf32>
    %78 = vector.shape_cast %77 : vector<1x8x8xf32> to vector<8x8xf32>
    %c0_68 = arith.constant 0 : index
    %c146 = arith.constant 146 : index
    %79 = vector.load %arg10[%c0_68, %c146] : memref<8x401xf32, #tpu.memory_space<vmem>>, vector<8x225xf32>
    %cst_69 = arith.constant dense<0.000000e+00> : vector<8x225xf32>
    %80 = tpu.matmul %78, %79, %cst_69 {dimension_numbers = #tpu.dot_dimension_numbers<[1], [0], [0], [1], [0, 0, 1, 1], [], []>} : vector<8x8xf32>, vector<8x225xf32>, vector<8x225xf32> -> vector<8x225xf32>
    %81 = arith.addf %76, %80 : vector<8x225xf32>
    %c15 = arith.constant 15 : index
    %c0_70 = arith.constant 0 : index
    %c0_71 = arith.constant 0 : index
    %82 = vector.load %arg3[%c15, %c0_70, %c0_71] : memref<25x8x8xf32, #tpu.memory_space<vmem>>, vector<1x8x8xf32>
    %83 = vector.shape_cast %82 : vector<1x8x8xf32> to vector<8x8xf32>
    %c0_72 = arith.constant 0 : index
    %c157 = arith.constant 157 : index
    %84 = vector.load %arg10[%c0_72, %c157] : memref<8x401xf32, #tpu.memory_space<vmem>>, vector<8x225xf32>
    %cst_73 = arith.constant dense<0.000000e+00> : vector<8x225xf32>
    %85 = tpu.matmul %83, %84, %cst_73 {dimension_numbers = #tpu.dot_dimension_numbers<[1], [0], [0], [1], [0, 0, 1, 1], [], []>} : vector<8x8xf32>, vector<8x225xf32>, vector<8x225xf32> -> vector<8x225xf32>
    %86 = arith.addf %81, %85 : vector<8x225xf32>
    %c16 = arith.constant 16 : index
    %c0_74 = arith.constant 0 : index
    %c0_75 = arith.constant 0 : index
    %87 = vector.load %arg3[%c16, %c0_74, %c0_75] : memref<25x8x8xf32, #tpu.memory_space<vmem>>, vector<1x8x8xf32>
    %88 = vector.shape_cast %87 : vector<1x8x8xf32> to vector<8x8xf32>
    %c0_76 = arith.constant 0 : index
    %c158 = arith.constant 158 : index
    %89 = vector.load %arg10[%c0_76, %c158] : memref<8x401xf32, #tpu.memory_space<vmem>>, vector<8x225xf32>
    %cst_77 = arith.constant dense<0.000000e+00> : vector<8x225xf32>
    %90 = tpu.matmul %88, %89, %cst_77 {dimension_numbers = #tpu.dot_dimension_numbers<[1], [0], [0], [1], [0, 0, 1, 1], [], []>} : vector<8x8xf32>, vector<8x225xf32>, vector<8x225xf32> -> vector<8x225xf32>
    %91 = arith.addf %86, %90 : vector<8x225xf32>
    %c17 = arith.constant 17 : index
    %c0_78 = arith.constant 0 : index
    %c0_79 = arith.constant 0 : index
    %92 = vector.load %arg3[%c17, %c0_78, %c0_79] : memref<25x8x8xf32, #tpu.memory_space<vmem>>, vector<1x8x8xf32>
    %93 = vector.shape_cast %92 : vector<1x8x8xf32> to vector<8x8xf32>
    %c0_80 = arith.constant 0 : index
    %c159 = arith.constant 159 : index
    %94 = vector.load %arg10[%c0_80, %c159] : memref<8x401xf32, #tpu.memory_space<vmem>>, vector<8x225xf32>
    %cst_81 = arith.constant dense<0.000000e+00> : vector<8x225xf32>
    %95 = tpu.matmul %93, %94, %cst_81 {dimension_numbers = #tpu.dot_dimension_numbers<[1], [0], [0], [1], [0, 0, 1, 1], [], []>} : vector<8x8xf32>, vector<8x225xf32>, vector<8x225xf32> -> vector<8x225xf32>
    %96 = arith.addf %91, %95 : vector<8x225xf32>
    %c18 = arith.constant 18 : index
    %c0_82 = arith.constant 0 : index
    %c0_83 = arith.constant 0 : index
    %97 = vector.load %arg3[%c18, %c0_82, %c0_83] : memref<25x8x8xf32, #tpu.memory_space<vmem>>, vector<1x8x8xf32>
    %98 = vector.shape_cast %97 : vector<1x8x8xf32> to vector<8x8xf32>
    %c0_84 = arith.constant 0 : index
    %c160 = arith.constant 160 : index
    %99 = vector.load %arg10[%c0_84, %c160] : memref<8x401xf32, #tpu.memory_space<vmem>>, vector<8x225xf32>
    %cst_85 = arith.constant dense<0.000000e+00> : vector<8x225xf32>
    %100 = tpu.matmul %98, %99, %cst_85 {dimension_numbers = #tpu.dot_dimension_numbers<[1], [0], [0], [1], [0, 0, 1, 1], [], []>} : vector<8x8xf32>, vector<8x225xf32>, vector<8x225xf32> -> vector<8x225xf32>
    %101 = arith.addf %96, %100 : vector<8x225xf32>
    %c19 = arith.constant 19 : index
    %c0_86 = arith.constant 0 : index
    %c0_87 = arith.constant 0 : index
    %102 = vector.load %arg3[%c19, %c0_86, %c0_87] : memref<25x8x8xf32, #tpu.memory_space<vmem>>, vector<1x8x8xf32>
    %103 = vector.shape_cast %102 : vector<1x8x8xf32> to vector<8x8xf32>
    %c0_88 = arith.constant 0 : index
    %c161 = arith.constant 161 : index
    %104 = vector.load %arg10[%c0_88, %c161] : memref<8x401xf32, #tpu.memory_space<vmem>>, vector<8x225xf32>
    %cst_89 = arith.constant dense<0.000000e+00> : vector<8x225xf32>
    %105 = tpu.matmul %103, %104, %cst_89 {dimension_numbers = #tpu.dot_dimension_numbers<[1], [0], [0], [1], [0, 0, 1, 1], [], []>} : vector<8x8xf32>, vector<8x225xf32>, vector<8x225xf32> -> vector<8x225xf32>
    %106 = arith.addf %101, %105 : vector<8x225xf32>
    %c20 = arith.constant 20 : index
    %c0_90 = arith.constant 0 : index
    %c0_91 = arith.constant 0 : index
    %107 = vector.load %arg3[%c20, %c0_90, %c0_91] : memref<25x8x8xf32, #tpu.memory_space<vmem>>, vector<1x8x8xf32>
    %108 = vector.shape_cast %107 : vector<1x8x8xf32> to vector<8x8xf32>
    %c0_92 = arith.constant 0 : index
    %c172 = arith.constant 172 : index
    %109 = vector.load %arg10[%c0_92, %c172] : memref<8x401xf32, #tpu.memory_space<vmem>>, vector<8x225xf32>
    %cst_93 = arith.constant dense<0.000000e+00> : vector<8x225xf32>
    %110 = tpu.matmul %108, %109, %cst_93 {dimension_numbers = #tpu.dot_dimension_numbers<[1], [0], [0], [1], [0, 0, 1, 1], [], []>} : vector<8x8xf32>, vector<8x225xf32>, vector<8x225xf32> -> vector<8x225xf32>
    %111 = arith.addf %106, %110 : vector<8x225xf32>
    %c21 = arith.constant 21 : index
    %c0_94 = arith.constant 0 : index
    %c0_95 = arith.constant 0 : index
    %112 = vector.load %arg3[%c21, %c0_94, %c0_95] : memref<25x8x8xf32, #tpu.memory_space<vmem>>, vector<1x8x8xf32>
    %113 = vector.shape_cast %112 : vector<1x8x8xf32> to vector<8x8xf32>
    %c0_96 = arith.constant 0 : index
    %c173 = arith.constant 173 : index
    %114 = vector.load %arg10[%c0_96, %c173] : memref<8x401xf32, #tpu.memory_space<vmem>>, vector<8x225xf32>
    %cst_97 = arith.constant dense<0.000000e+00> : vector<8x225xf32>
    %115 = tpu.matmul %113, %114, %cst_97 {dimension_numbers = #tpu.dot_dimension_numbers<[1], [0], [0], [1], [0, 0, 1, 1], [], []>} : vector<8x8xf32>, vector<8x225xf32>, vector<8x225xf32> -> vector<8x225xf32>
    %116 = arith.addf %111, %115 : vector<8x225xf32>
    %c22 = arith.constant 22 : index
    %c0_98 = arith.constant 0 : index
    %c0_99 = arith.constant 0 : index
    %117 = vector.load %arg3[%c22, %c0_98, %c0_99] : memref<25x8x8xf32, #tpu.memory_space<vmem>>, vector<1x8x8xf32>
    %118 = vector.shape_cast %117 : vector<1x8x8xf32> to vector<8x8xf32>
    %c0_100 = arith.constant 0 : index
    %c174 = arith.constant 174 : index
    %119 = vector.load %arg10[%c0_100, %c174] : memref<8x401xf32, #tpu.memory_space<vmem>>, vector<8x225xf32>
    %cst_101 = arith.constant dense<0.000000e+00> : vector<8x225xf32>
    %120 = tpu.matmul %118, %119, %cst_101 {dimension_numbers = #tpu.dot_dimension_numbers<[1], [0], [0], [1], [0, 0, 1, 1], [], []>} : vector<8x8xf32>, vector<8x225xf32>, vector<8x225xf32> -> vector<8x225xf32>
    %121 = arith.addf %116, %120 : vector<8x225xf32>
    %c23 = arith.constant 23 : index
    %c0_102 = arith.constant 0 : index
    %c0_103 = arith.constant 0 : index
    %122 = vector.load %arg3[%c23, %c0_102, %c0_103] : memref<25x8x8xf32, #tpu.memory_space<vmem>>, vector<1x8x8xf32>
    %123 = vector.shape_cast %122 : vector<1x8x8xf32> to vector<8x8xf32>
    %c0_104 = arith.constant 0 : index
    %c175 = arith.constant 175 : index
    %124 = vector.load %arg10[%c0_104, %c175] : memref<8x401xf32, #tpu.memory_space<vmem>>, vector<8x225xf32>
    %cst_105 = arith.constant dense<0.000000e+00> : vector<8x225xf32>
    %125 = tpu.matmul %123, %124, %cst_105 {dimension_numbers = #tpu.dot_dimension_numbers<[1], [0], [0], [1], [0, 0, 1, 1], [], []>} : vector<8x8xf32>, vector<8x225xf32>, vector<8x225xf32> -> vector<8x225xf32>
    %126 = arith.addf %121, %125 : vector<8x225xf32>
    %c24 = arith.constant 24 : index
    %c0_106 = arith.constant 0 : index
    %c0_107 = arith.constant 0 : index
    %127 = vector.load %arg3[%c24, %c0_106, %c0_107] : memref<25x8x8xf32, #tpu.memory_space<vmem>>, vector<1x8x8xf32>
    %128 = vector.shape_cast %127 : vector<1x8x8xf32> to vector<8x8xf32>
    %c0_108 = arith.constant 0 : index
    %c176 = arith.constant 176 : index
    %129 = vector.load %arg10[%c0_108, %c176] : memref<8x401xf32, #tpu.memory_space<vmem>>, vector<8x225xf32>
    %cst_109 = arith.constant dense<0.000000e+00> : vector<8x225xf32>
    %130 = tpu.matmul %128, %129, %cst_109 {dimension_numbers = #tpu.dot_dimension_numbers<[1], [0], [0], [1], [0, 0, 1, 1], [], []>} : vector<8x8xf32>, vector<8x225xf32>, vector<8x225xf32> -> vector<8x225xf32>
    %131 = arith.addf %126, %130 : vector<8x225xf32>
    %c0_110 = arith.constant 0 : index
    %c0_111 = arith.constant 0 : index
    %132 = vector.load %arg4[%c0_110, %c0_111] : memref<8x1xf32, #tpu.memory_space<vmem>>, vector<8x1xf32>
    %133 = vector.broadcast %132 : vector<8x1xf32> to vector<8x225xf32>
    %134 = arith.addf %131, %133 : vector<8x225xf32>
    %cst_112 = arith.constant 0.000000e+00 : f32
    %135 = vector.broadcast %cst_112 : f32 to vector<8x225xf32>
    %136 = arith.maximumf %134, %135 : vector<8x225xf32>
    %137 = vector.broadcast %0 : vector<1x225xf32> to vector<8x225xf32>
    %138 = arith.mulf %136, %137 : vector<8x225xf32>
    %cst_113 = arith.constant 0.000000e+00 : f32
    %139 = vector.broadcast %cst_113 : f32 to vector<8x369xf32>
    %c0_114 = arith.constant 0 : index
    %c0_115 = arith.constant 0 : index
    %140 = vector.load %arg11[%c0_114, %c0_115] : memref<8x369xf32, #tpu.memory_space<vmem>>, vector<8x369xf32>
    tpu.vector_store %arg11[%c0_114, %c0_115], %139 {strides = array<i32>} : memref<8x369xf32, #tpu.memory_space<vmem>>, vector<8x369xf32>,
    %c0_116 = arith.constant 0 : index
    %c128_117 = arith.constant 128 : index
    %141 = vector.load %arg11[%c0_116, %c128_117] : memref<8x369xf32, #tpu.memory_space<vmem>>, vector<8x225xf32>
    tpu.vector_store %arg11[%c0_116, %c128_117], %138 {strides = array<i32>} : memref<8x369xf32, #tpu.memory_space<vmem>>, vector<8x225xf32>,
    %cst_118 = arith.constant 0.000000e+00 : f32
    %142 = vector.broadcast %cst_118 : f32 to vector<8x225xf32>
    %c0_119 = arith.constant 0 : index
    %c0_120 = arith.constant 0 : index
    %c0_121 = arith.constant 0 : index
    %143 = vector.load %arg5[%c0_119, %c0_120, %c0_121] : memref<18x8x8xf32, #tpu.memory_space<vmem>>, vector<1x8x8xf32>
    %144 = vector.shape_cast %143 : vector<1x8x8xf32> to vector<8x8xf32>
    %c0_122 = arith.constant 0 : index
    %c112_123 = arith.constant 112 : index
    %145 = vector.load %arg11[%c0_122, %c112_123] : memref<8x369xf32, #tpu.memory_space<vmem>>, vector<8x225xf32>
    %cst_124 = arith.constant dense<0.000000e+00> : vector<8x225xf32>
    %146 = tpu.matmul %144, %145, %cst_124 {dimension_numbers = #tpu.dot_dimension_numbers<[1], [0], [0], [1], [0, 0, 1, 1], [], []>} : vector<8x8xf32>, vector<8x225xf32>, vector<8x225xf32> -> vector<8x225xf32>
    %147 = arith.addf %142, %146 : vector<8x225xf32>
    %c1_125 = arith.constant 1 : index
    %c0_126 = arith.constant 0 : index
    %c0_127 = arith.constant 0 : index
    %148 = vector.load %arg5[%c1_125, %c0_126, %c0_127] : memref<18x8x8xf32, #tpu.memory_space<vmem>>, vector<1x8x8xf32>
    %149 = vector.shape_cast %148 : vector<1x8x8xf32> to vector<8x8xf32>
    %c0_128 = arith.constant 0 : index
    %c113_129 = arith.constant 113 : index
    %150 = vector.load %arg11[%c0_128, %c113_129] : memref<8x369xf32, #tpu.memory_space<vmem>>, vector<8x225xf32>
    %cst_130 = arith.constant dense<0.000000e+00> : vector<8x225xf32>
    %151 = tpu.matmul %149, %150, %cst_130 {dimension_numbers = #tpu.dot_dimension_numbers<[1], [0], [0], [1], [0, 0, 1, 1], [], []>} : vector<8x8xf32>, vector<8x225xf32>, vector<8x225xf32> -> vector<8x225xf32>
    %152 = arith.addf %147, %151 : vector<8x225xf32>
    %c2_131 = arith.constant 2 : index
    %c0_132 = arith.constant 0 : index
    %c0_133 = arith.constant 0 : index
    %153 = vector.load %arg5[%c2_131, %c0_132, %c0_133] : memref<18x8x8xf32, #tpu.memory_space<vmem>>, vector<1x8x8xf32>
    %154 = vector.shape_cast %153 : vector<1x8x8xf32> to vector<8x8xf32>
    %c0_134 = arith.constant 0 : index
    %c114_135 = arith.constant 114 : index
    %155 = vector.load %arg11[%c0_134, %c114_135] : memref<8x369xf32, #tpu.memory_space<vmem>>, vector<8x225xf32>
    %cst_136 = arith.constant dense<0.000000e+00> : vector<8x225xf32>
    %156 = tpu.matmul %154, %155, %cst_136 {dimension_numbers = #tpu.dot_dimension_numbers<[1], [0], [0], [1], [0, 0, 1, 1], [], []>} : vector<8x8xf32>, vector<8x225xf32>, vector<8x225xf32> -> vector<8x225xf32>
    %157 = arith.addf %152, %156 : vector<8x225xf32>
    %c3_137 = arith.constant 3 : index
    %c0_138 = arith.constant 0 : index
    %c0_139 = arith.constant 0 : index
    %158 = vector.load %arg5[%c3_137, %c0_138, %c0_139] : memref<18x8x8xf32, #tpu.memory_space<vmem>>, vector<1x8x8xf32>
    %159 = vector.shape_cast %158 : vector<1x8x8xf32> to vector<8x8xf32>
    %c0_140 = arith.constant 0 : index
    %c127_141 = arith.constant 127 : index
    %160 = vector.load %arg11[%c0_140, %c127_141] : memref<8x369xf32, #tpu.memory_space<vmem>>, vector<8x225xf32>
    %cst_142 = arith.constant dense<0.000000e+00> : vector<8x225xf32>
    %161 = tpu.matmul %159, %160, %cst_142 {dimension_numbers = #tpu.dot_dimension_numbers<[1], [0], [0], [1], [0, 0, 1, 1], [], []>} : vector<8x8xf32>, vector<8x225xf32>, vector<8x225xf32> -> vector<8x225xf32>
    %162 = arith.addf %157, %161 : vector<8x225xf32>
    %c4_143 = arith.constant 4 : index
    %c0_144 = arith.constant 0 : index
    %c0_145 = arith.constant 0 : index
    %163 = vector.load %arg5[%c4_143, %c0_144, %c0_145] : memref<18x8x8xf32, #tpu.memory_space<vmem>>, vector<1x8x8xf32>
    %164 = vector.shape_cast %163 : vector<1x8x8xf32> to vector<8x8xf32>
    %c0_146 = arith.constant 0 : index
    %c128_147 = arith.constant 128 : index
    %165 = vector.load %arg11[%c0_146, %c128_147] : memref<8x369xf32, #tpu.memory_space<vmem>>, vector<8x225xf32>
    %cst_148 = arith.constant dense<0.000000e+00> : vector<8x225xf32>
    %166 = tpu.matmul %164, %165, %cst_148 {dimension_numbers = #tpu.dot_dimension_numbers<[1], [0], [0], [1], [0, 0, 1, 1], [], []>} : vector<8x8xf32>, vector<8x225xf32>, vector<8x225xf32> -> vector<8x225xf32>
    %167 = arith.addf %162, %166 : vector<8x225xf32>
    %c5_149 = arith.constant 5 : index
    %c0_150 = arith.constant 0 : index
    %c0_151 = arith.constant 0 : index
    %168 = vector.load %arg5[%c5_149, %c0_150, %c0_151] : memref<18x8x8xf32, #tpu.memory_space<vmem>>, vector<1x8x8xf32>
    %169 = vector.shape_cast %168 : vector<1x8x8xf32> to vector<8x8xf32>
    %c0_152 = arith.constant 0 : index
    %c129_153 = arith.constant 129 : index
    %170 = vector.load %arg11[%c0_152, %c129_153] : memref<8x369xf32, #tpu.memory_space<vmem>>, vector<8x225xf32>
    %cst_154 = arith.constant dense<0.000000e+00> : vector<8x225xf32>
    %171 = tpu.matmul %169, %170, %cst_154 {dimension_numbers = #tpu.dot_dimension_numbers<[1], [0], [0], [1], [0, 0, 1, 1], [], []>} : vector<8x8xf32>, vector<8x225xf32>, vector<8x225xf32> -> vector<8x225xf32>
    %172 = arith.addf %167, %171 : vector<8x225xf32>
    %c6_155 = arith.constant 6 : index
    %c0_156 = arith.constant 0 : index
    %c0_157 = arith.constant 0 : index
    %173 = vector.load %arg5[%c6_155, %c0_156, %c0_157] : memref<18x8x8xf32, #tpu.memory_space<vmem>>, vector<1x8x8xf32>
    %174 = vector.shape_cast %173 : vector<1x8x8xf32> to vector<8x8xf32>
    %c0_158 = arith.constant 0 : index
    %c142_159 = arith.constant 142 : index
    %175 = vector.load %arg11[%c0_158, %c142_159] : memref<8x369xf32, #tpu.memory_space<vmem>>, vector<8x225xf32>
    %cst_160 = arith.constant dense<0.000000e+00> : vector<8x225xf32>
    %176 = tpu.matmul %174, %175, %cst_160 {dimension_numbers = #tpu.dot_dimension_numbers<[1], [0], [0], [1], [0, 0, 1, 1], [], []>} : vector<8x8xf32>, vector<8x225xf32>, vector<8x225xf32> -> vector<8x225xf32>
    %177 = arith.addf %172, %176 : vector<8x225xf32>
    %c7_161 = arith.constant 7 : index
    %c0_162 = arith.constant 0 : index
    %c0_163 = arith.constant 0 : index
    %178 = vector.load %arg5[%c7_161, %c0_162, %c0_163] : memref<18x8x8xf32, #tpu.memory_space<vmem>>, vector<1x8x8xf32>
    %179 = vector.shape_cast %178 : vector<1x8x8xf32> to vector<8x8xf32>
    %c0_164 = arith.constant 0 : index
    %c143_165 = arith.constant 143 : index
    %180 = vector.load %arg11[%c0_164, %c143_165] : memref<8x369xf32, #tpu.memory_space<vmem>>, vector<8x225xf32>
    %cst_166 = arith.constant dense<0.000000e+00> : vector<8x225xf32>
    %181 = tpu.matmul %179, %180, %cst_166 {dimension_numbers = #tpu.dot_dimension_numbers<[1], [0], [0], [1], [0, 0, 1, 1], [], []>} : vector<8x8xf32>, vector<8x225xf32>, vector<8x225xf32> -> vector<8x225xf32>
    %182 = arith.addf %177, %181 : vector<8x225xf32>
    %c8_167 = arith.constant 8 : index
    %c0_168 = arith.constant 0 : index
    %c0_169 = arith.constant 0 : index
    %183 = vector.load %arg5[%c8_167, %c0_168, %c0_169] : memref<18x8x8xf32, #tpu.memory_space<vmem>>, vector<1x8x8xf32>
    %184 = vector.shape_cast %183 : vector<1x8x8xf32> to vector<8x8xf32>
    %c0_170 = arith.constant 0 : index
    %c144_171 = arith.constant 144 : index
    %185 = vector.load %arg11[%c0_170, %c144_171] : memref<8x369xf32, #tpu.memory_space<vmem>>, vector<8x225xf32>
    %cst_172 = arith.constant dense<0.000000e+00> : vector<8x225xf32>
    %186 = tpu.matmul %184, %185, %cst_172 {dimension_numbers = #tpu.dot_dimension_numbers<[1], [0], [0], [1], [0, 0, 1, 1], [], []>} : vector<8x8xf32>, vector<8x225xf32>, vector<8x225xf32> -> vector<8x225xf32>
    %187 = arith.addf %182, %186 : vector<8x225xf32>
    %c0_173 = arith.constant 0 : index
    %c0_174 = arith.constant 0 : index
    %c0_175 = arith.constant 0 : index
    %188 = vector.load %arg6[%c0_173, %c0_174, %c0_175] : memref<2x8x1xf32, #tpu.memory_space<vmem>>, vector<1x8x1xf32>
    %189 = vector.shape_cast %188 : vector<1x8x1xf32> to vector<8x1xf32>
    %190 = vector.broadcast %189 : vector<8x1xf32> to vector<8x225xf32>
    %191 = arith.addf %187, %190 : vector<8x225xf32>
    %cst_176 = arith.constant 0.000000e+00 : f32
    %192 = vector.broadcast %cst_176 : f32 to vector<8x225xf32>
    %193 = arith.maximumf %191, %192 : vector<8x225xf32>
    %194 = vector.broadcast %0 : vector<1x225xf32> to vector<8x225xf32>
    %195 = arith.mulf %193, %194 : vector<8x225xf32>
    %c0_177 = arith.constant 0 : index
    %c128_178 = arith.constant 128 : index
    %196 = vector.load %arg11[%c0_177, %c128_178] : memref<8x369xf32, #tpu.memory_space<vmem>>, vector<8x225xf32>
    tpu.vector_store %arg11[%c0_177, %c128_178], %195 {strides = array<i32>} : memref<8x369xf32, #tpu.memory_space<vmem>>, vector<8x225xf32>,
    %cst_179 = arith.constant 0.000000e+00 : f32
    %197 = vector.broadcast %cst_179 : f32 to vector<8x225xf32>
    %c9_180 = arith.constant 9 : index
    %c0_181 = arith.constant 0 : index
    %c0_182 = arith.constant 0 : index
    %198 = vector.load %arg5[%c9_180, %c0_181, %c0_182] : memref<18x8x8xf32, #tpu.memory_space<vmem>>, vector<1x8x8xf32>
    %199 = vector.shape_cast %198 : vector<1x8x8xf32> to vector<8x8xf32>
    %c0_183 = arith.constant 0 : index
    %c112_184 = arith.constant 112 : index
    %200 = vector.load %arg11[%c0_183, %c112_184] : memref<8x369xf32, #tpu.memory_space<vmem>>, vector<8x225xf32>
    %cst_185 = arith.constant dense<0.000000e+00> : vector<8x225xf32>
    %201 = tpu.matmul %199, %200, %cst_185 {dimension_numbers = #tpu.dot_dimension_numbers<[1], [0], [0], [1], [0, 0, 1, 1], [], []>} : vector<8x8xf32>, vector<8x225xf32>, vector<8x225xf32> -> vector<8x225xf32>
    %202 = arith.addf %197, %201 : vector<8x225xf32>
    %c10_186 = arith.constant 10 : index
    %c0_187 = arith.constant 0 : index
    %c0_188 = arith.constant 0 : index
    %203 = vector.load %arg5[%c10_186, %c0_187, %c0_188] : memref<18x8x8xf32, #tpu.memory_space<vmem>>, vector<1x8x8xf32>
    %204 = vector.shape_cast %203 : vector<1x8x8xf32> to vector<8x8xf32>
    %c0_189 = arith.constant 0 : index
    %c113_190 = arith.constant 113 : index
    %205 = vector.load %arg11[%c0_189, %c113_190] : memref<8x369xf32, #tpu.memory_space<vmem>>, vector<8x225xf32>
    %cst_191 = arith.constant dense<0.000000e+00> : vector<8x225xf32>
    %206 = tpu.matmul %204, %205, %cst_191 {dimension_numbers = #tpu.dot_dimension_numbers<[1], [0], [0], [1], [0, 0, 1, 1], [], []>} : vector<8x8xf32>, vector<8x225xf32>, vector<8x225xf32> -> vector<8x225xf32>
    %207 = arith.addf %202, %206 : vector<8x225xf32>
    %c11_192 = arith.constant 11 : index
    %c0_193 = arith.constant 0 : index
    %c0_194 = arith.constant 0 : index
    %208 = vector.load %arg5[%c11_192, %c0_193, %c0_194] : memref<18x8x8xf32, #tpu.memory_space<vmem>>, vector<1x8x8xf32>
    %209 = vector.shape_cast %208 : vector<1x8x8xf32> to vector<8x8xf32>
    %c0_195 = arith.constant 0 : index
    %c114_196 = arith.constant 114 : index
    %210 = vector.load %arg11[%c0_195, %c114_196] : memref<8x369xf32, #tpu.memory_space<vmem>>, vector<8x225xf32>
    %cst_197 = arith.constant dense<0.000000e+00> : vector<8x225xf32>
    %211 = tpu.matmul %209, %210, %cst_197 {dimension_numbers = #tpu.dot_dimension_numbers<[1], [0], [0], [1], [0, 0, 1, 1], [], []>} : vector<8x8xf32>, vector<8x225xf32>, vector<8x225xf32> -> vector<8x225xf32>
    %212 = arith.addf %207, %211 : vector<8x225xf32>
    %c12_198 = arith.constant 12 : index
    %c0_199 = arith.constant 0 : index
    %c0_200 = arith.constant 0 : index
    %213 = vector.load %arg5[%c12_198, %c0_199, %c0_200] : memref<18x8x8xf32, #tpu.memory_space<vmem>>, vector<1x8x8xf32>
    %214 = vector.shape_cast %213 : vector<1x8x8xf32> to vector<8x8xf32>
    %c0_201 = arith.constant 0 : index
    %c127_202 = arith.constant 127 : index
    %215 = vector.load %arg11[%c0_201, %c127_202] : memref<8x369xf32, #tpu.memory_space<vmem>>, vector<8x225xf32>
    %cst_203 = arith.constant dense<0.000000e+00> : vector<8x225xf32>
    %216 = tpu.matmul %214, %215, %cst_203 {dimension_numbers = #tpu.dot_dimension_numbers<[1], [0], [0], [1], [0, 0, 1, 1], [], []>} : vector<8x8xf32>, vector<8x225xf32>, vector<8x225xf32> -> vector<8x225xf32>
    %217 = arith.addf %212, %216 : vector<8x225xf32>
    %c13_204 = arith.constant 13 : index
    %c0_205 = arith.constant 0 : index
    %c0_206 = arith.constant 0 : index
    %218 = vector.load %arg5[%c13_204, %c0_205, %c0_206] : memref<18x8x8xf32, #tpu.memory_space<vmem>>, vector<1x8x8xf32>
    %219 = vector.shape_cast %218 : vector<1x8x8xf32> to vector<8x8xf32>
    %c0_207 = arith.constant 0 : index
    %c128_208 = arith.constant 128 : index
    %220 = vector.load %arg11[%c0_207, %c128_208] : memref<8x369xf32, #tpu.memory_space<vmem>>, vector<8x225xf32>
    %cst_209 = arith.constant dense<0.000000e+00> : vector<8x225xf32>
    %221 = tpu.matmul %219, %220, %cst_209 {dimension_numbers = #tpu.dot_dimension_numbers<[1], [0], [0], [1], [0, 0, 1, 1], [], []>} : vector<8x8xf32>, vector<8x225xf32>, vector<8x225xf32> -> vector<8x225xf32>
    %222 = arith.addf %217, %221 : vector<8x225xf32>
    %c14_210 = arith.constant 14 : index
    %c0_211 = arith.constant 0 : index
    %c0_212 = arith.constant 0 : index
    %223 = vector.load %arg5[%c14_210, %c0_211, %c0_212] : memref<18x8x8xf32, #tpu.memory_space<vmem>>, vector<1x8x8xf32>
    %224 = vector.shape_cast %223 : vector<1x8x8xf32> to vector<8x8xf32>
    %c0_213 = arith.constant 0 : index
    %c129_214 = arith.constant 129 : index
    %225 = vector.load %arg11[%c0_213, %c129_214] : memref<8x369xf32, #tpu.memory_space<vmem>>, vector<8x225xf32>
    %cst_215 = arith.constant dense<0.000000e+00> : vector<8x225xf32>
    %226 = tpu.matmul %224, %225, %cst_215 {dimension_numbers = #tpu.dot_dimension_numbers<[1], [0], [0], [1], [0, 0, 1, 1], [], []>} : vector<8x8xf32>, vector<8x225xf32>, vector<8x225xf32> -> vector<8x225xf32>
    %227 = arith.addf %222, %226 : vector<8x225xf32>
    %c15_216 = arith.constant 15 : index
    %c0_217 = arith.constant 0 : index
    %c0_218 = arith.constant 0 : index
    %228 = vector.load %arg5[%c15_216, %c0_217, %c0_218] : memref<18x8x8xf32, #tpu.memory_space<vmem>>, vector<1x8x8xf32>
    %229 = vector.shape_cast %228 : vector<1x8x8xf32> to vector<8x8xf32>
    %c0_219 = arith.constant 0 : index
    %c142_220 = arith.constant 142 : index
    %230 = vector.load %arg11[%c0_219, %c142_220] : memref<8x369xf32, #tpu.memory_space<vmem>>, vector<8x225xf32>
    %cst_221 = arith.constant dense<0.000000e+00> : vector<8x225xf32>
    %231 = tpu.matmul %229, %230, %cst_221 {dimension_numbers = #tpu.dot_dimension_numbers<[1], [0], [0], [1], [0, 0, 1, 1], [], []>} : vector<8x8xf32>, vector<8x225xf32>, vector<8x225xf32> -> vector<8x225xf32>
    %232 = arith.addf %227, %231 : vector<8x225xf32>
    %c16_222 = arith.constant 16 : index
    %c0_223 = arith.constant 0 : index
    %c0_224 = arith.constant 0 : index
    %233 = vector.load %arg5[%c16_222, %c0_223, %c0_224] : memref<18x8x8xf32, #tpu.memory_space<vmem>>, vector<1x8x8xf32>
    %234 = vector.shape_cast %233 : vector<1x8x8xf32> to vector<8x8xf32>
    %c0_225 = arith.constant 0 : index
    %c143_226 = arith.constant 143 : index
    %235 = vector.load %arg11[%c0_225, %c143_226] : memref<8x369xf32, #tpu.memory_space<vmem>>, vector<8x225xf32>
    %cst_227 = arith.constant dense<0.000000e+00> : vector<8x225xf32>
    %236 = tpu.matmul %234, %235, %cst_227 {dimension_numbers = #tpu.dot_dimension_numbers<[1], [0], [0], [1], [0, 0, 1, 1], [], []>} : vector<8x8xf32>, vector<8x225xf32>, vector<8x225xf32> -> vector<8x225xf32>
    %237 = arith.addf %232, %236 : vector<8x225xf32>
    %c17_228 = arith.constant 17 : index
    %c0_229 = arith.constant 0 : index
    %c0_230 = arith.constant 0 : index
    %238 = vector.load %arg5[%c17_228, %c0_229, %c0_230] : memref<18x8x8xf32, #tpu.memory_space<vmem>>, vector<1x8x8xf32>
    %239 = vector.shape_cast %238 : vector<1x8x8xf32> to vector<8x8xf32>
    %c0_231 = arith.constant 0 : index
    %c144_232 = arith.constant 144 : index
    %240 = vector.load %arg11[%c0_231, %c144_232] : memref<8x369xf32, #tpu.memory_space<vmem>>, vector<8x225xf32>
    %cst_233 = arith.constant dense<0.000000e+00> : vector<8x225xf32>
    %241 = tpu.matmul %239, %240, %cst_233 {dimension_numbers = #tpu.dot_dimension_numbers<[1], [0], [0], [1], [0, 0, 1, 1], [], []>} : vector<8x8xf32>, vector<8x225xf32>, vector<8x225xf32> -> vector<8x225xf32>
    %242 = arith.addf %237, %241 : vector<8x225xf32>
    %c1_234 = arith.constant 1 : index
    %c0_235 = arith.constant 0 : index
    %c0_236 = arith.constant 0 : index
    %243 = vector.load %arg6[%c1_234, %c0_235, %c0_236] : memref<2x8x1xf32, #tpu.memory_space<vmem>>, vector<1x8x1xf32>
    %244 = vector.shape_cast %243 : vector<1x8x1xf32> to vector<8x1xf32>
    %245 = vector.broadcast %244 : vector<8x1xf32> to vector<8x225xf32>
    %246 = arith.addf %242, %245 : vector<8x225xf32>
    %cst_237 = arith.constant 0.000000e+00 : f32
    %247 = vector.broadcast %cst_237 : f32 to vector<8x225xf32>
    %248 = arith.maximumf %246, %247 : vector<8x225xf32>
    %249 = vector.broadcast %0 : vector<1x225xf32> to vector<8x225xf32>
    %250 = arith.mulf %248, %249 : vector<8x225xf32>
    %c0_238 = arith.constant 0 : index
    %c0_239 = arith.constant 0 : index
    %251 = vector.load %arg7[%c0_238, %c0_239] : memref<1x8xf32, #tpu.memory_space<vmem>>, vector<1x8xf32>
    %cst_240 = arith.constant dense<0.000000e+00> : vector<1x225xf32>
    %252 = tpu.matmul %251, %250, %cst_240 {dimension_numbers = #tpu.dot_dimension_numbers<[1], [0], [0], [1], [0, 0, 1, 1], [], []>} : vector<1x8xf32>, vector<8x225xf32>, vector<1x225xf32> -> vector<1x225xf32>
    %c0_241 = arith.constant 0 : index
    %c0_242 = arith.constant 0 : index
    %253 = vector.load %arg8[%c0_241, %c0_242] : memref<1x1xf32, #tpu.memory_space<vmem>>, vector<1x1xf32>
    %254 = vector.broadcast %253 : vector<1x1xf32> to vector<1x225xf32>
    %255 = arith.addf %252, %254 : vector<1x225xf32>
    %c0_243 = arith.constant 0 : index
    %c0_244 = arith.constant 0 : index
    %c0_245 = arith.constant 0 : index
    %256 = vector.load %arg9[%c0_243, %c0_244, %c0_245] : memref<1x1x225xf32, #tpu.memory_space<vmem>>, vector<1x1x225xf32>
    %257 = vector.shape_cast %256 : vector<1x1x225xf32> to vector<1x225xf32>
    %258 = vector.shape_cast %255 : vector<1x225xf32> to vector<1x1x225xf32>
    tpu.vector_store %arg9[%c0_243, %c0_244, %c0_245], %258 {strides = array<i32>} : memref<1x1x225xf32, #tpu.memory_space<vmem>>, vector<1x1x225xf32>,
    return
  }
  func.func @transform_0(%arg0: i32) -> (i32, i32, i32) {
    %c0_i32 = arith.constant 0 : i32
    %c0_i32_0 = arith.constant 0 : i32
    %c0_i32_1 = arith.constant 0 : i32
    return %arg0, %c0_i32, %c0_i32_0 : i32, i32, i32
  }
  func.func @transform_1(%arg0: i32) -> (i32, i32) {
    %c0_i32 = arith.constant 0 : i32
    %c0_i32_0 = arith.constant 0 : i32
    %c0_i32_1 = arith.constant 0 : i32
    return %c0_i32, %c0_i32_0 : i32, i32
  }
  func.func @transform_2(%arg0: i32) -> (i32, i32, i32) {
    %c0_i32 = arith.constant 0 : i32
    %c0_i32_0 = arith.constant 0 : i32
    %c0_i32_1 = arith.constant 0 : i32
    %c0_i32_2 = arith.constant 0 : i32
    return %c0_i32, %c0_i32_0, %c0_i32_1 : i32, i32, i32
  }
  func.func @transform_3(%arg0: i32) -> (i32, i32) {
    %c0_i32 = arith.constant 0 : i32
    %c0_i32_0 = arith.constant 0 : i32
    %c0_i32_1 = arith.constant 0 : i32
    return %c0_i32, %c0_i32_0 : i32, i32
  }
  func.func @transform_4(%arg0: i32) -> (i32, i32, i32) {
    %c0_i32 = arith.constant 0 : i32
    %c0_i32_0 = arith.constant 0 : i32
    %c0_i32_1 = arith.constant 0 : i32
    %c0_i32_2 = arith.constant 0 : i32
    return %c0_i32, %c0_i32_0, %c0_i32_1 : i32, i32, i32
  }
  func.func @transform_5(%arg0: i32) -> (i32, i32, i32) {
    %c0_i32 = arith.constant 0 : i32
    %c0_i32_0 = arith.constant 0 : i32
    %c0_i32_1 = arith.constant 0 : i32
    %c0_i32_2 = arith.constant 0 : i32
    return %c0_i32, %c0_i32_0, %c0_i32_1 : i32, i32, i32
  }
  func.func @transform_6(%arg0: i32) -> (i32, i32) {
    %c0_i32 = arith.constant 0 : i32
    %c0_i32_0 = arith.constant 0 : i32
    %c0_i32_1 = arith.constant 0 : i32
    return %c0_i32, %c0_i32_0 : i32, i32
  }
  func.func @transform_7(%arg0: i32) -> (i32, i32) {
    %c0_i32 = arith.constant 0 : i32
    %c0_i32_0 = arith.constant 0 : i32
    %c0_i32_1 = arith.constant 0 : i32
    return %c0_i32, %c0_i32_0 : i32, i32
  }
  func.func @transform_8(%arg0: i32) -> (i32, i32, i32) {
    %c0_i32 = arith.constant 0 : i32
    %c0_i32_0 = arith.constant 0 : i32
    %c0_i32_1 = arith.constant 0 : i32
    return %arg0, %c0_i32, %c0_i32_0 : i32, i32, i32
  }
}

</mosaic_0001>

<llo_original>
// kernel: tpu_custom_call.1
$region0: #{tpu_custom_call.1}
  #allocation0 [shape = 'u32[]', space=smem, size = 0x4, offset = 0x4, fixed_abs, tag = 'smem constant byte address 0x4 - core index']
  #allocation1 [shape = 'u32[144,128]{1,0:T(1,128)}', space=vmem, size = 0x12000, scoped, tag = 'internal scratch']
  #allocation2 [shape = 'f32[8,401]{1,0:T(8,128)}', space=vmem, size = 0x4000, scoped, tag = 'scratch operand']
  #allocation3 [shape = 'f32[8,369]{1,0:T(8,128)}', space=vmem, size = 0x3000, scoped, tag = 'scratch operand']
  #allocation4 [shape = 'f32[1,1]{1,0:T(1,128)S(1)}', space=vmem, size = 0x200, scoped, tag = 'scoped memory for tpu_custom_call.1']
  %s0 = inlined_call_operand.vmem [shape: f32[2,8,225], index: 0, kind: input, shape index: {}]
  %s1 = inlined_call_operand.vmem [shape: f32[1,225], index: 1, kind: input, shape index: {}]
  %s2 = inlined_call_operand.vmem [shape: f32[25,8,8], index: 2, kind: input, shape index: {}]
  %s3 = inlined_call_operand.vmem [shape: f32[8,1], index: 3, kind: input, shape index: {}]
  %s4 = inlined_call_operand.vmem [shape: f32[18,8,8], index: 4, kind: input, shape index: {}]
  %s5 = inlined_call_operand.vmem [shape: f32[2,8,1], index: 5, kind: input, shape index: {}]
  %s6 = inlined_call_operand.vmem [shape: f32[1,8], index: 6, kind: input, shape index: {}]
  %s7 = inlined_call_operand.<no memory space> [shape: f32[1,1], index: 7, kind: input, shape index: {}]
  %s8 = inlined_call_operand.hbm [shape: f32[2,1,225], index: 8, kind: output, shape index: {}]
  %s9 = sld [smem:[#allocation0]]
  $region65: #{tpu_custom_call.1} parent=0
    _
  %s11 = ssub.s32 1, %s9
  %s12 = scalar_select 0, %s11, %s9
  %v13 = vstv %s7
  %14 = vst [vmem:[#allocation4] sm:$0x1] %v13
  $region1: #{tpu_custom_call.1} parent=0
    #allocation5 [shape = 'u8[2048]{0}', space=vmem, size = 0x800, scoped, tag = 'output window, operand 0']
    #allocation6 [shape = 's32[2]{0}', space=sflag, size = 0x8, scoped, tag = 'scoped memory for tpu_custom_call.1']
    %15 = vsyncpa [#allocation6], 0
    %s16 = scalar_lea.sflag [#allocation6], 1
    %17 = vsyncpa %s16, 0
    loop: start=0, step=1, limit=4
    $region2: #{tpu_custom_call.1} parent=1 // loop_pre_header
      _
    $region3: #{tpu_custom_call.1} parent=1 // loop_header
      %s19 = sphi 0, %s23
      %p20 = scmp.ge.s32.totalorder %s19, 4
      %s29 = sphi 0, %s31
      %s32 = sphi 0, %s29
      %s33 = sphi 0, %s32
      %s49 = sphi 0, %s33
      %s53 = sphi 0, %s53
      %s55 = sphi 0, %s53
      %s56 = sphi 0, %s55
      %s70 = sphi 0, %s56
      %s74 = sphi 0, %s74
      %s76 = sphi 0, %s74
      %s77 = sphi 0, %s76
      %s91 = sphi 0, %s77
      %s95 = sphi 0, %s95
      %s97 = sphi 0, %s95
      %s98 = sphi 0, %s97
      %s112 = sphi 0, %s98
      %s116 = sphi 0, %s116
      %s118 = sphi 0, %s116
      %s119 = sphi 0, %s118
      %s133 = sphi 0, %s119
      %s137 = sphi 0, %s137
      %s139 = sphi 0, %s137
      %s140 = sphi 0, %s139
      %s154 = sphi 0, %s140
      %s158 = sphi 0, %s158
      %s160 = sphi 0, %s158
      %s161 = sphi 0, %s160
      %s175 = sphi 0, %s161
      %s179 = sphi 0, %s179
      %s181 = sphi 0, %s179
      %s182 = sphi 0, %s181
      %s196 = sphi 0, %s182
      %s202 = sphi 0, %s204
      %s205 = sphi 0, %s202
      %s206 = sphi 0, %s205
      %s222 = sphi 0, %s206
    $region4: #{tpu_custom_call.1} parent=1 // loop_header_branch
      %22 = sbr.rel (%p20) target = $region8
    $region5: #{tpu_custom_call.1} parent=1 // loop_body
      %s24 = ssub.s32 %s19, 1
      %s25 = ssub.s32 %s19, 2
      %s26 = sadd.s32 %s19, 1
      %s27 = ssub.s32 %s19, %s26
      %p28 = scmp.eq.s32.totalorder %s27, 0
      %s30 = sadd.s32 %s29, 1
      %s31 = scalar_select %p28, %s29, %s30
      %p34 = pneg %p28
      %p35 = scmp.eq.s32.totalorder %s19, 1
      %p36 = por %p34, %p35
      %p37 = scmp.ne.s32.totalorder %s29, %s32
      %p38 = scmp.eq.s32.totalorder %s19, 0
      %p39 = por %p37, %p38
      %p40 = scmp.ne.s32.totalorder %s29, %s32
      %p41 = scmp.eq.s32.totalorder %s24, 1
      %p42 = por %p40, %p41
      %p43 = scmp.ne.s32.totalorder %s32, %s33
      %p44 = scmp.eq.s32.totalorder %s24, 0
      %p45 = por %p43, %p44
      %p46 = scmp.ne.s32.totalorder %s32, %s33
      %p47 = scmp.eq.s32.totalorder %s25, 1
      %p48 = por %p46, %p47
      %p50 = scmp.ne.s32.totalorder %s33, %s49
      %p51 = scmp.eq.s32.totalorder %s25, 0
      %p52 = por %p50, %p51
      %s54 = sadd.s32 %s53, 1
      %p57 = scmp.eq.s32.totalorder %s19, 1
      %p58 = scmp.ne.s32.totalorder %s53, %s55
      %p59 = scmp.eq.s32.totalorder %s19, 0
      %p60 = por %p58, %p59
      %p61 = scmp.ne.s32.totalorder %s53, %s55
      %p62 = scmp.eq.s32.totalorder %s24, 1
      %p63 = por %p61, %p62
      %p64 = scmp.ne.s32.totalorder %s55, %s56
      %p65 = scmp.eq.s32.totalorder %s24, 0
      %p66 = por %p64, %p65
      %p67 = scmp.ne.s32.totalorder %s55, %s56
      %p68 = scmp.eq.s32.totalorder %s25, 1
      %p69 = por %p67, %p68
      %p71 = scmp.ne.s32.totalorder %s56, %s70
      %p72 = scmp.eq.s32.totalorder %s25, 0
      %p73 = por %p71, %p72
      %s75 = sadd.s32 %s74, 1
      %p78 = scmp.eq.s32.totalorder %s19, 1
      %p79 = scmp.ne.s32.totalorder %s74, %s76
      %p80 = scmp.eq.s32.totalorder %s19, 0
      %p81 = por %p79, %p80
      %p82 = scmp.ne.s32.totalorder %s74, %s76
      %p83 = scmp.eq.s32.totalorder %s24, 1
      %p84 = por %p82, %p83
      %p85 = scmp.ne.s32.totalorder %s76, %s77
      %p86 = scmp.eq.s32.totalorder %s24, 0
      %p87 = por %p85, %p86
      %p88 = scmp.ne.s32.totalorder %s76, %s77
      %p89 = scmp.eq.s32.totalorder %s25, 1
      %p90 = por %p88, %p89
      %p92 = scmp.ne.s32.totalorder %s77, %s91
      %p93 = scmp.eq.s32.totalorder %s25, 0
      %p94 = por %p92, %p93
      %s96 = sadd.s32 %s95, 1
      %p99 = scmp.eq.s32.totalorder %s19, 1
      %p100 = scmp.ne.s32.totalorder %s95, %s97
      %p101 = scmp.eq.s32.totalorder %s19, 0
      %p102 = por %p100, %p101
      %p103 = scmp.ne.s32.totalorder %s95, %s97
      %p104 = scmp.eq.s32.totalorder %s24, 1
      %p105 = por %p103, %p104
      %p106 = scmp.ne.s32.totalorder %s97, %s98
      %p107 = scmp.eq.s32.totalorder %s24, 0
      %p108 = por %p106, %p107
      %p109 = scmp.ne.s32.totalorder %s97, %s98
      %p110 = scmp.eq.s32.totalorder %s25, 1
      %p111 = por %p109, %p110
      %p113 = scmp.ne.s32.totalorder %s98, %s112
      %p114 = scmp.eq.s32.totalorder %s25, 0
      %p115 = por %p113, %p114
      %s117 = sadd.s32 %s116, 1
      %p120 = scmp.eq.s32.totalorder %s19, 1
      %p121 = scmp.ne.s32.totalorder %s116, %s118
      %p122 = scmp.eq.s32.totalorder %s19, 0
      %p123 = por %p121, %p122
      %p124 = scmp.ne.s32.totalorder %s116, %s118
      %p125 = scmp.eq.s32.totalorder %s24, 1
      %p126 = por %p124, %p125
      %p127 = scmp.ne.s32.totalorder %s118, %s119
      %p128 = scmp.eq.s32.totalorder %s24, 0
      %p129 = por %p127, %p128
      %p130 = scmp.ne.s32.totalorder %s118, %s119
      %p131 = scmp.eq.s32.totalorder %s25, 1
      %p132 = por %p130, %p131
      %p134 = scmp.ne.s32.totalorder %s119, %s133
      %p135 = scmp.eq.s32.totalorder %s25, 0
      %p136 = por %p134, %p135
      %s138 = sadd.s32 %s137, 1
      %p141 = scmp.eq.s32.totalorder %s19, 1
      %p142 = scmp.ne.s32.totalorder %s137, %s139
      %p143 = scmp.eq.s32.totalorder %s19, 0
      %p144 = por %p142, %p143
      %p145 = scmp.ne.s32.totalorder %s137, %s139
      %p146 = scmp.eq.s32.totalorder %s24, 1
      %p147 = por %p145, %p146
      %p148 = scmp.ne.s32.totalorder %s139, %s140
      %p149 = scmp.eq.s32.totalorder %s24, 0
      %p150 = por %p148, %p149
      %p151 = scmp.ne.s32.totalorder %s139, %s140
      %p152 = scmp.eq.s32.totalorder %s25, 1
      %p153 = por %p151, %p152
      %p155 = scmp.ne.s32.totalorder %s140, %s154
      %p156 = scmp.eq.s32.totalorder %s25, 0
      %p157 = por %p155, %p156
      %s159 = sadd.s32 %s158, 1
      %p162 = scmp.eq.s32.totalorder %s19, 1
      %p163 = scmp.ne.s32.totalorder %s158, %s160
      %p164 = scmp.eq.s32.totalorder %s19, 0
      %p165 = por %p163, %p164
      %p166 = scmp.ne.s32.totalorder %s158, %s160
      %p167 = scmp.eq.s32.totalorder %s24, 1
      %p168 = por %p166, %p167
      %p169 = scmp.ne.s32.totalorder %s160, %s161
      %p170 = scmp.eq.s32.totalorder %s24, 0
      %p171 = por %p169, %p170
      %p172 = scmp.ne.s32.totalorder %s160, %s161
      %p173 = scmp.eq.s32.totalorder %s25, 1
      %p174 = por %p172, %p173
      %p176 = scmp.ne.s32.totalorder %s161, %s175
      %p177 = scmp.eq.s32.totalorder %s25, 0
      %p178 = por %p176, %p177
      %s180 = sadd.s32 %s179, 1
      %p183 = scmp.eq.s32.totalorder %s19, 1
      %p184 = scmp.ne.s32.totalorder %s179, %s181
      %p185 = scmp.eq.s32.totalorder %s19, 0
      %p186 = por %p184, %p185
      %p187 = scmp.ne.s32.totalorder %s179, %s181
      %p188 = scmp.eq.s32.totalorder %s24, 1
      %p189 = por %p187, %p188
      %p190 = scmp.ne.s32.totalorder %s181, %s182
      %p191 = scmp.eq.s32.totalorder %s24, 0
      %p192 = por %p190, %p191
      %p193 = scmp.ne.s32.totalorder %s181, %s182
      %p194 = scmp.eq.s32.totalorder %s25, 1
      %p195 = por %p193, %p194
      %p197 = scmp.ne.s32.totalorder %s182, %s196
      %p198 = scmp.eq.s32.totalorder %s25, 0
      %p199 = por %p197, %p198
      %s200 = ssub.s32 %s19, %s26
      %p201 = scmp.eq.s32.totalorder %s200, 0
      %s203 = sadd.s32 %s202, 1
      %s204 = scalar_select %p201, %s202, %s203
      %p207 = pneg %p201
      %p208 = scmp.eq.s32.totalorder %s19, 1
      %p209 = por %p207, %p208
      %p210 = scmp.ne.s32.totalorder %s202, %s205
      %p211 = scmp.eq.s32.totalorder %s19, 0
      %p212 = por %p210, %p211
      %p213 = scmp.ne.s32.totalorder %s202, %s205
      %p214 = scmp.eq.s32.totalorder %s24, 1
      %p215 = por %p213, %p214
      %p216 = scmp.ne.s32.totalorder %s205, %s206
      %p217 = scmp.eq.s32.totalorder %s24, 0
      %p218 = por %p216, %p217
      %p219 = scmp.ne.s32.totalorder %s205, %s206
      %p220 = scmp.eq.s32.totalorder %s25, 1
      %p221 = por %p219, %p220
      %p223 = scmp.ne.s32.totalorder %s206, %s222
      %p224 = scmp.eq.s32.totalorder %s25, 0
      %p225 = por %p223, %p224
      %p226 = scmp.le.s32.totalorder 1, %s19
      %p227 = scmp.lt.s32.totalorder %s19, 3
      %p228 = pnand %p226, %p227
      %p229 = pneg %p228
      // Predicated region
      $region9: #{tpu_custom_call.1} parent=5 // pred_check
        _
      $region10: #{tpu_custom_call.1} parent=5 // pred_check_branch
        %231 = sbr.rel (%p228) target = $region12
      $region11: #{tpu_custom_call.1} parent=5 // pred_region
        %s232 = ssub.s32 %s19, 1
        // Predicated region
        $region13: #{tpu_custom_call.1} parent=11 // pred_check
          %p233 = pneg %p66
        $region14: #{tpu_custom_call.1} parent=11 // pred_check_branch
          %235 = sbr.rel (%p233) target = $region16
        $region15: #{tpu_custom_call.1} parent=11 // pred_region
          _
        $region16: #{tpu_custom_call.1} parent=11 // pred_fallthru
          _
        // Predicated region
        $region17: #{tpu_custom_call.1} parent=11 // pred_check
          %p236 = pneg %p87
        $region18: #{tpu_custom_call.1} parent=11 // pred_check_branch
          %238 = sbr.rel (%p236) target = $region20
        $region19: #{tpu_custom_call.1} parent=11 // pred_region
          _
        $region20: #{tpu_custom_call.1} parent=11 // pred_fallthru
          _
        // Predicated region
        $region21: #{tpu_custom_call.1} parent=11 // pred_check
          %p239 = pneg %p108
        $region22: #{tpu_custom_call.1} parent=11 // pred_check_branch
          %241 = sbr.rel (%p239) target = $region24
        $region23: #{tpu_custom_call.1} parent=11 // pred_region
          _
        $region24: #{tpu_custom_call.1} parent=11 // pred_fallthru
          _
        // Predicated region
        $region25: #{tpu_custom_call.1} parent=11 // pred_check
          %p242 = pneg %p129
        $region26: #{tpu_custom_call.1} parent=11 // pred_check_branch
          %244 = sbr.rel (%p242) target = $region28
        $region27: #{tpu_custom_call.1} parent=11 // pred_region
          _
        $region28: #{tpu_custom_call.1} parent=11 // pred_fallthru
          _
        // Predicated region
        $region29: #{tpu_custom_call.1} parent=11 // pred_check
          %p245 = pneg %p150
        $region30: #{tpu_custom_call.1} parent=11 // pred_check_branch
          %247 = sbr.rel (%p245) target = $region32
        $region31: #{tpu_custom_call.1} parent=11 // pred_region
          _
        $region32: #{tpu_custom_call.1} parent=11 // pred_fallthru
          _
        // Predicated region
        $region33: #{tpu_custom_call.1} parent=11 // pred_check
          %p248 = pneg %p171
        $region34: #{tpu_custom_call.1} parent=11 // pred_check_branch
          %250 = sbr.rel (%p248) target = $region36
        $region35: #{tpu_custom_call.1} parent=11 // pred_region
          _
        $region36: #{tpu_custom_call.1} parent=11 // pred_fallthru
          _
        // Predicated region
        $region37: #{tpu_custom_call.1} parent=11 // pred_check
          %p251 = pneg %p192
        $region38: #{tpu_custom_call.1} parent=11 // pred_check_branch
          %253 = sbr.rel (%p251) target = $region40
        $region39: #{tpu_custom_call.1} parent=11 // pred_region
          _
        $region40: #{tpu_custom_call.1} parent=11 // pred_fallthru
          _
      $region12: #{tpu_custom_call.1} parent=5 // pred_fallthru
        _
      %p254 = scmp.lt.s32.totalorder %s19, 2
      // Predicated region
      $region41: #{tpu_custom_call.1} parent=5 // pred_check
        %p255 = pneg %p254
      $region42: #{tpu_custom_call.1} parent=5 // pred_check_branch
        %257 = sbr.rel (%p255) target = $region44
      $region43: #{tpu_custom_call.1} parent=5 // pred_region
        // Predicated region
        $region45: #{tpu_custom_call.1} parent=43 // pred_check
          %p258 = pneg %p39
        $region46: #{tpu_custom_call.1} parent=43 // pred_check_branch
          %260 = sbr.rel (%p258) target = $region48
        $region47: #{tpu_custom_call.1} parent=43 // pred_region
          %p261 = scmp.lt.s32.totalorder %s19, 1
          %s262 = scalar_select %p261, %s19, 1
          %s263 = smul.addr %s262, 2
          %s264 = smul.addr %s263, 8
          %s265 = scalar_lea.vmem %s0, %s264
        $region48: #{tpu_custom_call.1} parent=43 // pred_fallthru
          _
      $region44: #{tpu_custom_call.1} parent=5 // pred_fallthru
        _
      %p266 = scmp.le.s32.totalorder 1, %s19
      %p267 = scmp.lt.s32.totalorder %s19, 3
      %p268 = pnand %p266, %p267
      %p269 = pneg %p268
      // Predicated region
      $region49: #{tpu_custom_call.1} parent=5 // pred_check
        _
      $region50: #{tpu_custom_call.1} parent=5 // pred_check_branch
        %271 = sbr.rel (%p268) target = $region52
      $region51: #{tpu_custom_call.1} parent=5 // pred_region
        %s272 = ssub.s32 %s19, 1
        %p273 = scmp.lt.s32.totalorder %s24, 1
        %s274 = scalar_select %p273, %s24, 1
        %s275 = smul.addr %s274, 2
        %s276 = smul.addr %s275, 8
        %s277 = scalar_lea.vmem %s0, %s276
        %p278 = pneg %p45
        %p279 = pneg %p42
        %p280 = pneg %p66
        %p281 = pneg %p63
        %p282 = pneg %p87
        %p283 = pneg %p84
        %p284 = pneg %p108
        %p285 = pneg %p105
        %p286 = pneg %p129
        %p287 = pneg %p126
        %p288 = pneg %p150
        %p289 = pneg %p147
        %p290 = pneg %p171
        %p291 = pneg %p168
        %p292 = pneg %p192
        %p293 = pneg %p189
        %p294 = pneg %p218
        %p295 = pneg %p215
        %s296 = sand.u32 %s205, 1
        %s297 = scalar_lea.sflag [#allocation6], %s296
        %s298 = sand.u32 %s205, 1
        %s299 = smul.addr %s298, 2
        %s300 = scalar_lea.vmem [#allocation5], %s299
        %p301 = scmp.lt.s32.totalorder %s24, 1
        %s302 = scalar_select %p301, %s24, 1
        %s303 = smul.addr %s302, 2
        %s304 = smul.addr %s303, 8
        %s305 = scalar_lea.vmem %s0, %s304
        %v306 = vld [vmem:[%s1] sm:$0x3]
        %307 = vst [vmem:[#allocation2] sm:$0xff] 0.0
        %308 = vst [vmem:[#allocation2 + $0x8] sm:$0xff] 0.0
        %309 = vst [vmem:[#allocation2 + $0x10] sm:$0xff] 0.0
        %vm310 = vcmask 138240
        %311 = vst.msk [vmem:[#allocation2 + $0x18] sm:$0xff] %vm310, 0.0
        %v312 = vld [vmem:[%s305] sm:$0xff]
        %v313 = vld [vmem:[%s305 + $0x8] sm:$0xff]
        %314 = vst [vmem:[#allocation2 + $0x8] sm:$0xff] %v312
        %vm315 = vcmask 793600
        %316 = vst.msk [vmem:[#allocation2 + $0x10] sm:$0xff] %vm315, %v313
        %v317 = vld [vmem:[%s2] sm:$0xff]
        %v318 = vld [vmem:[#allocation2] sm:$0xff]
        %v319 = vld [vmem:[#allocation2 + $0x8] sm:$0xff]
        %v320 = vld [vmem:[#allocation2 + $0x10] sm:$0xff]
        %s321 = scalar_lea.vmem %s2, 8
        %v322 = vld [vmem:[%s321] sm:$0xff]
        %326 = vrot.lane.b32.xlu0 %v318, 15
        %v327 = vpop.permute.xlu0 %326
        %328 = vrot.lane.b32.xlu0 %v319, 15
        %v329 = vpop.permute.xlu0 %328
        %330 = vrot.lane.b32.xlu0 %v320, 15
        %v331 = vpop.permute.xlu0 %330
        %vm332 = vcmask 121856
        %v333 = vsel %vm332, %v327, %v329
        %v334 = vsel %vm332, %v329, %v331
        %vm337 = vcmask 64512
        %v339 = vsel %vm337, %v322, 0
        %341 = vmatprep.subr.mxu0 %v334
        %342 = vmatpush1.msra.mxu0 %v333
        %343 = vmatprep.subr.mxu0 0.0
        %344 = vmatpush1.msra.mxu0 0.0
        %345 = vmatprep.subr.mxu0 0.0
        %346 = vmatpush1.msra.mxu0 0.0
        %347 = vmatprep.subr.mxu0 0.0
        %348 = vmatpush1.msra.mxu0 0.0
        %349 = vmatprep.subr.mxu0 0.0
        %350 = vmatpush1.msra.mxu0 0.0
        %351 = vmatprep.subr.mxu0 0.0
        %352 = vmatpush1.msra.mxu0 0.0
        %353 = vmatprep.subr.mxu0 0.0
        %354 = vmatpush1.msra.mxu0 0.0
        %355 = vmatprep.subr.mxu0 0.0
        %356 = vmatpush1.msra.mxu0 0.0
        %357 = vmatprep.subr.mxu0 0.0
        %358 = vmatpush1.msra.mxu0 0.0
        %359 = vmatprep.subr.mxu0 0.0
        %360 = vmatpush1.msra.mxu0 0.0
        %361 = vmatprep.subr.mxu0 0.0
        %362 = vmatpush1.msra.mxu0 0.0
        %363 = vmatprep.subr.mxu0 0.0
        %364 = vmatpush1.msra.mxu0 0.0
        %365 = vmatprep.subr.mxu0 0.0
        %366 = vmatpush1.msra.mxu0 0.0
        %367 = vmatprep.subr.mxu0 0.0
        %368 = vmatpush1.msra.mxu0 0.0
        %369 = vmatprep.subr.mxu0 0.0
        %370 = vmatpush1.msra.mxu0 0.0
        %371 = vmatprep.subr.mxu0 0.0
        %372 = vmatpush1.msra.mxu0 0.0
        %373 = vmatprep.subr.mxu0 0.0
        %374 = vmatpush1.msra.mxu0 0.0
        %375 = vmatprep.subr.mxu0 0.0
        %376 = vmatpush1.msra.mxu0 0.0
        %377 = vmatprep.subr.mxu0 0.0
        %378 = vmatpush1.msra.mxu0 0.0
        %379 = vmatprep.subr.mxu0 0.0
        %380 = vmatpush1.msra.mxu0 0.0
        %381 = vmatprep.subr.mxu0 0.0
        %382 = vmatpush1.msra.mxu0 0.0
        %383 = vmatprep.subr.mxu0 0.0
        %384 = vmatpush1.msra.mxu0 0.0
        %385 = vmatprep.subr.mxu0 0.0
        %386 = vmatpush1.msra.mxu0 0.0
        %387 = vmatprep.subr.mxu0 0.0
        %388 = vmatpush1.msra.mxu0 0.0
        %389 = vmatprep.subr.mxu0 0.0
        %390 = vmatpush1.msra.mxu0 0.0
        %391 = vmatprep.subr.mxu0 0.0
        %392 = vmatpush1.msra.mxu0 0.0
        %393 = vmatprep.subr.mxu0 0.0
        %394 = vmatpush1.msra.mxu0 0.0
        %395 = vmatprep.subr.mxu0 0.0
        %396 = vmatpush1.msra.mxu0 0.0
        %397 = vmatprep.subr.mxu0 0.0
        %398 = vmatpush1.msra.mxu0 0.0
        %399 = vmatprep.subr.mxu0 0.0
        %400 = vmatpush1.msra.mxu0 0.0
        %401 = vmatprep.subr.mxu0 0.0
        %402 = vmatpush1.msra.mxu0 0.0
        %403 = vmatprep.subr.mxu0 0.0
        %404 = vmatpush1.msra.mxu0 0.0
        %405 = vmatprep.mubr.f32.mxu0 0.0
        %406 = vmatmul.mubr.f32.gmra.mrb[0].mxu0 %v339
        %v407 = vpop.f32.mrb[0].mxu0
        %v408 = vadd.f32 0.0, %v407
        %v409 = vpop.f32.mrb[0].mxu0
        %v410 = vadd.f32 0.0, %v409
        %411 = vdwg.mxu0
        %412 = vrot.lane.b32.xlu0 %v318, 16
        %v413 = vpop.permute.xlu0 %412
        %414 = vrot.lane.b32.xlu0 %v319, 16
        %v415 = vpop.permute.xlu0 %414
        %416 = vrot.lane.b32.xlu0 %v320, 16
        %v417 = vpop.permute.xlu0 %416
        %vm418 = vcmask 130048
        %v419 = vsel %vm418, %v413, %v415
        %v420 = vsel %vm418, %v415, %v417
        %v424 = vsel %vm337, %v317, 0
        %426 = vmatprep.subr.mxu0 %v420
        %427 = vmatpush1.msra.mxu0 %v419
        %428 = vmatprep.subr.mxu0 0.0
        %429 = vmatpush1.msra.mxu0 0.0
        %430 = vmatprep.subr.mxu0 0.0
        %431 = vmatpush1.msra.mxu0 0.0
        %432 = vmatprep.subr.mxu0 0.0
        %433 = vmatpush1.msra.mxu0 0.0
        %434 = vmatprep.subr.mxu0 0.0
        %435 = vmatpush1.msra.mxu0 0.0
        %436 = vmatprep.subr.mxu0 0.0
        %437 = vmatpush1.msra.mxu0 0.0
        %438 = vmatprep.subr.mxu0 0.0
        %439 = vmatpush1.msra.mxu0 0.0
        %440 = vmatprep.subr.mxu0 0.0
        %441 = vmatpush1.msra.mxu0 0.0
        %442 = vmatprep.subr.mxu0 0.0
        %443 = vmatpush1.msra.mxu0 0.0
        %444 = vmatprep.subr.mxu0 0.0
        %445 = vmatpush1.msra.mxu0 0.0
        %446 = vmatprep.subr.mxu0 0.0
        %447 = vmatpush1.msra.mxu0 0.0
        %448 = vmatprep.subr.mxu0 0.0
        %449 = vmatpush1.msra.mxu0 0.0
        %450 = vmatprep.subr.mxu0 0.0
        %451 = vmatpush1.msra.mxu0 0.0
        %452 = vmatprep.subr.mxu0 0.0
        %453 = vmatpush1.msra.mxu0 0.0
        %454 = vmatprep.subr.mxu0 0.0
        %455 = vmatpush1.msra.mxu0 0.0
        %456 = vmatprep.subr.mxu0 0.0
        %457 = vmatpush1.msra.mxu0 0.0
        %458 = vmatprep.subr.mxu0 0.0
        %459 = vmatpush1.msra.mxu0 0.0
        %460 = vmatprep.subr.mxu0 0.0
        %461 = vmatpush1.msra.mxu0 0.0
        %462 = vmatprep.subr.mxu0 0.0
        %463 = vmatpush1.msra.mxu0 0.0
        %464 = vmatprep.subr.mxu0 0.0
        %465 = vmatpush1.msra.mxu0 0.0
        %466 = vmatprep.subr.mxu0 0.0
        %467 = vmatpush1.msra.mxu0 0.0
        %468 = vmatprep.subr.mxu0 0.0
        %469 = vmatpush1.msra.mxu0 0.0
        %470 = vmatprep.subr.mxu0 0.0
        %471 = vmatpush1.msra.mxu0 0.0
        %472 = vmatprep.subr.mxu0 0.0
        %473 = vmatpush1.msra.mxu0 0.0
        %474 = vmatprep.subr.mxu0 0.0
        %475 = vmatpush1.msra.mxu0 0.0
        %476 = vmatprep.subr.mxu0 0.0
        %477 = vmatpush1.msra.mxu0 0.0
        %478 = vmatprep.subr.mxu0 0.0
        %479 = vmatpush1.msra.mxu0 0.0
        %480 = vmatprep.subr.mxu0 0.0
        %481 = vmatpush1.msra.mxu0 0.0
        %482 = vmatprep.subr.mxu0 0.0
        %483 = vmatpush1.msra.mxu0 0.0
        %484 = vmatprep.subr.mxu0 0.0
        %485 = vmatpush1.msra.mxu0 0.0
        %486 = vmatprep.subr.mxu0 0.0
        %487 = vmatpush1.msra.mxu0 0.0
        %488 = vmatprep.subr.mxu0 0.0
        %489 = vmatpush1.msra.mxu0 0.0
        %490 = vmatprep.mubr.f32.mxu0 0.0
        %491 = vmatmul.mubr.f32.gmra.mrb[0].mxu0 %v424
        %v492 = vpop.f32.mrb[0].mxu0
        %v493 = vadd.f32 %v408, %v492
        %v494 = vpop.f32.mrb[0].mxu0
        %v495 = vadd.f32 %v410, %v494
        %496 = vdwg.mxu0
        %s497 = scalar_lea.vmem %s2, 16
        %v498 = vld [vmem:[%s497] sm:$0xff]
        %499 = vrot.lane.b32.xlu0 %v318, 14
        %v500 = vpop.permute.xlu0 %499
        %501 = vrot.lane.b32.xlu0 %v319, 14
        %v502 = vpop.permute.xlu0 %501
        %503 = vrot.lane.b32.xlu0 %v320, 14
        %v504 = vpop.permute.xlu0 %503
        %vm505 = vcmask 113664
        %v506 = vsel %vm505, %v500, %v502
        %v507 = vsel %vm505, %v502, %v504
        %v511 = vsel %vm337, %v498, 0
        %513 = vmatprep.subr.mxu0 %v507
        %514 = vmatpush1.msra.mxu0 %v506
        %515 = vmatprep.subr.mxu0 0.0
        %516 = vmatpush1.msra.mxu0 0.0
        %517 = vmatprep.subr.mxu0 0.0
        %518 = vmatpush1.msra.mxu0 0.0
        %519 = vmatprep.subr.mxu0 0.0
        %520 = vmatpush1.msra.mxu0 0.0
        %521 = vmatprep.subr.mxu0 0.0
        %522 = vmatpush1.msra.mxu0 0.0
        %523 = vmatprep.subr.mxu0 0.0
        %524 = vmatpush1.msra.mxu0 0.0
        %525 = vmatprep.subr.mxu0 0.0
        %526 = vmatpush1.msra.mxu0 0.0
        %527 = vmatprep.subr.mxu0 0.0
        %528 = vmatpush1.msra.mxu0 0.0
        %529 = vmatprep.subr.mxu0 0.0
        %530 = vmatpush1.msra.mxu0 0.0
        %531 = vmatprep.subr.mxu0 0.0
        %532 = vmatpush1.msra.mxu0 0.0
        %533 = vmatprep.subr.mxu0 0.0
        %534 = vmatpush1.msra.mxu0 0.0
        %535 = vmatprep.subr.mxu0 0.0
        %536 = vmatpush1.msra.mxu0 0.0
        %537 = vmatprep.subr.mxu0 0.0
        %538 = vmatpush1.msra.mxu0 0.0
        %539 = vmatprep.subr.mxu0 0.0
        %540 = vmatpush1.msra.mxu0 0.0
        %541 = vmatprep.subr.mxu0 0.0
        %542 = vmatpush1.msra.mxu0 0.0
        %543 = vmatprep.subr.mxu0 0.0
        %544 = vmatpush1.msra.mxu0 0.0
        %545 = vmatprep.subr.mxu0 0.0
        %546 = vmatpush1.msra.mxu0 0.0
        %547 = vmatprep.subr.mxu0 0.0
        %548 = vmatpush1.msra.mxu0 0.0
        %549 = vmatprep.subr.mxu0 0.0
        %550 = vmatpush1.msra.mxu0 0.0
        %551 = vmatprep.subr.mxu0 0.0
        %552 = vmatpush1.msra.mxu0 0.0
        %553 = vmatprep.subr.mxu0 0.0
        %554 = vmatpush1.msra.mxu0 0.0
        %555 = vmatprep.subr.mxu0 0.0
        %556 = vmatpush1.msra.mxu0 0.0
        %557 = vmatprep.subr.mxu0 0.0
        %558 = vmatpush1.msra.mxu0 0.0
        %559 = vmatprep.subr.mxu0 0.0
        %560 = vmatpush1.msra.mxu0 0.0
        %561 = vmatprep.subr.mxu0 0.0
        %562 = vmatpush1.msra.mxu0 0.0
        %563 = vmatprep.subr.mxu0 0.0
        %564 = vmatpush1.msra.mxu0 0.0
        %565 = vmatprep.subr.mxu0 0.0
        %566 = vmatpush1.msra.mxu0 0.0
        %567 = vmatprep.subr.mxu0 0.0
        %568 = vmatpush1.msra.mxu0 0.0
        %569 = vmatprep.subr.mxu0 0.0
        %570 = vmatpush1.msra.mxu0 0.0
        %571 = vmatprep.subr.mxu0 0.0
        %572 = vmatpush1.msra.mxu0 0.0
        %573 = vmatprep.subr.mxu0 0.0
        %574 = vmatpush1.msra.mxu0 0.0
        %575 = vmatprep.subr.mxu0 0.0
        %576 = vmatpush1.msra.mxu0 0.0
        %577 = vmatprep.mubr.f32.mxu0 0.0
        %578 = vmatmul.mubr.f32.gmra.mrb[0].mxu0 %v511
        %v579 = vpop.f32.mrb[0].mxu0
        %v580 = vadd.f32 0.0, %v579
        %v581 = vpop.f32.mrb[0].mxu0
        %v582 = vadd.f32 0.0, %v581
        %583 = vdwg.mxu0
        %v584 = vadd.f32 %v493, %v580
        %v585 = vadd.f32 %v495, %v582
        %s586 = scalar_lea.vmem %s2, 24
        %v587 = vld [vmem:[%s586] sm:$0xff]
        %588 = vrot.lane.b32.xlu0 %v318, 13
        %v589 = vpop.permute.xlu0 %588
        %590 = vrot.lane.b32.xlu0 %v319, 13
        %v591 = vpop.permute.xlu0 %590
        %592 = vrot.lane.b32.xlu0 %v320, 13
        %v593 = vpop.permute.xlu0 %592
        %vm594 = vcmask 105472
        %v595 = vsel %vm594, %v589, %v591
        %v596 = vsel %vm594, %v591, %v593
        %v600 = vsel %vm337, %v587, 0
        %602 = vmatprep.subr.mxu0 %v596
        %603 = vmatpush1.msra.mxu0 %v595
        %604 = vmatprep.subr.mxu0 0.0
        %605 = vmatpush1.msra.mxu0 0.0
        %606 = vmatprep.subr.mxu0 0.0
        %607 = vmatpush1.msra.mxu0 0.0
        %608 = vmatprep.subr.mxu0 0.0
        %609 = vmatpush1.msra.mxu0 0.0
        %610 = vmatprep.subr.mxu0 0.0
        %611 = vmatpush1.msra.mxu0 0.0
        %612 = vmatprep.subr.mxu0 0.0
        %613 = vmatpush1.msra.mxu0 0.0
        %614 = vmatprep.subr.mxu0 0.0
        %615 = vmatpush1.msra.mxu0 0.0
        %616 = vmatprep.subr.mxu0 0.0
        %617 = vmatpush1.msra.mxu0 0.0
        %618 = vmatprep.subr.mxu0 0.0
        %619 = vmatpush1.msra.mxu0 0.0
        %620 = vmatprep.subr.mxu0 0.0
        %621 = vmatpush1.msra.mxu0 0.0
        %622 = vmatprep.subr.mxu0 0.0
        %623 = vmatpush1.msra.mxu0 0.0
        %624 = vmatprep.subr.mxu0 0.0
        %625 = vmatpush1.msra.mxu0 0.0
        %626 = vmatprep.subr.mxu0 0.0
        %627 = vmatpush1.msra.mxu0 0.0
        %628 = vmatprep.subr.mxu0 0.0
        %629 = vmatpush1.msra.mxu0 0.0
        %630 = vmatprep.subr.mxu0 0.0
        %631 = vmatpush1.msra.mxu0 0.0
        %632 = vmatprep.subr.mxu0 0.0
        %633 = vmatpush1.msra.mxu0 0.0
        %634 = vmatprep.subr.mxu0 0.0
        %635 = vmatpush1.msra.mxu0 0.0
        %636 = vmatprep.subr.mxu0 0.0
        %637 = vmatpush1.msra.mxu0 0.0
        %638 = vmatprep.subr.mxu0 0.0
        %639 = vmatpush1.msra.mxu0 0.0
        %640 = vmatprep.subr.mxu0 0.0
        %641 = vmatpush1.msra.mxu0 0.0
        %642 = vmatprep.subr.mxu0 0.0
        %643 = vmatpush1.msra.mxu0 0.0
        %644 = vmatprep.subr.mxu0 0.0
        %645 = vmatpush1.msra.mxu0 0.0
        %646 = vmatprep.subr.mxu0 0.0
        %647 = vmatpush1.msra.mxu0 0.0
        %648 = vmatprep.subr.mxu0 0.0
        %649 = vmatpush1.msra.mxu0 0.0
        %650 = vmatprep.subr.mxu0 0.0
        %651 = vmatpush1.msra.mxu0 0.0
        %652 = vmatprep.subr.mxu0 0.0
        %653 = vmatpush1.msra.mxu0 0.0
        %654 = vmatprep.subr.mxu0 0.0
        %655 = vmatpush1.msra.mxu0 0.0
        %656 = vmatprep.subr.mxu0 0.0
        %657 = vmatpush1.msra.mxu0 0.0
        %658 = vmatprep.subr.mxu0 0.0
        %659 = vmatpush1.msra.mxu0 0.0
        %660 = vmatprep.subr.mxu0 0.0
        %661 = vmatpush1.msra.mxu0 0.0
        %662 = vmatprep.subr.mxu0 0.0
        %663 = vmatpush1.msra.mxu0 0.0
        %664 = vmatprep.subr.mxu0 0.0
        %665 = vmatpush1.msra.mxu0 0.0
        %666 = vmatprep.mubr.f32.mxu0 0.0
        %667 = vmatmul.mubr.f32.gmra.mrb[0].mxu0 %v600
        %v668 = vpop.f32.mrb[0].mxu0
        %v669 = vadd.f32 0.0, %v668
        %v670 = vpop.f32.mrb[0].mxu0
        %v671 = vadd.f32 0.0, %v670
        %672 = vdwg.mxu0
        %v673 = vadd.f32 %v584, %v669
        %v674 = vadd.f32 %v585, %v671
        %s675 = scalar_lea.vmem %s2, 32
        %v676 = vld [vmem:[%s675] sm:$0xff]
        %677 = vrot.lane.b32.xlu0 %v318, 12
        %v678 = vpop.permute.xlu0 %677
        %679 = vrot.lane.b32.xlu0 %v319, 12
        %v680 = vpop.permute.xlu0 %679
        %681 = vrot.lane.b32.xlu0 %v320, 12
        %v682 = vpop.permute.xlu0 %681
        %vm683 = vcmask 97280
        %v684 = vsel %vm683, %v678, %v680
        %v685 = vsel %vm683, %v680, %v682
        %v689 = vsel %vm337, %v676, 0
        %691 = vmatprep.subr.mxu0 %v685
        %692 = vmatpush1.msra.mxu0 %v684
        %693 = vmatprep.subr.mxu0 0.0
        %694 = vmatpush1.msra.mxu0 0.0
        %695 = vmatprep.subr.mxu0 0.0
        %696 = vmatpush1.msra.mxu0 0.0
        %697 = vmatprep.subr.mxu0 0.0
        %698 = vmatpush1.msra.mxu0 0.0
        %699 = vmatprep.subr.mxu0 0.0
        %700 = vmatpush1.msra.mxu0 0.0
        %701 = vmatprep.subr.mxu0 0.0
        %702 = vmatpush1.msra.mxu0 0.0
        %703 = vmatprep.subr.mxu0 0.0
        %704 = vmatpush1.msra.mxu0 0.0
        %705 = vmatprep.subr.mxu0 0.0
        %706 = vmatpush1.msra.mxu0 0.0
        %707 = vmatprep.subr.mxu0 0.0
        %708 = vmatpush1.msra.mxu0 0.0
        %709 = vmatprep.subr.mxu0 0.0
        %710 = vmatpush1.msra.mxu0 0.0
        %711 = vmatprep.subr.mxu0 0.0
        %712 = vmatpush1.msra.mxu0 0.0
        %713 = vmatprep.subr.mxu0 0.0
        %714 = vmatpush1.msra.mxu0 0.0
        %715 = vmatprep.subr.mxu0 0.0
        %716 = vmatpush1.msra.mxu0 0.0
        %717 = vmatprep.subr.mxu0 0.0
        %718 = vmatpush1.msra.mxu0 0.0
        %719 = vmatprep.subr.mxu0 0.0
        %720 = vmatpush1.msra.mxu0 0.0
        %721 = vmatprep.subr.mxu0 0.0
        %722 = vmatpush1.msra.mxu0 0.0
        %723 = vmatprep.subr.mxu0 0.0
        %724 = vmatpush1.msra.mxu0 0.0
        %725 = vmatprep.subr.mxu0 0.0
        %726 = vmatpush1.msra.mxu0 0.0
        %727 = vmatprep.subr.mxu0 0.0
        %728 = vmatpush1.msra.mxu0 0.0
        %729 = vmatprep.subr.mxu0 0.0
        %730 = vmatpush1.msra.mxu0 0.0
        %731 = vmatprep.subr.mxu0 0.0
        %732 = vmatpush1.msra.mxu0 0.0
        %733 = vmatprep.subr.mxu0 0.0
        %734 = vmatpush1.msra.mxu0 0.0
        %735 = vmatprep.subr.mxu0 0.0
        %736 = vmatpush1.msra.mxu0 0.0
        %737 = vmatprep.subr.mxu0 0.0
        %738 = vmatpush1.msra.mxu0 0.0
        %739 = vmatprep.subr.mxu0 0.0
        %740 = vmatpush1.msra.mxu0 0.0
        %741 = vmatprep.subr.mxu0 0.0
        %742 = vmatpush1.msra.mxu0 0.0
        %743 = vmatprep.subr.mxu0 0.0
        %744 = vmatpush1.msra.mxu0 0.0
        %745 = vmatprep.subr.mxu0 0.0
        %746 = vmatpush1.msra.mxu0 0.0
        %747 = vmatprep.subr.mxu0 0.0
        %748 = vmatpush1.msra.mxu0 0.0
        %749 = vmatprep.subr.mxu0 0.0
        %750 = vmatpush1.msra.mxu0 0.0
        %751 = vmatprep.subr.mxu0 0.0
        %752 = vmatpush1.msra.mxu0 0.0
        %753 = vmatprep.subr.mxu0 0.0
        %754 = vmatpush1.msra.mxu0 0.0
        %755 = vmatprep.mubr.f32.mxu0 0.0
        %756 = vmatmul.mubr.f32.gmra.mrb[0].mxu0 %v689
        %v757 = vpop.f32.mrb[0].mxu0
        %v758 = vadd.f32 0.0, %v757
        %v759 = vpop.f32.mrb[0].mxu0
        %v760 = vadd.f32 0.0, %v759
        %761 = vdwg.mxu0
        %v762 = vadd.f32 %v673, %v758
        %v763 = vadd.f32 %v674, %v760
        %s764 = scalar_lea.vmem %s2, 40
        %v765 = vld [vmem:[%s764] sm:$0xff]
        %766 = vrot.lane.b32.xlu0 %v318, 1
        %v767 = vpop.permute.xlu0 %766
        %768 = vrot.lane.b32.xlu0 %v319, 1
        %v769 = vpop.permute.xlu0 %768
        %770 = vrot.lane.b32.xlu0 %v320, 1
        %v771 = vpop.permute.xlu0 %770
        %vm772 = vcmask 7168
        %v773 = vsel %vm772, %v767, %v769
        %v774 = vsel %vm772, %v769, %v771
        %v778 = vsel %vm337, %v765, 0
        %780 = vmatprep.subr.mxu0 %v774
        %781 = vmatpush1.msra.mxu0 %v773
        %782 = vmatprep.subr.mxu0 0.0
        %783 = vmatpush1.msra.mxu0 0.0
        %784 = vmatprep.subr.mxu0 0.0
        %785 = vmatpush1.msra.mxu0 0.0
        %786 = vmatprep.subr.mxu0 0.0
        %787 = vmatpush1.msra.mxu0 0.0
        %788 = vmatprep.subr.mxu0 0.0
        %789 = vmatpush1.msra.mxu0 0.0
        %790 = vmatprep.subr.mxu0 0.0
        %791 = vmatpush1.msra.mxu0 0.0
        %792 = vmatprep.subr.mxu0 0.0
        %793 = vmatpush1.msra.mxu0 0.0
        %794 = vmatprep.subr.mxu0 0.0
        %795 = vmatpush1.msra.mxu0 0.0
        %796 = vmatprep.subr.mxu0 0.0
        %797 = vmatpush1.msra.mxu0 0.0
        %798 = vmatprep.subr.mxu0 0.0
        %799 = vmatpush1.msra.mxu0 0.0
        %800 = vmatprep.subr.mxu0 0.0
        %801 = vmatpush1.msra.mxu0 0.0
        %802 = vmatprep.subr.mxu0 0.0
        %803 = vmatpush1.msra.mxu0 0.0
        %804 = vmatprep.subr.mxu0 0.0
        %805 = vmatpush1.msra.mxu0 0.0
        %806 = vmatprep.subr.mxu0 0.0
        %807 = vmatpush1.msra.mxu0 0.0
        %808 = vmatprep.subr.mxu0 0.0
        %809 = vmatpush1.msra.mxu0 0.0
        %810 = vmatprep.subr.mxu0 0.0
        %811 = vmatpush1.msra.mxu0 0.0
        %812 = vmatprep.subr.mxu0 0.0
        %813 = vmatpush1.msra.mxu0 0.0
        %814 = vmatprep.subr.mxu0 0.0
        %815 = vmatpush1.msra.mxu0 0.0
        %816 = vmatprep.subr.mxu0 0.0
        %817 = vmatpush1.msra.mxu0 0.0
        %818 = vmatprep.subr.mxu0 0.0
        %819 = vmatpush1.msra.mxu0 0.0
        %820 = vmatprep.subr.mxu0 0.0
        %821 = vmatpush1.msra.mxu0 0.0
        %822 = vmatprep.subr.mxu0 0.0
        %823 = vmatpush1.msra.mxu0 0.0
        %824 = vmatprep.subr.mxu0 0.0
        %825 = vmatpush1.msra.mxu0 0.0
        %826 = vmatprep.subr.mxu0 0.0
        %827 = vmatpush1.msra.mxu0 0.0
        %828 = vmatprep.subr.mxu0 0.0
        %829 = vmatpush1.msra.mxu0 0.0
        %830 = vmatprep.subr.mxu0 0.0
        %831 = vmatpush1.msra.mxu0 0.0
        %832 = vmatprep.subr.mxu0 0.0
        %833 = vmatpush1.msra.mxu0 0.0
        %834 = vmatprep.subr.mxu0 0.0
        %835 = vmatpush1.msra.mxu0 0.0
        %836 = vmatprep.subr.mxu0 0.0
        %837 = vmatpush1.msra.mxu0 0.0
        %838 = vmatprep.subr.mxu0 0.0
        %839 = vmatpush1.msra.mxu0 0.0
        %840 = vmatprep.subr.mxu0 0.0
        %841 = vmatpush1.msra.mxu0 0.0
        %842 = vmatprep.subr.mxu0 0.0
        %843 = vmatpush1.msra.mxu0 0.0
        %844 = vmatprep.mubr.f32.mxu0 0.0
        %845 = vmatmul.mubr.f32.gmra.mrb[0].mxu0 %v778
        %v846 = vpop.f32.mrb[0].mxu0
        %v847 = vadd.f32 0.0, %v846
        %v848 = vpop.f32.mrb[0].mxu0
        %v849 = vadd.f32 0.0, %v848
        %850 = vdwg.mxu0
        %v851 = vadd.f32 %v762, %v847
        %v852 = vadd.f32 %v763, %v849
        %s853 = scalar_lea.vmem %s2, 48
        %v854 = vld [vmem:[%s853] sm:$0xff]
        %v856 = vsel %vm337, %v854, 0
        %858 = vmatprep.subr.mxu0 %v320
        %859 = vmatpush1.msra.mxu0 %v319
        %860 = vmatprep.subr.mxu0 0.0
        %861 = vmatpush1.msra.mxu0 0.0
        %862 = vmatprep.subr.mxu0 0.0
        %863 = vmatpush1.msra.mxu0 0.0
        %864 = vmatprep.subr.mxu0 0.0
        %865 = vmatpush1.msra.mxu0 0.0
        %866 = vmatprep.subr.mxu0 0.0
        %867 = vmatpush1.msra.mxu0 0.0
        %868 = vmatprep.subr.mxu0 0.0
        %869 = vmatpush1.msra.mxu0 0.0
        %870 = vmatprep.subr.mxu0 0.0
        %871 = vmatpush1.msra.mxu0 0.0
        %872 = vmatprep.subr.mxu0 0.0
        %873 = vmatpush1.msra.mxu0 0.0
        %874 = vmatprep.subr.mxu0 0.0
        %875 = vmatpush1.msra.mxu0 0.0
        %876 = vmatprep.subr.mxu0 0.0
        %877 = vmatpush1.msra.mxu0 0.0
        %878 = vmatprep.subr.mxu0 0.0
        %879 = vmatpush1.msra.mxu0 0.0
        %880 = vmatprep.subr.mxu0 0.0
        %881 = vmatpush1.msra.mxu0 0.0
        %882 = vmatprep.subr.mxu0 0.0
        %883 = vmatpush1.msra.mxu0 0.0
        %884 = vmatprep.subr.mxu0 0.0
        %885 = vmatpush1.msra.mxu0 0.0
        %886 = vmatprep.subr.mxu0 0.0
        %887 = vmatpush1.msra.mxu0 0.0
        %888 = vmatprep.subr.mxu0 0.0
        %889 = vmatpush1.msra.mxu0 0.0
        %890 = vmatprep.subr.mxu0 0.0
        %891 = vmatpush1.msra.mxu0 0.0
        %892 = vmatprep.subr.mxu0 0.0
        %893 = vmatpush1.msra.mxu0 0.0
        %894 = vmatprep.subr.mxu0 0.0
        %895 = vmatpush1.msra.mxu0 0.0
        %896 = vmatprep.subr.mxu0 0.0
        %897 = vmatpush1.msra.mxu0 0.0
        %898 = vmatprep.subr.mxu0 0.0
        %899 = vmatpush1.msra.mxu0 0.0
        %900 = vmatprep.subr.mxu0 0.0
        %901 = vmatpush1.msra.mxu0 0.0
        %902 = vmatprep.subr.mxu0 0.0
        %903 = vmatpush1.msra.mxu0 0.0
        %904 = vmatprep.subr.mxu0 0.0
        %905 = vmatpush1.msra.mxu0 0.0
        %906 = vmatprep.subr.mxu0 0.0
        %907 = vmatpush1.msra.mxu0 0.0
        %908 = vmatprep.subr.mxu0 0.0
        %909 = vmatpush1.msra.mxu0 0.0
        %910 = vmatprep.subr.mxu0 0.0
        %911 = vmatpush1.msra.mxu0 0.0
        %912 = vmatprep.subr.mxu0 0.0
        %913 = vmatpush1.msra.mxu0 0.0
        %914 = vmatprep.subr.mxu0 0.0
        %915 = vmatpush1.msra.mxu0 0.0
        %916 = vmatprep.subr.mxu0 0.0
        %917 = vmatpush1.msra.mxu0 0.0
        %918 = vmatprep.subr.mxu0 0.0
        %919 = vmatpush1.msra.mxu0 0.0
        %920 = vmatprep.subr.mxu0 0.0
        %921 = vmatpush1.msra.mxu0 0.0
        %922 = vmatprep.mubr.f32.mxu0 0.0
        %923 = vmatmul.mubr.f32.gmra.mrb[0].mxu0 %v856
        %v924 = vpop.f32.mrb[0].mxu0
        %v925 = vadd.f32 0.0, %v924
        %v926 = vpop.f32.mrb[0].mxu0
        %v927 = vadd.f32 0.0, %v926
        %928 = vdwg.mxu0
        %v929 = vadd.f32 %v851, %v925
        %v930 = vadd.f32 %v852, %v927
        %s931 = scalar_lea.vmem %s2, 56
        %v932 = vld [vmem:[%s931] sm:$0xff]
        %933 = vrot.lane.b32.xlu0 %v319, 127
        %v934 = vpop.permute.xlu0 %933
        %935 = vrot.lane.b32.xlu0 %v320, 127
        %v936 = vpop.permute.xlu0 %935
        %vm937 = vcmask 1039360
        %v938 = vsel %vm937, %v934, %v936
        %v942 = vsel %vm337, %v932, 0
        %944 = vmatprep.subr.mxu0 %v936
        %945 = vmatpush1.msra.mxu0 %v938
        %946 = vmatprep.subr.mxu0 0.0
        %947 = vmatpush1.msra.mxu0 0.0
        %948 = vmatprep.subr.mxu0 0.0
        %949 = vmatpush1.msra.mxu0 0.0
        %950 = vmatprep.subr.mxu0 0.0
        %951 = vmatpush1.msra.mxu0 0.0
        %952 = vmatprep.subr.mxu0 0.0
        %953 = vmatpush1.msra.mxu0 0.0
        %954 = vmatprep.subr.mxu0 0.0
        %955 = vmatpush1.msra.mxu0 0.0
        %956 = vmatprep.subr.mxu0 0.0
        %957 = vmatpush1.msra.mxu0 0.0
        %958 = vmatprep.subr.mxu0 0.0
        %959 = vmatpush1.msra.mxu0 0.0
        %960 = vmatprep.subr.mxu0 0.0
        %961 = vmatpush1.msra.mxu0 0.0
        %962 = vmatprep.subr.mxu0 0.0
        %963 = vmatpush1.msra.mxu0 0.0
        %964 = vmatprep.subr.mxu0 0.0
        %965 = vmatpush1.msra.mxu0 0.0
        %966 = vmatprep.subr.mxu0 0.0
        %967 = vmatpush1.msra.mxu0 0.0
        %968 = vmatprep.subr.mxu0 0.0
        %969 = vmatpush1.msra.mxu0 0.0
        %970 = vmatprep.subr.mxu0 0.0
        %971 = vmatpush1.msra.mxu0 0.0
        %972 = vmatprep.subr.mxu0 0.0
        %973 = vmatpush1.msra.mxu0 0.0
        %974 = vmatprep.subr.mxu0 0.0
        %975 = vmatpush1.msra.mxu0 0.0
        %976 = vmatprep.subr.mxu0 0.0
        %977 = vmatpush1.msra.mxu0 0.0
        %978 = vmatprep.subr.mxu0 0.0
        %979 = vmatpush1.msra.mxu0 0.0
        %980 = vmatprep.subr.mxu0 0.0
        %981 = vmatpush1.msra.mxu0 0.0
        %982 = vmatprep.subr.mxu0 0.0
        %983 = vmatpush1.msra.mxu0 0.0
        %984 = vmatprep.subr.mxu0 0.0
        %985 = vmatpush1.msra.mxu0 0.0
        %986 = vmatprep.subr.mxu0 0.0
        %987 = vmatpush1.msra.mxu0 0.0
        %988 = vmatprep.subr.mxu0 0.0
        %989 = vmatpush1.msra.mxu0 0.0
        %990 = vmatprep.subr.mxu0 0.0
        %991 = vmatpush1.msra.mxu0 0.0
        %992 = vmatprep.subr.mxu0 0.0
        %993 = vmatpush1.msra.mxu0 0.0
        %994 = vmatprep.subr.mxu0 0.0
        %995 = vmatpush1.msra.mxu0 0.0
        %996 = vmatprep.subr.mxu0 0.0
        %997 = vmatpush1.msra.mxu0 0.0
        %998 = vmatprep.subr.mxu0 0.0
        %999 = vmatpush1.msra.mxu0 0.0
        %1000 = vmatprep.subr.mxu0 0.0
        %1001 = vmatpush1.msra.mxu0 0.0
        %1002 = vmatprep.subr.mxu0 0.0
        %1003 = vmatpush1.msra.mxu0 0.0
        %1004 = vmatprep.subr.mxu0 0.0
        %1005 = vmatpush1.msra.mxu0 0.0
        %1006 = vmatprep.subr.mxu0 0.0
        %1007 = vmatpush1.msra.mxu0 0.0
        %1008 = vmatprep.mubr.f32.mxu0 0.0
        %1009 = vmatmul.mubr.f32.gmra.mrb[0].mxu0 %v942
        %v1010 = vpop.f32.mrb[0].mxu0
        %v1011 = vadd.f32 0.0, %v1010
        %v1012 = vpop.f32.mrb[0].mxu0
        %v1013 = vadd.f32 0.0, %v1012
        %1014 = vdwg.mxu0
        %v1015 = vadd.f32 %v929, %v1011
        %v1016 = vadd.f32 %v930, %v1013
        %s1017 = scalar_lea.vmem %s2, 64
        %v1018 = vld [vmem:[%s1017] sm:$0xff]
        %1019 = vrot.lane.b32.xlu0 %v319, 126
        %v1020 = vpop.permute.xlu0 %1019
        %1021 = vrot.lane.b32.xlu0 %v320, 126
        %v1022 = vpop.permute.xlu0 %1021
        %vm1023 = vcmask 1031168
        %v1024 = vsel %vm1023, %v1020, %v1022
        %v1028 = vsel %vm337, %v1018, 0
        %1030 = vmatprep.subr.mxu0 %v1022
        %1031 = vmatpush1.msra.mxu0 %v1024
        %1032 = vmatprep.subr.mxu0 0.0
        %1033 = vmatpush1.msra.mxu0 0.0
        %1034 = vmatprep.subr.mxu0 0.0
        %1035 = vmatpush1.msra.mxu0 0.0
        %1036 = vmatprep.subr.mxu0 0.0
        %1037 = vmatpush1.msra.mxu0 0.0
        %1038 = vmatprep.subr.mxu0 0.0
        %1039 = vmatpush1.msra.mxu0 0.0
        %1040 = vmatprep.subr.mxu0 0.0
        %1041 = vmatpush1.msra.mxu0 0.0
        %1042 = vmatprep.subr.mxu0 0.0
        %1043 = vmatpush1.msra.mxu0 0.0
        %1044 = vmatprep.subr.mxu0 0.0
        %1045 = vmatpush1.msra.mxu0 0.0
        %1046 = vmatprep.subr.mxu0 0.0
        %1047 = vmatpush1.msra.mxu0 0.0
        %1048 = vmatprep.subr.mxu0 0.0
        %1049 = vmatpush1.msra.mxu0 0.0
        %1050 = vmatprep.subr.mxu0 0.0
        %1051 = vmatpush1.msra.mxu0 0.0
        %1052 = vmatprep.subr.mxu0 0.0
        %1053 = vmatpush1.msra.mxu0 0.0
        %1054 = vmatprep.subr.mxu0 0.0
        %1055 = vmatpush1.msra.mxu0 0.0
        %1056 = vmatprep.subr.mxu0 0.0
        %1057 = vmatpush1.msra.mxu0 0.0
        %1058 = vmatprep.subr.mxu0 0.0
        %1059 = vmatpush1.msra.mxu0 0.0
        %1060 = vmatprep.subr.mxu0 0.0
        %1061 = vmatpush1.msra.mxu0 0.0
        %1062 = vmatprep.subr.mxu0 0.0
        %1063 = vmatpush1.msra.mxu0 0.0
        %1064 = vmatprep.subr.mxu0 0.0
        %1065 = vmatpush1.msra.mxu0 0.0
        %1066 = vmatprep.subr.mxu0 0.0
        %1067 = vmatpush1.msra.mxu0 0.0
        %1068 = vmatprep.subr.mxu0 0.0
        %1069 = vmatpush1.msra.mxu0 0.0
        %1070 = vmatprep.subr.mxu0 0.0
        %1071 = vmatpush1.msra.mxu0 0.0
        %1072 = vmatprep.subr.mxu0 0.0
        %1073 = vmatpush1.msra.mxu0 0.0
        %1074 = vmatprep.subr.mxu0 0.0
        %1075 = vmatpush1.msra.mxu0 0.0
        %1076 = vmatprep.subr.mxu0 0.0
        %1077 = vmatpush1.msra.mxu0 0.0
        %1078 = vmatprep.subr.mxu0 0.0
        %1079 = vmatpush1.msra.mxu0 0.0
        %1080 = vmatprep.subr.mxu0 0.0
        %1081 = vmatpush1.msra.mxu0 0.0
        %1082 = vmatprep.subr.mxu0 0.0
        %1083 = vmatpush1.msra.mxu0 0.0
        %1084 = vmatprep.subr.mxu0 0.0
        %1085 = vmatpush1.msra.mxu0 0.0
        %1086 = vmatprep.subr.mxu0 0.0
        %1087 = vmatpush1.msra.mxu0 0.0
        %1088 = vmatprep.subr.mxu0 0.0
        %1089 = vmatpush1.msra.mxu0 0.0
        %1090 = vmatprep.subr.mxu0 0.0
        %1091 = vmatpush1.msra.mxu0 0.0
        %1092 = vmatprep.subr.mxu0 0.0
        %1093 = vmatpush1.msra.mxu0 0.0
        %1094 = vmatprep.mubr.f32.mxu0 0.0
        %1095 = vmatmul.mubr.f32.gmra.mrb[0].mxu0 %v1028
        %v1096 = vpop.f32.mrb[0].mxu0
        %v1097 = vadd.f32 0.0, %v1096
        %v1098 = vpop.f32.mrb[0].mxu0
        %v1099 = vadd.f32 0.0, %v1098
        %1100 = vdwg.mxu0
        %v1101 = vadd.f32 %v1015, %v1097
        %v1102 = vadd.f32 %v1016, %v1099
        %s1103 = scalar_lea.vmem %s2, 72
        %v1104 = vld [vmem:[%s1103] sm:$0xff]
        %1105 = vrot.lane.b32.xlu0 %v319, 125
        %v1106 = vpop.permute.xlu0 %1105
        %1107 = vrot.lane.b32.xlu0 %v320, 125
        %v1108 = vpop.permute.xlu0 %1107
        %vm1109 = vcmask 1022976
        %v1110 = vsel %vm1109, %v1106, %v1108
        %v1114 = vsel %vm337, %v1104, 0
        %1116 = vmatprep.subr.mxu0 %v1108
        %1117 = vmatpush1.msra.mxu0 %v1110
        %1118 = vmatprep.subr.mxu0 0.0
        %1119 = vmatpush1.msra.mxu0 0.0
        %1120 = vmatprep.subr.mxu0 0.0
        %1121 = vmatpush1.msra.mxu0 0.0
        %1122 = vmatprep.subr.mxu0 0.0
        %1123 = vmatpush1.msra.mxu0 0.0
        %1124 = vmatprep.subr.mxu0 0.0
        %1125 = vmatpush1.msra.mxu0 0.0
        %1126 = vmatprep.subr.mxu0 0.0
        %1127 = vmatpush1.msra.mxu0 0.0
        %1128 = vmatprep.subr.mxu0 0.0
        %1129 = vmatpush1.msra.mxu0 0.0
        %1130 = vmatprep.subr.mxu0 0.0
        %1131 = vmatpush1.msra.mxu0 0.0
        %1132 = vmatprep.subr.mxu0 0.0
        %1133 = vmatpush1.msra.mxu0 0.0
        %1134 = vmatprep.subr.mxu0 0.0
        %1135 = vmatpush1.msra.mxu0 0.0
        %1136 = vmatprep.subr.mxu0 0.0
        %1137 = vmatpush1.msra.mxu0 0.0
        %1138 = vmatprep.subr.mxu0 0.0
        %1139 = vmatpush1.msra.mxu0 0.0
        %1140 = vmatprep.subr.mxu0 0.0
        %1141 = vmatpush1.msra.mxu0 0.0
        %1142 = vmatprep.subr.mxu0 0.0
        %1143 = vmatpush1.msra.mxu0 0.0
        %1144 = vmatprep.subr.mxu0 0.0
        %1145 = vmatpush1.msra.mxu0 0.0
        %1146 = vmatprep.subr.mxu0 0.0
        %1147 = vmatpush1.msra.mxu0 0.0
        %1148 = vmatprep.subr.mxu0 0.0
        %1149 = vmatpush1.msra.mxu0 0.0
        %1150 = vmatprep.subr.mxu0 0.0
        %1151 = vmatpush1.msra.mxu0 0.0
        %1152 = vmatprep.subr.mxu0 0.0
        %1153 = vmatpush1.msra.mxu0 0.0
        %1154 = vmatprep.subr.mxu0 0.0
        %1155 = vmatpush1.msra.mxu0 0.0
        %1156 = vmatprep.subr.mxu0 0.0
        %1157 = vmatpush1.msra.mxu0 0.0
        %1158 = vmatprep.subr.mxu0 0.0
        %1159 = vmatpush1.msra.mxu0 0.0
        %1160 = vmatprep.subr.mxu0 0.0
        %1161 = vmatpush1.msra.mxu0 0.0
        %1162 = vmatprep.subr.mxu0 0.0
        %1163 = vmatpush1.msra.mxu0 0.0
        %1164 = vmatprep.subr.mxu0 0.0
        %1165 = vmatpush1.msra.mxu0 0.0
        %1166 = vmatprep.subr.mxu0 0.0
        %1167 = vmatpush1.msra.mxu0 0.0
        %1168 = vmatprep.subr.mxu0 0.0
        %1169 = vmatpush1.msra.mxu0 0.0
        %1170 = vmatprep.subr.mxu0 0.0
        %1171 = vmatpush1.msra.mxu0 0.0
        %1172 = vmatprep.subr.mxu0 0.0
        %1173 = vmatpush1.msra.mxu0 0.0
        %1174 = vmatprep.subr.mxu0 0.0
        %1175 = vmatpush1.msra.mxu0 0.0
        %1176 = vmatprep.subr.mxu0 0.0
        %1177 = vmatpush1.msra.mxu0 0.0
        %1178 = vmatprep.subr.mxu0 0.0
        %1179 = vmatpush1.msra.mxu0 0.0
        %1180 = vmatprep.mubr.f32.mxu0 0.0
        %1181 = vmatmul.mubr.f32.gmra.mrb[0].mxu0 %v1114
        %v1182 = vpop.f32.mrb[0].mxu0
        %v1183 = vadd.f32 0.0, %v1182
        %v1184 = vpop.f32.mrb[0].mxu0
        %v1185 = vadd.f32 0.0, %v1184
        %1186 = vdwg.mxu0
        %v1187 = vadd.f32 %v1101, %v1183
        %v1188 = vadd.f32 %v1102, %v1185
        %s1189 = scalar_lea.vmem %s2, 80
        %v1190 = vld [vmem:[%s1189] sm:$0xff]
        %1191 = vrot.lane.b32.xlu0 %v319, 114
        %v1192 = vpop.permute.xlu0 %1191
        %1193 = vrot.lane.b32.xlu0 %v320, 114
        %v1194 = vpop.permute.xlu0 %1193
        %vm1195 = vcmask 932864
        %v1196 = vsel %vm1195, %v1192, %v1194
        %v1200 = vsel %vm337, %v1190, 0
        %1202 = vmatprep.subr.mxu0 %v1194
        %1203 = vmatpush1.msra.mxu0 %v1196
        %1204 = vmatprep.subr.mxu0 0.0
        %1205 = vmatpush1.msra.mxu0 0.0
        %1206 = vmatprep.subr.mxu0 0.0
        %1207 = vmatpush1.msra.mxu0 0.0
        %1208 = vmatprep.subr.mxu0 0.0
        %1209 = vmatpush1.msra.mxu0 0.0
        %1210 = vmatprep.subr.mxu0 0.0
        %1211 = vmatpush1.msra.mxu0 0.0
        %1212 = vmatprep.subr.mxu0 0.0
        %1213 = vmatpush1.msra.mxu0 0.0
        %1214 = vmatprep.subr.mxu0 0.0
        %1215 = vmatpush1.msra.mxu0 0.0
        %1216 = vmatprep.subr.mxu0 0.0
        %1217 = vmatpush1.msra.mxu0 0.0
        %1218 = vmatprep.subr.mxu0 0.0
        %1219 = vmatpush1.msra.mxu0 0.0
        %1220 = vmatprep.subr.mxu0 0.0
        %1221 = vmatpush1.msra.mxu0 0.0
        %1222 = vmatprep.subr.mxu0 0.0
        %1223 = vmatpush1.msra.mxu0 0.0
        %1224 = vmatprep.subr.mxu0 0.0
        %1225 = vmatpush1.msra.mxu0 0.0
        %1226 = vmatprep.subr.mxu0 0.0
        %1227 = vmatpush1.msra.mxu0 0.0
        %1228 = vmatprep.subr.mxu0 0.0
        %1229 = vmatpush1.msra.mxu0 0.0
        %1230 = vmatprep.subr.mxu0 0.0
        %1231 = vmatpush1.msra.mxu0 0.0
        %1232 = vmatprep.subr.mxu0 0.0
        %1233 = vmatpush1.msra.mxu0 0.0
        %1234 = vmatprep.subr.mxu0 0.0
        %1235 = vmatpush1.msra.mxu0 0.0
        %1236 = vmatprep.subr.mxu0 0.0
        %1237 = vmatpush1.msra.mxu0 0.0
        %1238 = vmatprep.subr.mxu0 0.0
        %1239 = vmatpush1.msra.mxu0 0.0
        %1240 = vmatprep.subr.mxu0 0.0
        %1241 = vmatpush1.msra.mxu0 0.0
        %1242 = vmatprep.subr.mxu0 0.0
        %1243 = vmatpush1.msra.mxu0 0.0
        %1244 = vmatprep.subr.mxu0 0.0
        %1245 = vmatpush1.msra.mxu0 0.0
        %1246 = vmatprep.subr.mxu0 0.0
        %1247 = vmatpush1.msra.mxu0 0.0
        %1248 = vmatprep.subr.mxu0 0.0
        %1249 = vmatpush1.msra.mxu0 0.0
        %1250 = vmatprep.subr.mxu0 0.0
        %1251 = vmatpush1.msra.mxu0 0.0
        %1252 = vmatprep.subr.mxu0 0.0
        %1253 = vmatpush1.msra.mxu0 0.0
        %1254 = vmatprep.subr.mxu0 0.0
        %1255 = vmatpush1.msra.mxu0 0.0
        %1256 = vmatprep.subr.mxu0 0.0
        %1257 = vmatpush1.msra.mxu0 0.0
        %1258 = vmatprep.subr.mxu0 0.0
        %1259 = vmatpush1.msra.mxu0 0.0
        %1260 = vmatprep.subr.mxu0 0.0
        %1261 = vmatpush1.msra.mxu0 0.0
        %1262 = vmatprep.subr.mxu0 0.0
        %1263 = vmatpush1.msra.mxu0 0.0
        %1264 = vmatprep.subr.mxu0 0.0
        %1265 = vmatpush1.msra.mxu0 0.0
        %1266 = vmatprep.mubr.f32.mxu0 0.0
        %1267 = vmatmul.mubr.f32.gmra.mrb[0].mxu0 %v1200
        %v1268 = vpop.f32.mrb[0].mxu0
        %v1269 = vadd.f32 0.0, %v1268
        %v1270 = vpop.f32.mrb[0].mxu0
        %v1271 = vadd.f32 0.0, %v1270
        %1272 = vdwg.mxu0
        %v1273 = vadd.f32 %v1187, %v1269
        %v1274 = vadd.f32 %v1188, %v1271
        %s1275 = scalar_lea.vmem %s2, 88
        %v1276 = vld [vmem:[%s1275] sm:$0xff]
        %1277 = vrot.lane.b32.xlu0 %v319, 113
        %v1278 = vpop.permute.xlu0 %1277
        %1279 = vrot.lane.b32.xlu0 %v320, 113
        %v1280 = vpop.permute.xlu0 %1279
        %vm1281 = vcmask 924672
        %v1282 = vsel %vm1281, %v1278, %v1280
        %v1286 = vsel %vm337, %v1276, 0
        %1288 = vmatprep.subr.mxu0 %v1280
        %1289 = vmatpush1.msra.mxu0 %v1282
        %1290 = vmatprep.subr.mxu0 0.0
        %1291 = vmatpush1.msra.mxu0 0.0
        %1292 = vmatprep.subr.mxu0 0.0
        %1293 = vmatpush1.msra.mxu0 0.0
        %1294 = vmatprep.subr.mxu0 0.0
        %1295 = vmatpush1.msra.mxu0 0.0
        %1296 = vmatprep.subr.mxu0 0.0
        %1297 = vmatpush1.msra.mxu0 0.0
        %1298 = vmatprep.subr.mxu0 0.0
        %1299 = vmatpush1.msra.mxu0 0.0
        %1300 = vmatprep.subr.mxu0 0.0
        %1301 = vmatpush1.msra.mxu0 0.0
        %1302 = vmatprep.subr.mxu0 0.0
        %1303 = vmatpush1.msra.mxu0 0.0
        %1304 = vmatprep.subr.mxu0 0.0
        %1305 = vmatpush1.msra.mxu0 0.0
        %1306 = vmatprep.subr.mxu0 0.0
        %1307 = vmatpush1.msra.mxu0 0.0
        %1308 = vmatprep.subr.mxu0 0.0
        %1309 = vmatpush1.msra.mxu0 0.0
        %1310 = vmatprep.subr.mxu0 0.0
        %1311 = vmatpush1.msra.mxu0 0.0
        %1312 = vmatprep.subr.mxu0 0.0
        %1313 = vmatpush1.msra.mxu0 0.0
        %1314 = vmatprep.subr.mxu0 0.0
        %1315 = vmatpush1.msra.mxu0 0.0
        %1316 = vmatprep.subr.mxu0 0.0
        %1317 = vmatpush1.msra.mxu0 0.0
        %1318 = vmatprep.subr.mxu0 0.0
        %1319 = vmatpush1.msra.mxu0 0.0
        %1320 = vmatprep.subr.mxu0 0.0
        %1321 = vmatpush1.msra.mxu0 0.0
        %1322 = vmatprep.subr.mxu0 0.0
        %1323 = vmatpush1.msra.mxu0 0.0
        %1324 = vmatprep.subr.mxu0 0.0
        %1325 = vmatpush1.msra.mxu0 0.0
        %1326 = vmatprep.subr.mxu0 0.0
        %1327 = vmatpush1.msra.mxu0 0.0
        %1328 = vmatprep.subr.mxu0 0.0
        %1329 = vmatpush1.msra.mxu0 0.0
        %1330 = vmatprep.subr.mxu0 0.0
        %1331 = vmatpush1.msra.mxu0 0.0
        %1332 = vmatprep.subr.mxu0 0.0
        %1333 = vmatpush1.msra.mxu0 0.0
        %1334 = vmatprep.subr.mxu0 0.0
        %1335 = vmatpush1.msra.mxu0 0.0
        %1336 = vmatprep.subr.mxu0 0.0
        %1337 = vmatpush1.msra.mxu0 0.0
        %1338 = vmatprep.subr.mxu0 0.0
        %1339 = vmatpush1.msra.mxu0 0.0
        %1340 = vmatprep.subr.mxu0 0.0
        %1341 = vmatpush1.msra.mxu0 0.0
        %1342 = vmatprep.subr.mxu0 0.0
        %1343 = vmatpush1.msra.mxu0 0.0
        %1344 = vmatprep.subr.mxu0 0.0
        %1345 = vmatpush1.msra.mxu0 0.0
        %1346 = vmatprep.subr.mxu0 0.0
        %1347 = vmatpush1.msra.mxu0 0.0
        %1348 = vmatprep.subr.mxu0 0.0
        %1349 = vmatpush1.msra.mxu0 0.0
        %1350 = vmatprep.subr.mxu0 0.0
        %1351 = vmatpush1.msra.mxu0 0.0
        %1352 = vmatprep.mubr.f32.mxu0 0.0
        %1353 = vmatmul.mubr.f32.gmra.mrb[0].mxu0 %v1286
        %v1354 = vpop.f32.mrb[0].mxu0
        %v1355 = vadd.f32 0.0, %v1354
        %v1356 = vpop.f32.mrb[0].mxu0
        %v1357 = vadd.f32 0.0, %v1356
        %1358 = vdwg.mxu0
        %v1359 = vadd.f32 %v1273, %v1355
        %v1360 = vadd.f32 %v1274, %v1357
        %s1361 = scalar_lea.vmem %s2, 96
        %v1362 = vld [vmem:[%s1361] sm:$0xff]
        %1363 = vrot.lane.b32.xlu0 %v319, 112
        %v1364 = vpop.permute.xlu0 %1363
        %1365 = vrot.lane.b32.xlu0 %v320, 112
        %v1366 = vpop.permute.xlu0 %1365
        %vm1367 = vcmask 916480
        %v1368 = vsel %vm1367, %v1364, %v1366
        %v1372 = vsel %vm337, %v1362, 0
        %1374 = vmatprep.subr.mxu0 %v1366
        %1375 = vmatpush1.msra.mxu0 %v1368
        %1376 = vmatprep.subr.mxu0 0.0
        %1377 = vmatpush1.msra.mxu0 0.0
        %1378 = vmatprep.subr.mxu0 0.0
        %1379 = vmatpush1.msra.mxu0 0.0
        %1380 = vmatprep.subr.mxu0 0.0
        %1381 = vmatpush1.msra.mxu0 0.0
        %1382 = vmatprep.subr.mxu0 0.0
        %1383 = vmatpush1.msra.mxu0 0.0
        %1384 = vmatprep.subr.mxu0 0.0
        %1385 = vmatpush1.msra.mxu0 0.0
        %1386 = vmatprep.subr.mxu0 0.0
        %1387 = vmatpush1.msra.mxu0 0.0
        %1388 = vmatprep.subr.mxu0 0.0
        %1389 = vmatpush1.msra.mxu0 0.0
        %1390 = vmatprep.subr.mxu0 0.0
        %1391 = vmatpush1.msra.mxu0 0.0
        %1392 = vmatprep.subr.mxu0 0.0
        %1393 = vmatpush1.msra.mxu0 0.0
        %1394 = vmatprep.subr.mxu0 0.0
        %1395 = vmatpush1.msra.mxu0 0.0
        %1396 = vmatprep.subr.mxu0 0.0
        %1397 = vmatpush1.msra.mxu0 0.0
        %1398 = vmatprep.subr.mxu0 0.0
        %1399 = vmatpush1.msra.mxu0 0.0
        %1400 = vmatprep.subr.mxu0 0.0
        %1401 = vmatpush1.msra.mxu0 0.0
        %1402 = vmatprep.subr.mxu0 0.0
        %1403 = vmatpush1.msra.mxu0 0.0
        %1404 = vmatprep.subr.mxu0 0.0
        %1405 = vmatpush1.msra.mxu0 0.0
        %1406 = vmatprep.subr.mxu0 0.0
        %1407 = vmatpush1.msra.mxu0 0.0
        %1408 = vmatprep.subr.mxu0 0.0
        %1409 = vmatpush1.msra.mxu0 0.0
        %1410 = vmatprep.subr.mxu0 0.0
        %1411 = vmatpush1.msra.mxu0 0.0
        %1412 = vmatprep.subr.mxu0 0.0
        %1413 = vmatpush1.msra.mxu0 0.0
        %1414 = vmatprep.subr.mxu0 0.0
        %1415 = vmatpush1.msra.mxu0 0.0
        %1416 = vmatprep.subr.mxu0 0.0
        %1417 = vmatpush1.msra.mxu0 0.0
        %1418 = vmatprep.subr.mxu0 0.0
        %1419 = vmatpush1.msra.mxu0 0.0
        %1420 = vmatprep.subr.mxu0 0.0
        %1421 = vmatpush1.msra.mxu0 0.0
        %1422 = vmatprep.subr.mxu0 0.0
        %1423 = vmatpush1.msra.mxu0 0.0
        %1424 = vmatprep.subr.mxu0 0.0
        %1425 = vmatpush1.msra.mxu0 0.0
        %1426 = vmatprep.subr.mxu0 0.0
        %1427 = vmatpush1.msra.mxu0 0.0
        %1428 = vmatprep.subr.mxu0 0.0
        %1429 = vmatpush1.msra.mxu0 0.0
        %1430 = vmatprep.subr.mxu0 0.0
        %1431 = vmatpush1.msra.mxu0 0.0
        %1432 = vmatprep.subr.mxu0 0.0
        %1433 = vmatpush1.msra.mxu0 0.0
        %1434 = vmatprep.subr.mxu0 0.0
        %1435 = vmatpush1.msra.mxu0 0.0
        %1436 = vmatprep.subr.mxu0 0.0
        %1437 = vmatpush1.msra.mxu0 0.0
        %1438 = vmatprep.mubr.f32.mxu0 0.0
        %1439 = vmatmul.mubr.f32.gmra.mrb[0].mxu0 %v1372
        %v1440 = vpop.f32.mrb[0].mxu0
        %v1441 = vadd.f32 0.0, %v1440
        %v1442 = vpop.f32.mrb[0].mxu0
        %v1443 = vadd.f32 0.0, %v1442
        %1444 = vdwg.mxu0
        %v1445 = vadd.f32 %v1359, %v1441
        %v1446 = vadd.f32 %v1360, %v1443
        %s1447 = scalar_lea.vmem %s2, 104
        %v1448 = vld [vmem:[%s1447] sm:$0xff]
        %1449 = vrot.lane.b32.xlu0 %v319, 111
        %v1450 = vpop.permute.xlu0 %1449
        %1451 = vrot.lane.b32.xlu0 %v320, 111
        %v1452 = vpop.permute.xlu0 %1451
        %vm1453 = vcmask 908288
        %v1454 = vsel %vm1453, %v1450, %v1452
        %v1458 = vsel %vm337, %v1448, 0
        %1460 = vmatprep.subr.mxu0 %v1452
        %1461 = vmatpush1.msra.mxu0 %v1454
        %1462 = vmatprep.subr.mxu0 0.0
        %1463 = vmatpush1.msra.mxu0 0.0
        %1464 = vmatprep.subr.mxu0 0.0
        %1465 = vmatpush1.msra.mxu0 0.0
        %1466 = vmatprep.subr.mxu0 0.0
        %1467 = vmatpush1.msra.mxu0 0.0
        %1468 = vmatprep.subr.mxu0 0.0
        %1469 = vmatpush1.msra.mxu0 0.0
        %1470 = vmatprep.subr.mxu0 0.0
        %1471 = vmatpush1.msra.mxu0 0.0
        %1472 = vmatprep.subr.mxu0 0.0
        %1473 = vmatpush1.msra.mxu0 0.0
        %1474 = vmatprep.subr.mxu0 0.0
        %1475 = vmatpush1.msra.mxu0 0.0
        %1476 = vmatprep.subr.mxu0 0.0
        %1477 = vmatpush1.msra.mxu0 0.0
        %1478 = vmatprep.subr.mxu0 0.0
        %1479 = vmatpush1.msra.mxu0 0.0
        %1480 = vmatprep.subr.mxu0 0.0
        %1481 = vmatpush1.msra.mxu0 0.0
        %1482 = vmatprep.subr.mxu0 0.0
        %1483 = vmatpush1.msra.mxu0 0.0
        %1484 = vmatprep.subr.mxu0 0.0
        %1485 = vmatpush1.msra.mxu0 0.0
        %1486 = vmatprep.subr.mxu0 0.0
        %1487 = vmatpush1.msra.mxu0 0.0
        %1488 = vmatprep.subr.mxu0 0.0
        %1489 = vmatpush1.msra.mxu0 0.0
        %1490 = vmatprep.subr.mxu0 0.0
        %1491 = vmatpush1.msra.mxu0 0.0
        %1492 = vmatprep.subr.mxu0 0.0
        %1493 = vmatpush1.msra.mxu0 0.0
        %1494 = vmatprep.subr.mxu0 0.0
        %1495 = vmatpush1.msra.mxu0 0.0
        %1496 = vmatprep.subr.mxu0 0.0
        %1497 = vmatpush1.msra.mxu0 0.0
        %1498 = vmatprep.subr.mxu0 0.0
        %1499 = vmatpush1.msra.mxu0 0.0
        %1500 = vmatprep.subr.mxu0 0.0
        %1501 = vmatpush1.msra.mxu0 0.0
        %1502 = vmatprep.subr.mxu0 0.0
        %1503 = vmatpush1.msra.mxu0 0.0
        %1504 = vmatprep.subr.mxu0 0.0
        %1505 = vmatpush1.msra.mxu0 0.0
        %1506 = vmatprep.subr.mxu0 0.0
        %1507 = vmatpush1.msra.mxu0 0.0
        %1508 = vmatprep.subr.mxu0 0.0
        %1509 = vmatpush1.msra.mxu0 0.0
        %1510 = vmatprep.subr.mxu0 0.0
        %1511 = vmatpush1.msra.mxu0 0.0
        %1512 = vmatprep.subr.mxu0 0.0
        %1513 = vmatpush1.msra.mxu0 0.0
        %1514 = vmatprep.subr.mxu0 0.0
        %1515 = vmatpush1.msra.mxu0 0.0
        %1516 = vmatprep.subr.mxu0 0.0
        %1517 = vmatpush1.msra.mxu0 0.0
        %1518 = vmatprep.subr.mxu0 0.0
        %1519 = vmatpush1.msra.mxu0 0.0
        %1520 = vmatprep.subr.mxu0 0.0
        %1521 = vmatpush1.msra.mxu0 0.0
        %1522 = vmatprep.subr.mxu0 0.0
        %1523 = vmatpush1.msra.mxu0 0.0
        %1524 = vmatprep.mubr.f32.mxu0 0.0
        %1525 = vmatmul.mubr.f32.gmra.mrb[0].mxu0 %v1458
        %v1526 = vpop.f32.mrb[0].mxu0
        %v1527 = vadd.f32 0.0, %v1526
        %v1528 = vpop.f32.mrb[0].mxu0
        %v1529 = vadd.f32 0.0, %v1528
        %1530 = vdwg.mxu0
        %v1531 = vadd.f32 %v1445, %v1527
        %v1532 = vadd.f32 %v1446, %v1529
        %s1533 = scalar_lea.vmem %s2, 112
        %v1534 = vld [vmem:[%s1533] sm:$0xff]
        %1535 = vrot.lane.b32.xlu0 %v319, 110
        %v1536 = vpop.permute.xlu0 %1535
        %1537 = vrot.lane.b32.xlu0 %v320, 110
        %v1538 = vpop.permute.xlu0 %1537
        %vm1539 = vcmask 900096
        %v1540 = vsel %vm1539, %v1536, %v1538
        %v1544 = vsel %vm337, %v1534, 0
        %1546 = vmatprep.subr.mxu0 %v1538
        %1547 = vmatpush1.msra.mxu0 %v1540
        %1548 = vmatprep.subr.mxu0 0.0
        %1549 = vmatpush1.msra.mxu0 0.0
        %1550 = vmatprep.subr.mxu0 0.0
        %1551 = vmatpush1.msra.mxu0 0.0
        %1552 = vmatprep.subr.mxu0 0.0
        %1553 = vmatpush1.msra.mxu0 0.0
        %1554 = vmatprep.subr.mxu0 0.0
        %1555 = vmatpush1.msra.mxu0 0.0
        %1556 = vmatprep.subr.mxu0 0.0
        %1557 = vmatpush1.msra.mxu0 0.0
        %1558 = vmatprep.subr.mxu0 0.0
        %1559 = vmatpush1.msra.mxu0 0.0
        %1560 = vmatprep.subr.mxu0 0.0
        %1561 = vmatpush1.msra.mxu0 0.0
        %1562 = vmatprep.subr.mxu0 0.0
        %1563 = vmatpush1.msra.mxu0 0.0
        %1564 = vmatprep.subr.mxu0 0.0
        %1565 = vmatpush1.msra.mxu0 0.0
        %1566 = vmatprep.subr.mxu0 0.0
        %1567 = vmatpush1.msra.mxu0 0.0
        %1568 = vmatprep.subr.mxu0 0.0
        %1569 = vmatpush1.msra.mxu0 0.0
        %1570 = vmatprep.subr.mxu0 0.0
        %1571 = vmatpush1.msra.mxu0 0.0
        %1572 = vmatprep.subr.mxu0 0.0
        %1573 = vmatpush1.msra.mxu0 0.0
        %1574 = vmatprep.subr.mxu0 0.0
        %1575 = vmatpush1.msra.mxu0 0.0
        %1576 = vmatprep.subr.mxu0 0.0
        %1577 = vmatpush1.msra.mxu0 0.0
        %1578 = vmatprep.subr.mxu0 0.0
        %1579 = vmatpush1.msra.mxu0 0.0
        %1580 = vmatprep.subr.mxu0 0.0
        %1581 = vmatpush1.msra.mxu0 0.0
        %1582 = vmatprep.subr.mxu0 0.0
        %1583 = vmatpush1.msra.mxu0 0.0
        %1584 = vmatprep.subr.mxu0 0.0
        %1585 = vmatpush1.msra.mxu0 0.0
        %1586 = vmatprep.subr.mxu0 0.0
        %1587 = vmatpush1.msra.mxu0 0.0
        %1588 = vmatprep.subr.mxu0 0.0
        %1589 = vmatpush1.msra.mxu0 0.0
        %1590 = vmatprep.subr.mxu0 0.0
        %1591 = vmatpush1.msra.mxu0 0.0
        %1592 = vmatprep.subr.mxu0 0.0
        %1593 = vmatpush1.msra.mxu0 0.0
        %1594 = vmatprep.subr.mxu0 0.0
        %1595 = vmatpush1.msra.mxu0 0.0
        %1596 = vmatprep.subr.mxu0 0.0
        %1597 = vmatpush1.msra.mxu0 0.0
        %1598 = vmatprep.subr.mxu0 0.0
        %1599 = vmatpush1.msra.mxu0 0.0
        %1600 = vmatprep.subr.mxu0 0.0
        %1601 = vmatpush1.msra.mxu0 0.0
        %1602 = vmatprep.subr.mxu0 0.0
        %1603 = vmatpush1.msra.mxu0 0.0
        %1604 = vmatprep.subr.mxu0 0.0
        %1605 = vmatpush1.msra.mxu0 0.0
        %1606 = vmatprep.subr.mxu0 0.0
        %1607 = vmatpush1.msra.mxu0 0.0
        %1608 = vmatprep.subr.mxu0 0.0
        %1609 = vmatpush1.msra.mxu0 0.0
        %1610 = vmatprep.mubr.f32.mxu0 0.0
        %1611 = vmatmul.mubr.f32.gmra.mrb[0].mxu0 %v1544
        %v1612 = vpop.f32.mrb[0].mxu0
        %v1613 = vadd.f32 0.0, %v1612
        %v1614 = vpop.f32.mrb[0].mxu0
        %v1615 = vadd.f32 0.0, %v1614
        %1616 = vdwg.mxu0
        %v1617 = vadd.f32 %v1531, %v1613
        %v1618 = vadd.f32 %v1532, %v1615
        %s1619 = scalar_lea.vmem %s2, 120
        %v1620 = vld [vmem:[%s1619] sm:$0xff]
        %1621 = vrot.lane.b32.xlu0 %v319, 99
        %v1622 = vpop.permute.xlu0 %1621
        %1623 = vrot.lane.b32.xlu0 %v320, 99
        %v1624 = vpop.permute.xlu0 %1623
        %vm1625 = vcmask 809984
        %v1626 = vsel %vm1625, %v1622, %v1624
        %v1630 = vsel %vm337, %v1620, 0
        %1632 = vmatprep.subr.mxu0 %v1624
        %1633 = vmatpush1.msra.mxu0 %v1626
        %1634 = vmatprep.subr.mxu0 0.0
        %1635 = vmatpush1.msra.mxu0 0.0
        %1636 = vmatprep.subr.mxu0 0.0
        %1637 = vmatpush1.msra.mxu0 0.0
        %1638 = vmatprep.subr.mxu0 0.0
        %1639 = vmatpush1.msra.mxu0 0.0
        %1640 = vmatprep.subr.mxu0 0.0
        %1641 = vmatpush1.msra.mxu0 0.0
        %1642 = vmatprep.subr.mxu0 0.0
        %1643 = vmatpush1.msra.mxu0 0.0
        %1644 = vmatprep.subr.mxu0 0.0
        %1645 = vmatpush1.msra.mxu0 0.0
        %1646 = vmatprep.subr.mxu0 0.0
        %1647 = vmatpush1.msra.mxu0 0.0
        %1648 = vmatprep.subr.mxu0 0.0
        %1649 = vmatpush1.msra.mxu0 0.0
        %1650 = vmatprep.subr.mxu0 0.0
        %1651 = vmatpush1.msra.mxu0 0.0
        %1652 = vmatprep.subr.mxu0 0.0
        %1653 = vmatpush1.msra.mxu0 0.0
        %1654 = vmatprep.subr.mxu0 0.0
        %1655 = vmatpush1.msra.mxu0 0.0
        %1656 = vmatprep.subr.mxu0 0.0
        %1657 = vmatpush1.msra.mxu0 0.0
        %1658 = vmatprep.subr.mxu0 0.0
        %1659 = vmatpush1.msra.mxu0 0.0
        %1660 = vmatprep.subr.mxu0 0.0
        %1661 = vmatpush1.msra.mxu0 0.0
        %1662 = vmatprep.subr.mxu0 0.0
        %1663 = vmatpush1.msra.mxu0 0.0
        %1664 = vmatprep.subr.mxu0 0.0
        %1665 = vmatpush1.msra.mxu0 0.0
        %1666 = vmatprep.subr.mxu0 0.0
        %1667 = vmatpush1.msra.mxu0 0.0
        %1668 = vmatprep.subr.mxu0 0.0
        %1669 = vmatpush1.msra.mxu0 0.0
        %1670 = vmatprep.subr.mxu0 0.0
        %1671 = vmatpush1.msra.mxu0 0.0
        %1672 = vmatprep.subr.mxu0 0.0
        %1673 = vmatpush1.msra.mxu0 0.0
        %1674 = vmatprep.subr.mxu0 0.0
        %1675 = vmatpush1.msra.mxu0 0.0
        %1676 = vmatprep.subr.mxu0 0.0
        %1677 = vmatpush1.msra.mxu0 0.0
        %1678 = vmatprep.subr.mxu0 0.0
        %1679 = vmatpush1.msra.mxu0 0.0
        %1680 = vmatprep.subr.mxu0 0.0
        %1681 = vmatpush1.msra.mxu0 0.0
        %1682 = vmatprep.subr.mxu0 0.0
        %1683 = vmatpush1.msra.mxu0 0.0
        %1684 = vmatprep.subr.mxu0 0.0
        %1685 = vmatpush1.msra.mxu0 0.0
        %1686 = vmatprep.subr.mxu0 0.0
        %1687 = vmatpush1.msra.mxu0 0.0
        %1688 = vmatprep.subr.mxu0 0.0
        %1689 = vmatpush1.msra.mxu0 0.0
        %1690 = vmatprep.subr.mxu0 0.0
        %1691 = vmatpush1.msra.mxu0 0.0
        %1692 = vmatprep.subr.mxu0 0.0
        %1693 = vmatpush1.msra.mxu0 0.0
        %1694 = vmatprep.subr.mxu0 0.0
        %1695 = vmatpush1.msra.mxu0 0.0
        %1696 = vmatprep.mubr.f32.mxu0 0.0
        %1697 = vmatmul.mubr.f32.gmra.mrb[0].mxu0 %v1630
        %v1698 = vpop.f32.mrb[0].mxu0
        %v1699 = vadd.f32 0.0, %v1698
        %v1700 = vpop.f32.mrb[0].mxu0
        %v1701 = vadd.f32 0.0, %v1700
        %1702 = vdwg.mxu0
        %v1703 = vadd.f32 %v1617, %v1699
        %v1704 = vadd.f32 %v1618, %v1701
        %s1705 = scalar_lea.vmem %s2, 128
        %v1706 = vld [vmem:[%s1705] sm:$0xff]
        %1707 = vrot.lane.b32.xlu0 %v319, 98
        %v1708 = vpop.permute.xlu0 %1707
        %1709 = vrot.lane.b32.xlu0 %v320, 98
        %v1710 = vpop.permute.xlu0 %1709
        %vm1711 = vcmask 801792
        %v1712 = vsel %vm1711, %v1708, %v1710
        %v1716 = vsel %vm337, %v1706, 0
        %1718 = vmatprep.subr.mxu0 %v1710
        %1719 = vmatpush1.msra.mxu0 %v1712
        %1720 = vmatprep.subr.mxu0 0.0
        %1721 = vmatpush1.msra.mxu0 0.0
        %1722 = vmatprep.subr.mxu0 0.0
        %1723 = vmatpush1.msra.mxu0 0.0
        %1724 = vmatprep.subr.mxu0 0.0
        %1725 = vmatpush1.msra.mxu0 0.0
        %1726 = vmatprep.subr.mxu0 0.0
        %1727 = vmatpush1.msra.mxu0 0.0
        %1728 = vmatprep.subr.mxu0 0.0
        %1729 = vmatpush1.msra.mxu0 0.0
        %1730 = vmatprep.subr.mxu0 0.0
        %1731 = vmatpush1.msra.mxu0 0.0
        %1732 = vmatprep.subr.mxu0 0.0
        %1733 = vmatpush1.msra.mxu0 0.0
        %1734 = vmatprep.subr.mxu0 0.0
        %1735 = vmatpush1.msra.mxu0 0.0
        %1736 = vmatprep.subr.mxu0 0.0
        %1737 = vmatpush1.msra.mxu0 0.0
        %1738 = vmatprep.subr.mxu0 0.0
        %1739 = vmatpush1.msra.mxu0 0.0
        %1740 = vmatprep.subr.mxu0 0.0
        %1741 = vmatpush1.msra.mxu0 0.0
        %1742 = vmatprep.subr.mxu0 0.0
        %1743 = vmatpush1.msra.mxu0 0.0
        %1744 = vmatprep.subr.mxu0 0.0
        %1745 = vmatpush1.msra.mxu0 0.0
        %1746 = vmatprep.subr.mxu0 0.0
        %1747 = vmatpush1.msra.mxu0 0.0
        %1748 = vmatprep.subr.mxu0 0.0
        %1749 = vmatpush1.msra.mxu0 0.0
        %1750 = vmatprep.subr.mxu0 0.0
        %1751 = vmatpush1.msra.mxu0 0.0
        %1752 = vmatprep.subr.mxu0 0.0
        %1753 = vmatpush1.msra.mxu0 0.0
        %1754 = vmatprep.subr.mxu0 0.0
        %1755 = vmatpush1.msra.mxu0 0.0
        %1756 = vmatprep.subr.mxu0 0.0
        %1757 = vmatpush1.msra.mxu0 0.0
        %1758 = vmatprep.subr.mxu0 0.0
        %1759 = vmatpush1.msra.mxu0 0.0
        %1760 = vmatprep.subr.mxu0 0.0
        %1761 = vmatpush1.msra.mxu0 0.0
        %1762 = vmatprep.subr.mxu0 0.0
        %1763 = vmatpush1.msra.mxu0 0.0
        %1764 = vmatprep.subr.mxu0 0.0
        %1765 = vmatpush1.msra.mxu0 0.0
        %1766 = vmatprep.subr.mxu0 0.0
        %1767 = vmatpush1.msra.mxu0 0.0
        %1768 = vmatprep.subr.mxu0 0.0
        %1769 = vmatpush1.msra.mxu0 0.0
        %1770 = vmatprep.subr.mxu0 0.0
        %1771 = vmatpush1.msra.mxu0 0.0
        %1772 = vmatprep.subr.mxu0 0.0
        %1773 = vmatpush1.msra.mxu0 0.0
        %1774 = vmatprep.subr.mxu0 0.0
        %1775 = vmatpush1.msra.mxu0 0.0
        %1776 = vmatprep.subr.mxu0 0.0
        %1777 = vmatpush1.msra.mxu0 0.0
        %1778 = vmatprep.subr.mxu0 0.0
        %1779 = vmatpush1.msra.mxu0 0.0
        %1780 = vmatprep.subr.mxu0 0.0
        %1781 = vmatpush1.msra.mxu0 0.0
        %1782 = vmatprep.mubr.f32.mxu0 0.0
        %1783 = vmatmul.mubr.f32.gmra.mrb[0].mxu0 %v1716
        %v1784 = vpop.f32.mrb[0].mxu0
        %v1785 = vadd.f32 0.0, %v1784
        %v1786 = vpop.f32.mrb[0].mxu0
        %v1787 = vadd.f32 0.0, %v1786
        %1788 = vdwg.mxu0
        %v1789 = vadd.f32 %v1703, %v1785
        %v1790 = vadd.f32 %v1704, %v1787
        %s1791 = scalar_lea.vmem %s2, 136
        %v1792 = vld [vmem:[%s1791] sm:$0xff]
        %1793 = vrot.lane.b32.xlu0 %v319, 97
        %v1794 = vpop.permute.xlu0 %1793
        %1795 = vrot.lane.b32.xlu0 %v320, 97
        %v1796 = vpop.permute.xlu0 %1795
        %v1797 = vsel %vm315, %v1794, %v1796
        %v1801 = vsel %vm337, %v1792, 0
        %1803 = vmatprep.subr.mxu0 %v1796
        %1804 = vmatpush1.msra.mxu0 %v1797
        %1805 = vmatprep.subr.mxu0 0.0
        %1806 = vmatpush1.msra.mxu0 0.0
        %1807 = vmatprep.subr.mxu0 0.0
        %1808 = vmatpush1.msra.mxu0 0.0
        %1809 = vmatprep.subr.mxu0 0.0
        %1810 = vmatpush1.msra.mxu0 0.0
        %1811 = vmatprep.subr.mxu0 0.0
        %1812 = vmatpush1.msra.mxu0 0.0
        %1813 = vmatprep.subr.mxu0 0.0
        %1814 = vmatpush1.msra.mxu0 0.0
        %1815 = vmatprep.subr.mxu0 0.0
        %1816 = vmatpush1.msra.mxu0 0.0
        %1817 = vmatprep.subr.mxu0 0.0
        %1818 = vmatpush1.msra.mxu0 0.0
        %1819 = vmatprep.subr.mxu0 0.0
        %1820 = vmatpush1.msra.mxu0 0.0
        %1821 = vmatprep.subr.mxu0 0.0
        %1822 = vmatpush1.msra.mxu0 0.0
        %1823 = vmatprep.subr.mxu0 0.0
        %1824 = vmatpush1.msra.mxu0 0.0
        %1825 = vmatprep.subr.mxu0 0.0
        %1826 = vmatpush1.msra.mxu0 0.0
        %1827 = vmatprep.subr.mxu0 0.0
        %1828 = vmatpush1.msra.mxu0 0.0
        %1829 = vmatprep.subr.mxu0 0.0
        %1830 = vmatpush1.msra.mxu0 0.0
        %1831 = vmatprep.subr.mxu0 0.0
        %1832 = vmatpush1.msra.mxu0 0.0
        %1833 = vmatprep.subr.mxu0 0.0
        %1834 = vmatpush1.msra.mxu0 0.0
        %1835 = vmatprep.subr.mxu0 0.0
        %1836 = vmatpush1.msra.mxu0 0.0
        %1837 = vmatprep.subr.mxu0 0.0
        %1838 = vmatpush1.msra.mxu0 0.0
        %1839 = vmatprep.subr.mxu0 0.0
        %1840 = vmatpush1.msra.mxu0 0.0
        %1841 = vmatprep.subr.mxu0 0.0
        %1842 = vmatpush1.msra.mxu0 0.0
        %1843 = vmatprep.subr.mxu0 0.0
        %1844 = vmatpush1.msra.mxu0 0.0
        %1845 = vmatprep.subr.mxu0 0.0
        %1846 = vmatpush1.msra.mxu0 0.0
        %1847 = vmatprep.subr.mxu0 0.0
        %1848 = vmatpush1.msra.mxu0 0.0
        %1849 = vmatprep.subr.mxu0 0.0
        %1850 = vmatpush1.msra.mxu0 0.0
        %1851 = vmatprep.subr.mxu0 0.0
        %1852 = vmatpush1.msra.mxu0 0.0
        %1853 = vmatprep.subr.mxu0 0.0
        %1854 = vmatpush1.msra.mxu0 0.0
        %1855 = vmatprep.subr.mxu0 0.0
        %1856 = vmatpush1.msra.mxu0 0.0
        %1857 = vmatprep.subr.mxu0 0.0
        %1858 = vmatpush1.msra.mxu0 0.0
        %1859 = vmatprep.subr.mxu0 0.0
        %1860 = vmatpush1.msra.mxu0 0.0
        %1861 = vmatprep.subr.mxu0 0.0
        %1862 = vmatpush1.msra.mxu0 0.0
        %1863 = vmatprep.subr.mxu0 0.0
        %1864 = vmatpush1.msra.mxu0 0.0
        %1865 = vmatprep.subr.mxu0 0.0
        %1866 = vmatpush1.msra.mxu0 0.0
        %1867 = vmatprep.mubr.f32.mxu0 0.0
        %1868 = vmatmul.mubr.f32.gmra.mrb[0].mxu0 %v1801
        %v1869 = vpop.f32.mrb[0].mxu0
        %v1870 = vadd.f32 0.0, %v1869
        %v1871 = vpop.f32.mrb[0].mxu0
        %v1872 = vadd.f32 0.0, %v1871
        %1873 = vdwg.mxu0
        %v1874 = vadd.f32 %v1789, %v1870
        %v1875 = vadd.f32 %v1790, %v1872
        %s1876 = scalar_lea.vmem %s2, 144
        %v1877 = vld [vmem:[%s1876] sm:$0xff]
        %v1878 = vld [vmem:[#allocation2 + $0x8] sm:$0xff]
        %v1879 = vld [vmem:[#allocation2 + $0x10] sm:$0xff]
        %v1880 = vld [vmem:[#allocation2 + $0x18] sm:$0xff]
        %1884 = vrot.lane.b32.xlu0 %v1878, 96
        %v1885 = vpop.permute.xlu0 %1884
        %1886 = vrot.lane.b32.xlu0 %v1879, 96
        %v1887 = vpop.permute.xlu0 %1886
        %1888 = vrot.lane.b32.xlu0 %v1880, 96
        %v1889 = vpop.permute.xlu0 %1888
        %vm1890 = vcmask 785408
        %v1891 = vsel %vm1890, %v1885, %v1887
        %v1892 = vsel %vm1890, %v1887, %v1889
        %v1896 = vsel %vm337, %v1877, 0
        %1898 = vmatprep.subr.mxu0 %v1892
        %1899 = vmatpush1.msra.mxu0 %v1891
        %1900 = vmatprep.subr.mxu0 0.0
        %1901 = vmatpush1.msra.mxu0 0.0
        %1902 = vmatprep.subr.mxu0 0.0
        %1903 = vmatpush1.msra.mxu0 0.0
        %1904 = vmatprep.subr.mxu0 0.0
        %1905 = vmatpush1.msra.mxu0 0.0
        %1906 = vmatprep.subr.mxu0 0.0
        %1907 = vmatpush1.msra.mxu0 0.0
        %1908 = vmatprep.subr.mxu0 0.0
        %1909 = vmatpush1.msra.mxu0 0.0
        %1910 = vmatprep.subr.mxu0 0.0
        %1911 = vmatpush1.msra.mxu0 0.0
        %1912 = vmatprep.subr.mxu0 0.0
        %1913 = vmatpush1.msra.mxu0 0.0
        %1914 = vmatprep.subr.mxu0 0.0
        %1915 = vmatpush1.msra.mxu0 0.0
        %1916 = vmatprep.subr.mxu0 0.0
        %1917 = vmatpush1.msra.mxu0 0.0
        %1918 = vmatprep.subr.mxu0 0.0
        %1919 = vmatpush1.msra.mxu0 0.0
        %1920 = vmatprep.subr.mxu0 0.0
        %1921 = vmatpush1.msra.mxu0 0.0
        %1922 = vmatprep.subr.mxu0 0.0
        %1923 = vmatpush1.msra.mxu0 0.0
        %1924 = vmatprep.subr.mxu0 0.0
        %1925 = vmatpush1.msra.mxu0 0.0
        %1926 = vmatprep.subr.mxu0 0.0
        %1927 = vmatpush1.msra.mxu0 0.0
        %1928 = vmatprep.subr.mxu0 0.0
        %1929 = vmatpush1.msra.mxu0 0.0
        %1930 = vmatprep.subr.mxu0 0.0
        %1931 = vmatpush1.msra.mxu0 0.0
        %1932 = vmatprep.subr.mxu0 0.0
        %1933 = vmatpush1.msra.mxu0 0.0
        %1934 = vmatprep.subr.mxu0 0.0
        %1935 = vmatpush1.msra.mxu0 0.0
        %1936 = vmatprep.subr.mxu0 0.0
        %1937 = vmatpush1.msra.mxu0 0.0
        %1938 = vmatprep.subr.mxu0 0.0
        %1939 = vmatpush1.msra.mxu0 0.0
        %1940 = vmatprep.subr.mxu0 0.0
        %1941 = vmatpush1.msra.mxu0 0.0
        %1942 = vmatprep.subr.mxu0 0.0
        %1943 = vmatpush1.msra.mxu0 0.0
        %1944 = vmatprep.subr.mxu0 0.0
        %1945 = vmatpush1.msra.mxu0 0.0
        %1946 = vmatprep.subr.mxu0 0.0
        %1947 = vmatpush1.msra.mxu0 0.0
        %1948 = vmatprep.subr.mxu0 0.0
        %1949 = vmatpush1.msra.mxu0 0.0
        %1950 = vmatprep.subr.mxu0 0.0
        %1951 = vmatpush1.msra.mxu0 0.0
        %1952 = vmatprep.subr.mxu0 0.0
        %1953 = vmatpush1.msra.mxu0 0.0
        %1954 = vmatprep.subr.mxu0 0.0
        %1955 = vmatpush1.msra.mxu0 0.0
        %1956 = vmatprep.subr.mxu0 0.0
        %1957 = vmatpush1.msra.mxu0 0.0
        %1958 = vmatprep.subr.mxu0 0.0
        %1959 = vmatpush1.msra.mxu0 0.0
        %1960 = vmatprep.subr.mxu0 0.0
        %1961 = vmatpush1.msra.mxu0 0.0
        %1962 = vmatprep.mubr.f32.mxu0 0.0
        %1963 = vmatmul.mubr.f32.gmra.mrb[0].mxu0 %v1896
        %v1964 = vpop.f32.mrb[0].mxu0
        %v1965 = vadd.f32 0.0, %v1964
        %v1966 = vpop.f32.mrb[0].mxu0
        %v1967 = vadd.f32 0.0, %v1966
        %1968 = vdwg.mxu0
        %v1969 = vadd.f32 %v1874, %v1965
        %v1970 = vadd.f32 %v1875, %v1967
        %s1971 = scalar_lea.vmem %s2, 152
        %v1972 = vld [vmem:[%s1971] sm:$0xff]
        %1973 = vrot.lane.b32.xlu0 %v1878, 95
        %v1974 = vpop.permute.xlu0 %1973
        %1975 = vrot.lane.b32.xlu0 %v1879, 95
        %v1976 = vpop.permute.xlu0 %1975
        %1977 = vrot.lane.b32.xlu0 %v1880, 95
        %v1978 = vpop.permute.xlu0 %1977
        %vm1979 = vcmask 777216
        %v1980 = vsel %vm1979, %v1974, %v1976
        %v1981 = vsel %vm1979, %v1976, %v1978
        %v1985 = vsel %vm337, %v1972, 0
        %1987 = vmatprep.subr.mxu0 %v1981
        %1988 = vmatpush1.msra.mxu0 %v1980
        %1989 = vmatprep.subr.mxu0 0.0
        %1990 = vmatpush1.msra.mxu0 0.0
        %1991 = vmatprep.subr.mxu0 0.0
        %1992 = vmatpush1.msra.mxu0 0.0
        %1993 = vmatprep.subr.mxu0 0.0
        %1994 = vmatpush1.msra.mxu0 0.0
        %1995 = vmatprep.subr.mxu0 0.0
        %1996 = vmatpush1.msra.mxu0 0.0
        %1997 = vmatprep.subr.mxu0 0.0
        %1998 = vmatpush1.msra.mxu0 0.0
        %1999 = vmatprep.subr.mxu0 0.0
        %2000 = vmatpush1.msra.mxu0 0.0
        %2001 = vmatprep.subr.mxu0 0.0
        %2002 = vmatpush1.msra.mxu0 0.0
        %2003 = vmatprep.subr.mxu0 0.0
        %2004 = vmatpush1.msra.mxu0 0.0
        %2005 = vmatprep.subr.mxu0 0.0
        %2006 = vmatpush1.msra.mxu0 0.0
        %2007 = vmatprep.subr.mxu0 0.0
        %2008 = vmatpush1.msra.mxu0 0.0
        %2009 = vmatprep.subr.mxu0 0.0
        %2010 = vmatpush1.msra.mxu0 0.0
        %2011 = vmatprep.subr.mxu0 0.0
        %2012 = vmatpush1.msra.mxu0 0.0
        %2013 = vmatprep.subr.mxu0 0.0
        %2014 = vmatpush1.msra.mxu0 0.0
        %2015 = vmatprep.subr.mxu0 0.0
        %2016 = vmatpush1.msra.mxu0 0.0
        %2017 = vmatprep.subr.mxu0 0.0
        %2018 = vmatpush1.msra.mxu0 0.0
        %2019 = vmatprep.subr.mxu0 0.0
        %2020 = vmatpush1.msra.mxu0 0.0
        %2021 = vmatprep.subr.mxu0 0.0
        %2022 = vmatpush1.msra.mxu0 0.0
        %2023 = vmatprep.subr.mxu0 0.0
        %2024 = vmatpush1.msra.mxu0 0.0
        %2025 = vmatprep.subr.mxu0 0.0
        %2026 = vmatpush1.msra.mxu0 0.0
        %2027 = vmatprep.subr.mxu0 0.0
        %2028 = vmatpush1.msra.mxu0 0.0
        %2029 = vmatprep.subr.mxu0 0.0
        %2030 = vmatpush1.msra.mxu0 0.0
        %2031 = vmatprep.subr.mxu0 0.0
        %2032 = vmatpush1.msra.mxu0 0.0
        %2033 = vmatprep.subr.mxu0 0.0
        %2034 = vmatpush1.msra.mxu0 0.0
        %2035 = vmatprep.subr.mxu0 0.0
        %2036 = vmatpush1.msra.mxu0 0.0
        %2037 = vmatprep.subr.mxu0 0.0
        %2038 = vmatpush1.msra.mxu0 0.0
        %2039 = vmatprep.subr.mxu0 0.0
        %2040 = vmatpush1.msra.mxu0 0.0
        %2041 = vmatprep.subr.mxu0 0.0
        %2042 = vmatpush1.msra.mxu0 0.0
        %2043 = vmatprep.subr.mxu0 0.0
        %2044 = vmatpush1.msra.mxu0 0.0
        %2045 = vmatprep.subr.mxu0 0.0
        %2046 = vmatpush1.msra.mxu0 0.0
        %2047 = vmatprep.subr.mxu0 0.0
        %2048 = vmatpush1.msra.mxu0 0.0
        %2049 = vmatprep.subr.mxu0 0.0
        %2050 = vmatpush1.msra.mxu0 0.0
        %2051 = vmatprep.mubr.f32.mxu0 0.0
        %2052 = vmatmul.mubr.f32.gmra.mrb[0].mxu0 %v1985
        %v2053 = vpop.f32.mrb[0].mxu0
        %v2054 = vadd.f32 0.0, %v2053
        %v2055 = vpop.f32.mrb[0].mxu0
        %v2056 = vadd.f32 0.0, %v2055
        %2057 = vdwg.mxu0
        %v2058 = vadd.f32 %v1969, %v2054
        %v2059 = vadd.f32 %v1970, %v2056
        %s2060 = scalar_lea.vmem %s2, 160
        %v2061 = vld [vmem:[%s2060] sm:$0xff]
        %2062 = vrot.lane.b32.xlu0 %v1878, 84
        %v2063 = vpop.permute.xlu0 %2062
        %2064 = vrot.lane.b32.xlu0 %v1879, 84
        %v2065 = vpop.permute.xlu0 %2064
        %2066 = vrot.lane.b32.xlu0 %v1880, 84
        %v2067 = vpop.permute.xlu0 %2066
        %vm2068 = vcmask 687104
        %v2069 = vsel %vm2068, %v2063, %v2065
        %v2070 = vsel %vm2068, %v2065, %v2067
        %v2074 = vsel %vm337, %v2061, 0
        %2076 = vmatprep.subr.mxu0 %v2070
        %2077 = vmatpush1.msra.mxu0 %v2069
        %2078 = vmatprep.subr.mxu0 0.0
        %2079 = vmatpush1.msra.mxu0 0.0
        %2080 = vmatprep.subr.mxu0 0.0
        %2081 = vmatpush1.msra.mxu0 0.0
        %2082 = vmatprep.subr.mxu0 0.0
        %2083 = vmatpush1.msra.mxu0 0.0
        %2084 = vmatprep.subr.mxu0 0.0
        %2085 = vmatpush1.msra.mxu0 0.0
        %2086 = vmatprep.subr.mxu0 0.0
        %2087 = vmatpush1.msra.mxu0 0.0
        %2088 = vmatprep.subr.mxu0 0.0
        %2089 = vmatpush1.msra.mxu0 0.0
        %2090 = vmatprep.subr.mxu0 0.0
        %2091 = vmatpush1.msra.mxu0 0.0
        %2092 = vmatprep.subr.mxu0 0.0
        %2093 = vmatpush1.msra.mxu0 0.0
        %2094 = vmatprep.subr.mxu0 0.0
        %2095 = vmatpush1.msra.mxu0 0.0
        %2096 = vmatprep.subr.mxu0 0.0
        %2097 = vmatpush1.msra.mxu0 0.0
        %2098 = vmatprep.subr.mxu0 0.0
        %2099 = vmatpush1.msra.mxu0 0.0
        %2100 = vmatprep.subr.mxu0 0.0
        %2101 = vmatpush1.msra.mxu0 0.0
        %2102 = vmatprep.subr.mxu0 0.0
        %2103 = vmatpush1.msra.mxu0 0.0
        %2104 = vmatprep.subr.mxu0 0.0
        %2105 = vmatpush1.msra.mxu0 0.0
        %2106 = vmatprep.subr.mxu0 0.0
        %2107 = vmatpush1.msra.mxu0 0.0
        %2108 = vmatprep.subr.mxu0 0.0
        %2109 = vmatpush1.msra.mxu0 0.0
        %2110 = vmatprep.subr.mxu0 0.0
        %2111 = vmatpush1.msra.mxu0 0.0
        %2112 = vmatprep.subr.mxu0 0.0
        %2113 = vmatpush1.msra.mxu0 0.0
        %2114 = vmatprep.subr.mxu0 0.0
        %2115 = vmatpush1.msra.mxu0 0.0
        %2116 = vmatprep.subr.mxu0 0.0
        %2117 = vmatpush1.msra.mxu0 0.0
        %2118 = vmatprep.subr.mxu0 0.0
        %2119 = vmatpush1.msra.mxu0 0.0
        %2120 = vmatprep.subr.mxu0 0.0
        %2121 = vmatpush1.msra.mxu0 0.0
        %2122 = vmatprep.subr.mxu0 0.0
        %2123 = vmatpush1.msra.mxu0 0.0
        %2124 = vmatprep.subr.mxu0 0.0
        %2125 = vmatpush1.msra.mxu0 0.0
        %2126 = vmatprep.subr.mxu0 0.0
        %2127 = vmatpush1.msra.mxu0 0.0
        %2128 = vmatprep.subr.mxu0 0.0
        %2129 = vmatpush1.msra.mxu0 0.0
        %2130 = vmatprep.subr.mxu0 0.0
        %2131 = vmatpush1.msra.mxu0 0.0
        %2132 = vmatprep.subr.mxu0 0.0
        %2133 = vmatpush1.msra.mxu0 0.0
        %2134 = vmatprep.subr.mxu0 0.0
        %2135 = vmatpush1.msra.mxu0 0.0
        %2136 = vmatprep.subr.mxu0 0.0
        %2137 = vmatpush1.msra.mxu0 0.0
        %2138 = vmatprep.subr.mxu0 0.0
        %2139 = vmatpush1.msra.mxu0 0.0
        %2140 = vmatprep.mubr.f32.mxu0 0.0
        %2141 = vmatmul.mubr.f32.gmra.mrb[0].mxu0 %v2074
        %v2142 = vpop.f32.mrb[0].mxu0
        %v2143 = vadd.f32 0.0, %v2142
        %v2144 = vpop.f32.mrb[0].mxu0
        %v2145 = vadd.f32 0.0, %v2144
        %2146 = vdwg.mxu0
        %v2147 = vadd.f32 %v2058, %v2143
        %v2148 = vadd.f32 %v2059, %v2145
        %s2149 = scalar_lea.vmem %s2, 168
        %v2150 = vld [vmem:[%s2149] sm:$0xff]
        %2151 = vrot.lane.b32.xlu0 %v1878, 83
        %v2152 = vpop.permute.xlu0 %2151
        %2153 = vrot.lane.b32.xlu0 %v1879, 83
        %v2154 = vpop.permute.xlu0 %2153
        %2155 = vrot.lane.b32.xlu0 %v1880, 83
        %v2156 = vpop.permute.xlu0 %2155
        %vm2157 = vcmask 678912
        %v2158 = vsel %vm2157, %v2152, %v2154
        %v2159 = vsel %vm2157, %v2154, %v2156
        %v2163 = vsel %vm337, %v2150, 0
        %2165 = vmatprep.subr.mxu0 %v2159
        %2166 = vmatpush1.msra.mxu0 %v2158
        %2167 = vmatprep.subr.mxu0 0.0
        %2168 = vmatpush1.msra.mxu0 0.0
        %2169 = vmatprep.subr.mxu0 0.0
        %2170 = vmatpush1.msra.mxu0 0.0
        %2171 = vmatprep.subr.mxu0 0.0
        %2172 = vmatpush1.msra.mxu0 0.0
        %2173 = vmatprep.subr.mxu0 0.0
        %2174 = vmatpush1.msra.mxu0 0.0
        %2175 = vmatprep.subr.mxu0 0.0
        %2176 = vmatpush1.msra.mxu0 0.0
        %2177 = vmatprep.subr.mxu0 0.0
        %2178 = vmatpush1.msra.mxu0 0.0
        %2179 = vmatprep.subr.mxu0 0.0
        %2180 = vmatpush1.msra.mxu0 0.0
        %2181 = vmatprep.subr.mxu0 0.0
        %2182 = vmatpush1.msra.mxu0 0.0
        %2183 = vmatprep.subr.mxu0 0.0
        %2184 = vmatpush1.msra.mxu0 0.0
        %2185 = vmatprep.subr.mxu0 0.0
        %2186 = vmatpush1.msra.mxu0 0.0
        %2187 = vmatprep.subr.mxu0 0.0
        %2188 = vmatpush1.msra.mxu0 0.0
        %2189 = vmatprep.subr.mxu0 0.0
        %2190 = vmatpush1.msra.mxu0 0.0
        %2191 = vmatprep.subr.mxu0 0.0
        %2192 = vmatpush1.msra.mxu0 0.0
        %2193 = vmatprep.subr.mxu0 0.0
        %2194 = vmatpush1.msra.mxu0 0.0
        %2195 = vmatprep.subr.mxu0 0.0
        %2196 = vmatpush1.msra.mxu0 0.0
        %2197 = vmatprep.subr.mxu0 0.0
        %2198 = vmatpush1.msra.mxu0 0.0
        %2199 = vmatprep.subr.mxu0 0.0
        %2200 = vmatpush1.msra.mxu0 0.0
        %2201 = vmatprep.subr.mxu0 0.0
        %2202 = vmatpush1.msra.mxu0 0.0
        %2203 = vmatprep.subr.mxu0 0.0
        %2204 = vmatpush1.msra.mxu0 0.0
        %2205 = vmatprep.subr.mxu0 0.0
        %2206 = vmatpush1.msra.mxu0 0.0
        %2207 = vmatprep.subr.mxu0 0.0
        %2208 = vmatpush1.msra.mxu0 0.0
        %2209 = vmatprep.subr.mxu0 0.0
        %2210 = vmatpush1.msra.mxu0 0.0
        %2211 = vmatprep.subr.mxu0 0.0
        %2212 = vmatpush1.msra.mxu0 0.0
        %2213 = vmatprep.subr.mxu0 0.0
        %2214 = vmatpush1.msra.mxu0 0.0
        %2215 = vmatprep.subr.mxu0 0.0
        %2216 = vmatpush1.msra.mxu0 0.0
        %2217 = vmatprep.subr.mxu0 0.0
        %2218 = vmatpush1.msra.mxu0 0.0
        %2219 = vmatprep.subr.mxu0 0.0
        %2220 = vmatpush1.msra.mxu0 0.0
        %2221 = vmatprep.subr.mxu0 0.0
        %2222 = vmatpush1.msra.mxu0 0.0
        %2223 = vmatprep.subr.mxu0 0.0
        %2224 = vmatpush1.msra.mxu0 0.0
        %2225 = vmatprep.subr.mxu0 0.0
        %2226 = vmatpush1.msra.mxu0 0.0
        %2227 = vmatprep.subr.mxu0 0.0
        %2228 = vmatpush1.msra.mxu0 0.0
        %2229 = vmatprep.mubr.f32.mxu0 0.0
        %2230 = vmatmul.mubr.f32.gmra.mrb[0].mxu0 %v2163
        %v2231 = vpop.f32.mrb[0].mxu0
        %v2232 = vadd.f32 0.0, %v2231
        %v2233 = vpop.f32.mrb[0].mxu0
        %v2234 = vadd.f32 0.0, %v2233
        %2235 = vdwg.mxu0
        %v2236 = vadd.f32 %v2147, %v2232
        %v2237 = vadd.f32 %v2148, %v2234
        %s2238 = scalar_lea.vmem %s2, 176
        %v2239 = vld [vmem:[%s2238] sm:$0xff]
        %2240 = vrot.lane.b32.xlu0 %v1878, 82
        %v2241 = vpop.permute.xlu0 %2240
        %2242 = vrot.lane.b32.xlu0 %v1879, 82
        %v2243 = vpop.permute.xlu0 %2242
        %2244 = vrot.lane.b32.xlu0 %v1880, 82
        %v2245 = vpop.permute.xlu0 %2244
        %vm2246 = vcmask 670720
        %v2247 = vsel %vm2246, %v2241, %v2243
        %v2248 = vsel %vm2246, %v2243, %v2245
        %v2252 = vsel %vm337, %v2239, 0
        %2254 = vmatprep.subr.mxu0 %v2248
        %2255 = vmatpush1.msra.mxu0 %v2247
        %2256 = vmatprep.subr.mxu0 0.0
        %2257 = vmatpush1.msra.mxu0 0.0
        %2258 = vmatprep.subr.mxu0 0.0
        %2259 = vmatpush1.msra.mxu0 0.0
        %2260 = vmatprep.subr.mxu0 0.0
        %2261 = vmatpush1.msra.mxu0 0.0
        %2262 = vmatprep.subr.mxu0 0.0
        %2263 = vmatpush1.msra.mxu0 0.0
        %2264 = vmatprep.subr.mxu0 0.0
        %2265 = vmatpush1.msra.mxu0 0.0
        %2266 = vmatprep.subr.mxu0 0.0
        %2267 = vmatpush1.msra.mxu0 0.0
        %2268 = vmatprep.subr.mxu0 0.0
        %2269 = vmatpush1.msra.mxu0 0.0
        %2270 = vmatprep.subr.mxu0 0.0
        %2271 = vmatpush1.msra.mxu0 0.0
        %2272 = vmatprep.subr.mxu0 0.0
        %2273 = vmatpush1.msra.mxu0 0.0
        %2274 = vmatprep.subr.mxu0 0.0
        %2275 = vmatpush1.msra.mxu0 0.0
        %2276 = vmatprep.subr.mxu0 0.0
        %2277 = vmatpush1.msra.mxu0 0.0
        %2278 = vmatprep.subr.mxu0 0.0
        %2279 = vmatpush1.msra.mxu0 0.0
        %2280 = vmatprep.subr.mxu0 0.0
        %2281 = vmatpush1.msra.mxu0 0.0
        %2282 = vmatprep.subr.mxu0 0.0
        %2283 = vmatpush1.msra.mxu0 0.0
        %2284 = vmatprep.subr.mxu0 0.0
        %2285 = vmatpush1.msra.mxu0 0.0
        %2286 = vmatprep.subr.mxu0 0.0
        %2287 = vmatpush1.msra.mxu0 0.0
        %2288 = vmatprep.subr.mxu0 0.0
        %2289 = vmatpush1.msra.mxu0 0.0
        %2290 = vmatprep.subr.mxu0 0.0
        %2291 = vmatpush1.msra.mxu0 0.0
        %2292 = vmatprep.subr.mxu0 0.0
        %2293 = vmatpush1.msra.mxu0 0.0
        %2294 = vmatprep.subr.mxu0 0.0
        %2295 = vmatpush1.msra.mxu0 0.0
        %2296 = vmatprep.subr.mxu0 0.0
        %2297 = vmatpush1.msra.mxu0 0.0
        %2298 = vmatprep.subr.mxu0 0.0
        %2299 = vmatpush1.msra.mxu0 0.0
        %2300 = vmatprep.subr.mxu0 0.0
        %2301 = vmatpush1.msra.mxu0 0.0
        %2302 = vmatprep.subr.mxu0 0.0
        %2303 = vmatpush1.msra.mxu0 0.0
        %2304 = vmatprep.subr.mxu0 0.0
        %2305 = vmatpush1.msra.mxu0 0.0
        %2306 = vmatprep.subr.mxu0 0.0
        %2307 = vmatpush1.msra.mxu0 0.0
        %2308 = vmatprep.subr.mxu0 0.0
        %2309 = vmatpush1.msra.mxu0 0.0
        %2310 = vmatprep.subr.mxu0 0.0
        %2311 = vmatpush1.msra.mxu0 0.0
        %2312 = vmatprep.subr.mxu0 0.0
        %2313 = vmatpush1.msra.mxu0 0.0
        %2314 = vmatprep.subr.mxu0 0.0
        %2315 = vmatpush1.msra.mxu0 0.0
        %2316 = vmatprep.subr.mxu0 0.0
        %2317 = vmatpush1.msra.mxu0 0.0
        %2318 = vmatprep.mubr.f32.mxu0 0.0
        %2319 = vmatmul.mubr.f32.gmra.mrb[0].mxu0 %v2252
        %v2320 = vpop.f32.mrb[0].mxu0
        %v2321 = vadd.f32 0.0, %v2320
        %v2322 = vpop.f32.mrb[0].mxu0
        %v2323 = vadd.f32 0.0, %v2322
        %2324 = vdwg.mxu0
        %v2325 = vadd.f32 %v2236, %v2321
        %v2326 = vadd.f32 %v2237, %v2323
        %s2327 = scalar_lea.vmem %s2, 184
        %v2328 = vld [vmem:[%s2327] sm:$0xff]
        %2329 = vrot.lane.b32.xlu0 %v1878, 81
        %v2330 = vpop.permute.xlu0 %2329
        %2331 = vrot.lane.b32.xlu0 %v1879, 81
        %v2332 = vpop.permute.xlu0 %2331
        %2333 = vrot.lane.b32.xlu0 %v1880, 81
        %v2334 = vpop.permute.xlu0 %2333
        %vm2335 = vcmask 662528
        %v2336 = vsel %vm2335, %v2330, %v2332
        %v2337 = vsel %vm2335, %v2332, %v2334
        %v2341 = vsel %vm337, %v2328, 0
        %2343 = vmatprep.subr.mxu0 %v2337
        %2344 = vmatpush1.msra.mxu0 %v2336
        %2345 = vmatprep.subr.mxu0 0.0
        %2346 = vmatpush1.msra.mxu0 0.0
        %2347 = vmatprep.subr.mxu0 0.0
        %2348 = vmatpush1.msra.mxu0 0.0
        %2349 = vmatprep.subr.mxu0 0.0
        %2350 = vmatpush1.msra.mxu0 0.0
        %2351 = vmatprep.subr.mxu0 0.0
        %2352 = vmatpush1.msra.mxu0 0.0
        %2353 = vmatprep.subr.mxu0 0.0
        %2354 = vmatpush1.msra.mxu0 0.0
        %2355 = vmatprep.subr.mxu0 0.0
        %2356 = vmatpush1.msra.mxu0 0.0
        %2357 = vmatprep.subr.mxu0 0.0
        %2358 = vmatpush1.msra.mxu0 0.0
        %2359 = vmatprep.subr.mxu0 0.0
        %2360 = vmatpush1.msra.mxu0 0.0
        %2361 = vmatprep.subr.mxu0 0.0
        %2362 = vmatpush1.msra.mxu0 0.0
        %2363 = vmatprep.subr.mxu0 0.0
        %2364 = vmatpush1.msra.mxu0 0.0
        %2365 = vmatprep.subr.mxu0 0.0
        %2366 = vmatpush1.msra.mxu0 0.0
        %2367 = vmatprep.subr.mxu0 0.0
        %2368 = vmatpush1.msra.mxu0 0.0
        %2369 = vmatprep.subr.mxu0 0.0
        %2370 = vmatpush1.msra.mxu0 0.0
        %2371 = vmatprep.subr.mxu0 0.0
        %2372 = vmatpush1.msra.mxu0 0.0
        %2373 = vmatprep.subr.mxu0 0.0
        %2374 = vmatpush1.msra.mxu0 0.0
        %2375 = vmatprep.subr.mxu0 0.0
        %2376 = vmatpush1.msra.mxu0 0.0
        %2377 = vmatprep.subr.mxu0 0.0
        %2378 = vmatpush1.msra.mxu0 0.0
        %2379 = vmatprep.subr.mxu0 0.0
        %2380 = vmatpush1.msra.mxu0 0.0
        %2381 = vmatprep.subr.mxu0 0.0
        %2382 = vmatpush1.msra.mxu0 0.0
        %2383 = vmatprep.subr.mxu0 0.0
        %2384 = vmatpush1.msra.mxu0 0.0
        %2385 = vmatprep.subr.mxu0 0.0
        %2386 = vmatpush1.msra.mxu0 0.0
        %2387 = vmatprep.subr.mxu0 0.0
        %2388 = vmatpush1.msra.mxu0 0.0
        %2389 = vmatprep.subr.mxu0 0.0
        %2390 = vmatpush1.msra.mxu0 0.0
        %2391 = vmatprep.subr.mxu0 0.0
        %2392 = vmatpush1.msra.mxu0 0.0
        %2393 = vmatprep.subr.mxu0 0.0
        %2394 = vmatpush1.msra.mxu0 0.0
        %2395 = vmatprep.subr.mxu0 0.0
        %2396 = vmatpush1.msra.mxu0 0.0
        %2397 = vmatprep.subr.mxu0 0.0
        %2398 = vmatpush1.msra.mxu0 0.0
        %2399 = vmatprep.subr.mxu0 0.0
        %2400 = vmatpush1.msra.mxu0 0.0
        %2401 = vmatprep.subr.mxu0 0.0
        %2402 = vmatpush1.msra.mxu0 0.0
        %2403 = vmatprep.subr.mxu0 0.0
        %2404 = vmatpush1.msra.mxu0 0.0
        %2405 = vmatprep.subr.mxu0 0.0
        %2406 = vmatpush1.msra.mxu0 0.0
        %2407 = vmatprep.mubr.f32.mxu0 0.0
        %2408 = vmatmul.mubr.f32.gmra.mrb[0].mxu0 %v2341
        %v2409 = vpop.f32.mrb[0].mxu0
        %v2410 = vadd.f32 0.0, %v2409
        %v2411 = vpop.f32.mrb[0].mxu0
        %v2412 = vadd.f32 0.0, %v2411
        %2413 = vdwg.mxu0
        %v2414 = vadd.f32 %v2325, %v2410
        %v2415 = vadd.f32 %v2326, %v2412
        %s2416 = scalar_lea.vmem %s2, 192
        %v2417 = vld [vmem:[%s2416] sm:$0xff]
        %2418 = vrot.lane.b32.xlu0 %v1878, 80
        %v2419 = vpop.permute.xlu0 %2418
        %2420 = vrot.lane.b32.xlu0 %v1879, 80
        %v2421 = vpop.permute.xlu0 %2420
        %2422 = vrot.lane.b32.xlu0 %v1880, 80
        %v2423 = vpop.permute.xlu0 %2422
        %vm2424 = vcmask 654336
        %v2425 = vsel %vm2424, %v2419, %v2421
        %v2426 = vsel %vm2424, %v2421, %v2423
        %v2430 = vsel %vm337, %v2417, 0
        %2432 = vmatprep.subr.mxu0 %v2426
        %2433 = vmatpush1.msra.mxu0 %v2425
        %2434 = vmatprep.subr.mxu0 0.0
        %2435 = vmatpush1.msra.mxu0 0.0
        %2436 = vmatprep.subr.mxu0 0.0
        %2437 = vmatpush1.msra.mxu0 0.0
        %2438 = vmatprep.subr.mxu0 0.0
        %2439 = vmatpush1.msra.mxu0 0.0
        %2440 = vmatprep.subr.mxu0 0.0
        %2441 = vmatpush1.msra.mxu0 0.0
        %2442 = vmatprep.subr.mxu0 0.0
        %2443 = vmatpush1.msra.mxu0 0.0
        %2444 = vmatprep.subr.mxu0 0.0
        %2445 = vmatpush1.msra.mxu0 0.0
        %2446 = vmatprep.subr.mxu0 0.0
        %2447 = vmatpush1.msra.mxu0 0.0
        %2448 = vmatprep.subr.mxu0 0.0
        %2449 = vmatpush1.msra.mxu0 0.0
        %2450 = vmatprep.subr.mxu0 0.0
        %2451 = vmatpush1.msra.mxu0 0.0
        %2452 = vmatprep.subr.mxu0 0.0
        %2453 = vmatpush1.msra.mxu0 0.0
        %2454 = vmatprep.subr.mxu0 0.0
        %2455 = vmatpush1.msra.mxu0 0.0
        %2456 = vmatprep.subr.mxu0 0.0
        %2457 = vmatpush1.msra.mxu0 0.0
        %2458 = vmatprep.subr.mxu0 0.0
        %2459 = vmatpush1.msra.mxu0 0.0
        %2460 = vmatprep.subr.mxu0 0.0
        %2461 = vmatpush1.msra.mxu0 0.0
        %2462 = vmatprep.subr.mxu0 0.0
        %2463 = vmatpush1.msra.mxu0 0.0
        %2464 = vmatprep.subr.mxu0 0.0
        %2465 = vmatpush1.msra.mxu0 0.0
        %2466 = vmatprep.subr.mxu0 0.0
        %2467 = vmatpush1.msra.mxu0 0.0
        %2468 = vmatprep.subr.mxu0 0.0
        %2469 = vmatpush1.msra.mxu0 0.0
        %2470 = vmatprep.subr.mxu0 0.0
        %2471 = vmatpush1.msra.mxu0 0.0
        %2472 = vmatprep.subr.mxu0 0.0
        %2473 = vmatpush1.msra.mxu0 0.0
        %2474 = vmatprep.subr.mxu0 0.0
        %2475 = vmatpush1.msra.mxu0 0.0
        %2476 = vmatprep.subr.mxu0 0.0
        %2477 = vmatpush1.msra.mxu0 0.0
        %2478 = vmatprep.subr.mxu0 0.0
        %2479 = vmatpush1.msra.mxu0 0.0
        %2480 = vmatprep.subr.mxu0 0.0
        %2481 = vmatpush1.msra.mxu0 0.0
        %2482 = vmatprep.subr.mxu0 0.0
        %2483 = vmatpush1.msra.mxu0 0.0
        %2484 = vmatprep.subr.mxu0 0.0
        %2485 = vmatpush1.msra.mxu0 0.0
        %2486 = vmatprep.subr.mxu0 0.0
        %2487 = vmatpush1.msra.mxu0 0.0
        %2488 = vmatprep.subr.mxu0 0.0
        %2489 = vmatpush1.msra.mxu0 0.0
        %2490 = vmatprep.subr.mxu0 0.0
        %2491 = vmatpush1.msra.mxu0 0.0
        %2492 = vmatprep.subr.mxu0 0.0
        %2493 = vmatpush1.msra.mxu0 0.0
        %2494 = vmatprep.subr.mxu0 0.0
        %2495 = vmatpush1.msra.mxu0 0.0
        %2496 = vmatprep.mubr.f32.mxu0 0.0
        %2497 = vmatmul.mubr.f32.gmra.mrb[0].mxu0 %v2430
        %v2498 = vpop.f32.mrb[0].mxu0
        %v2499 = vadd.f32 0.0, %v2498
        %v2500 = vpop.f32.mrb[0].mxu0
        %v2501 = vadd.f32 0.0, %v2500
        %2502 = vdwg.mxu0
        %v2503 = vadd.f32 %v2414, %v2499
        %v2504 = vadd.f32 %v2415, %v2501
        %v2505 = vld [vmem:[%s3] sm:$0xff]
        %2507 = vset.pattern.permute.xlu0 0
        %2508 = vperm.xlu0 %2507, %v2505
        %v2509 = vpop.permute.xlu0 %2508
        %v2511 = vadd.f32 %v2503, %v2509
        %v2512 = vadd.f32 %v2504, %v2509
        %v2513 = vmax.f32 %v2511, 0.0
        %v2514 = vmax.f32 %v2512, 0.0
        %v2516 = vlaneseq
        %v2517 = vshrl.u32 %v2516, 7
        %v2518 = vsub.s32 0, %v2517
        %v2519 = vrot.slane %v306, %v2518
        %v2520 = vlaneseq
        %v2521 = vshrl.u32 %v2520, 7
        %v2522 = vsub.s32 1, %v2521
        %v2523 = vrot.slane %v306, %v2522
        %v2526 = vmul.f32 %v2513, %v2519
        %v2527 = vmul.f32 %v2514, %v2523
        %2528 = vst [vmem:[#allocation3] sm:$0xff] 0.0
        %2529 = vst [vmem:[#allocation3 + $0x8] sm:$0xff] 0.0
        %2530 = vst.msk [vmem:[#allocation3 + $0x10] sm:$0xff] %vm1281, 0.0
        %2531 = vst [vmem:[#allocation3 + $0x8] sm:$0xff] %v2526
        %2532 = vst.msk [vmem:[#allocation3 + $0x10] sm:$0xff] %vm315, %v2527
        %v2533 = vld [vmem:[%s4] sm:$0xff]
        %v2534 = vld [vmem:[#allocation3] sm:$0xff]
        %v2535 = vld [vmem:[#allocation3 + $0x8] sm:$0xff]
        %v2536 = vld [vmem:[#allocation3 + $0x10] sm:$0xff]
        %s2537 = scalar_lea.vmem %s4, 8
        %v2538 = vld [vmem:[%s2537] sm:$0xff]
        %2542 = vrot.lane.b32.xlu0 %v2534, 15
        %v2543 = vpop.permute.xlu0 %2542
        %2544 = vrot.lane.b32.xlu0 %v2535, 15
        %v2545 = vpop.permute.xlu0 %2544
        %2546 = vrot.lane.b32.xlu0 %v2536, 15
        %v2547 = vpop.permute.xlu0 %2546
        %v2548 = vsel %vm332, %v2543, %v2545
        %v2549 = vsel %vm332, %v2545, %v2547
        %v2553 = vsel %vm337, %v2538, 0
        %2555 = vmatprep.subr.mxu0 %v2549
        %2556 = vmatpush1.msra.mxu0 %v2548
        %2557 = vmatprep.subr.mxu0 0.0
        %2558 = vmatpush1.msra.mxu0 0.0
        %2559 = vmatprep.subr.mxu0 0.0
        %2560 = vmatpush1.msra.mxu0 0.0
        %2561 = vmatprep.subr.mxu0 0.0
        %2562 = vmatpush1.msra.mxu0 0.0
        %2563 = vmatprep.subr.mxu0 0.0
        %2564 = vmatpush1.msra.mxu0 0.0
        %2565 = vmatprep.subr.mxu0 0.0
        %2566 = vmatpush1.msra.mxu0 0.0
        %2567 = vmatprep.subr.mxu0 0.0
        %2568 = vmatpush1.msra.mxu0 0.0
        %2569 = vmatprep.subr.mxu0 0.0
        %2570 = vmatpush1.msra.mxu0 0.0
        %2571 = vmatprep.subr.mxu0 0.0
        %2572 = vmatpush1.msra.mxu0 0.0
        %2573 = vmatprep.subr.mxu0 0.0
        %2574 = vmatpush1.msra.mxu0 0.0
        %2575 = vmatprep.subr.mxu0 0.0
        %2576 = vmatpush1.msra.mxu0 0.0
        %2577 = vmatprep.subr.mxu0 0.0
        %2578 = vmatpush1.msra.mxu0 0.0
        %2579 = vmatprep.subr.mxu0 0.0
        %2580 = vmatpush1.msra.mxu0 0.0
        %2581 = vmatprep.subr.mxu0 0.0
        %2582 = vmatpush1.msra.mxu0 0.0
        %2583 = vmatprep.subr.mxu0 0.0
        %2584 = vmatpush1.msra.mxu0 0.0
        %2585 = vmatprep.subr.mxu0 0.0
        %2586 = vmatpush1.msra.mxu0 0.0
        %2587 = vmatprep.subr.mxu0 0.0
        %2588 = vmatpush1.msra.mxu0 0.0
        %2589 = vmatprep.subr.mxu0 0.0
        %2590 = vmatpush1.msra.mxu0 0.0
        %2591 = vmatprep.subr.mxu0 0.0
        %2592 = vmatpush1.msra.mxu0 0.0
        %2593 = vmatprep.subr.mxu0 0.0
        %2594 = vmatpush1.msra.mxu0 0.0
        %2595 = vmatprep.subr.mxu0 0.0
        %2596 = vmatpush1.msra.mxu0 0.0
        %2597 = vmatprep.subr.mxu0 0.0
        %2598 = vmatpush1.msra.mxu0 0.0
        %2599 = vmatprep.subr.mxu0 0.0
        %2600 = vmatpush1.msra.mxu0 0.0
        %2601 = vmatprep.subr.mxu0 0.0
        %2602 = vmatpush1.msra.mxu0 0.0
        %2603 = vmatprep.subr.mxu0 0.0
        %2604 = vmatpush1.msra.mxu0 0.0
        %2605 = vmatprep.subr.mxu0 0.0
        %2606 = vmatpush1.msra.mxu0 0.0
        %2607 = vmatprep.subr.mxu0 0.0
        %2608 = vmatpush1.msra.mxu0 0.0
        %2609 = vmatprep.subr.mxu0 0.0
        %2610 = vmatpush1.msra.mxu0 0.0
        %2611 = vmatprep.subr.mxu0 0.0
        %2612 = vmatpush1.msra.mxu0 0.0
        %2613 = vmatprep.subr.mxu0 0.0
        %2614 = vmatpush1.msra.mxu0 0.0
        %2615 = vmatprep.subr.mxu0 0.0
        %2616 = vmatpush1.msra.mxu0 0.0
        %2617 = vmatprep.subr.mxu0 0.0
        %2618 = vmatpush1.msra.mxu0 0.0
        %2619 = vmatprep.mubr.f32.mxu0 0.0
        %2620 = vmatmul.mubr.f32.gmra.mrb[0].mxu0 %v2553
        %v2621 = vpop.f32.mrb[0].mxu0
        %v2622 = vadd.f32 0.0, %v2621
        %v2623 = vpop.f32.mrb[0].mxu0
        %v2624 = vadd.f32 0.0, %v2623
        %2625 = vdwg.mxu0
        %2626 = vrot.lane.b32.xlu0 %v2534, 16
        %v2627 = vpop.permute.xlu0 %2626
        %2628 = vrot.lane.b32.xlu0 %v2535, 16
        %v2629 = vpop.permute.xlu0 %2628
        %2630 = vrot.lane.b32.xlu0 %v2536, 16
        %v2631 = vpop.permute.xlu0 %2630
        %v2632 = vsel %vm418, %v2627, %v2629
        %v2633 = vsel %vm418, %v2629, %v2631
        %v2637 = vsel %vm337, %v2533, 0
        %2639 = vmatprep.subr.mxu0 %v2633
        %2640 = vmatpush1.msra.mxu0 %v2632
        %2641 = vmatprep.subr.mxu0 0.0
        %2642 = vmatpush1.msra.mxu0 0.0
        %2643 = vmatprep.subr.mxu0 0.0
        %2644 = vmatpush1.msra.mxu0 0.0
        %2645 = vmatprep.subr.mxu0 0.0
        %2646 = vmatpush1.msra.mxu0 0.0
        %2647 = vmatprep.subr.mxu0 0.0
        %2648 = vmatpush1.msra.mxu0 0.0
        %2649 = vmatprep.subr.mxu0 0.0
        %2650 = vmatpush1.msra.mxu0 0.0
        %2651 = vmatprep.subr.mxu0 0.0
        %2652 = vmatpush1.msra.mxu0 0.0
        %2653 = vmatprep.subr.mxu0 0.0
        %2654 = vmatpush1.msra.mxu0 0.0
        %2655 = vmatprep.subr.mxu0 0.0
        %2656 = vmatpush1.msra.mxu0 0.0
        %2657 = vmatprep.subr.mxu0 0.0
        %2658 = vmatpush1.msra.mxu0 0.0
        %2659 = vmatprep.subr.mxu0 0.0
        %2660 = vmatpush1.msra.mxu0 0.0
        %2661 = vmatprep.subr.mxu0 0.0
        %2662 = vmatpush1.msra.mxu0 0.0
        %2663 = vmatprep.subr.mxu0 0.0
        %2664 = vmatpush1.msra.mxu0 0.0
        %2665 = vmatprep.subr.mxu0 0.0
        %2666 = vmatpush1.msra.mxu0 0.0
        %2667 = vmatprep.subr.mxu0 0.0
        %2668 = vmatpush1.msra.mxu0 0.0
        %2669 = vmatprep.subr.mxu0 0.0
        %2670 = vmatpush1.msra.mxu0 0.0
        %2671 = vmatprep.subr.mxu0 0.0
        %2672 = vmatpush1.msra.mxu0 0.0
        %2673 = vmatprep.subr.mxu0 0.0
        %2674 = vmatpush1.msra.mxu0 0.0
        %2675 = vmatprep.subr.mxu0 0.0
        %2676 = vmatpush1.msra.mxu0 0.0
        %2677 = vmatprep.subr.mxu0 0.0
        %2678 = vmatpush1.msra.mxu0 0.0
        %2679 = vmatprep.subr.mxu0 0.0
        %2680 = vmatpush1.msra.mxu0 0.0
        %2681 = vmatprep.subr.mxu0 0.0
        %2682 = vmatpush1.msra.mxu0 0.0
        %2683 = vmatprep.subr.mxu0 0.0
        %2684 = vmatpush1.msra.mxu0 0.0
        %2685 = vmatprep.subr.mxu0 0.0
        %2686 = vmatpush1.msra.mxu0 0.0
        %2687 = vmatprep.subr.mxu0 0.0
        %2688 = vmatpush1.msra.mxu0 0.0
        %2689 = vmatprep.subr.mxu0 0.0
        %2690 = vmatpush1.msra.mxu0 0.0
        %2691 = vmatprep.subr.mxu0 0.0
        %2692 = vmatpush1.msra.mxu0 0.0
        %2693 = vmatprep.subr.mxu0 0.0
        %2694 = vmatpush1.msra.mxu0 0.0
        %2695 = vmatprep.subr.mxu0 0.0
        %2696 = vmatpush1.msra.mxu0 0.0
        %2697 = vmatprep.subr.mxu0 0.0
        %2698 = vmatpush1.msra.mxu0 0.0
        %2699 = vmatprep.subr.mxu0 0.0
        %2700 = vmatpush1.msra.mxu0 0.0
        %2701 = vmatprep.subr.mxu0 0.0
        %2702 = vmatpush1.msra.mxu0 0.0
        %2703 = vmatprep.mubr.f32.mxu0 0.0
        %2704 = vmatmul.mubr.f32.gmra.mrb[0].mxu0 %v2637
        %v2705 = vpop.f32.mrb[0].mxu0
        %v2706 = vadd.f32 %v2622, %v2705
        %v2707 = vpop.f32.mrb[0].mxu0
        %v2708 = vadd.f32 %v2624, %v2707
        %2709 = vdwg.mxu0
        %s2710 = scalar_lea.vmem %s4, 16
        %v2711 = vld [vmem:[%s2710] sm:$0xff]
        %2712 = vrot.lane.b32.xlu0 %v2534, 14
        %v2713 = vpop.permute.xlu0 %2712
        %2714 = vrot.lane.b32.xlu0 %v2535, 14
        %v2715 = vpop.permute.xlu0 %2714
        %2716 = vrot.lane.b32.xlu0 %v2536, 14
        %v2717 = vpop.permute.xlu0 %2716
        %v2718 = vsel %vm505, %v2713, %v2715
        %v2719 = vsel %vm505, %v2715, %v2717
        %v2723 = vsel %vm337, %v2711, 0
        %2725 = vmatprep.subr.mxu0 %v2719
        %2726 = vmatpush1.msra.mxu0 %v2718
        %2727 = vmatprep.subr.mxu0 0.0
        %2728 = vmatpush1.msra.mxu0 0.0
        %2729 = vmatprep.subr.mxu0 0.0
        %2730 = vmatpush1.msra.mxu0 0.0
        %2731 = vmatprep.subr.mxu0 0.0
        %2732 = vmatpush1.msra.mxu0 0.0
        %2733 = vmatprep.subr.mxu0 0.0
        %2734 = vmatpush1.msra.mxu0 0.0
        %2735 = vmatprep.subr.mxu0 0.0
        %2736 = vmatpush1.msra.mxu0 0.0
        %2737 = vmatprep.subr.mxu0 0.0
        %2738 = vmatpush1.msra.mxu0 0.0
        %2739 = vmatprep.subr.mxu0 0.0
        %2740 = vmatpush1.msra.mxu0 0.0
        %2741 = vmatprep.subr.mxu0 0.0
        %2742 = vmatpush1.msra.mxu0 0.0
        %2743 = vmatprep.subr.mxu0 0.0
        %2744 = vmatpush1.msra.mxu0 0.0
        %2745 = vmatprep.subr.mxu0 0.0
        %2746 = vmatpush1.msra.mxu0 0.0
        %2747 = vmatprep.subr.mxu0 0.0
        %2748 = vmatpush1.msra.mxu0 0.0
        %2749 = vmatprep.subr.mxu0 0.0
        %2750 = vmatpush1.msra.mxu0 0.0
        %2751 = vmatprep.subr.mxu0 0.0
        %2752 = vmatpush1.msra.mxu0 0.0
        %2753 = vmatprep.subr.mxu0 0.0
        %2754 = vmatpush1.msra.mxu0 0.0
        %2755 = vmatprep.subr.mxu0 0.0
        %2756 = vmatpush1.msra.mxu0 0.0
        %2757 = vmatprep.subr.mxu0 0.0
        %2758 = vmatpush1.msra.mxu0 0.0
        %2759 = vmatprep.subr.mxu0 0.0
        %2760 = vmatpush1.msra.mxu0 0.0
        %2761 = vmatprep.subr.mxu0 0.0
        %2762 = vmatpush1.msra.mxu0 0.0
        %2763 = vmatprep.subr.mxu0 0.0
        %2764 = vmatpush1.msra.mxu0 0.0
        %2765 = vmatprep.subr.mxu0 0.0
        %2766 = vmatpush1.msra.mxu0 0.0
        %2767 = vmatprep.subr.mxu0 0.0
        %2768 = vmatpush1.msra.mxu0 0.0
        %2769 = vmatprep.subr.mxu0 0.0
        %2770 = vmatpush1.msra.mxu0 0.0
        %2771 = vmatprep.subr.mxu0 0.0
        %2772 = vmatpush1.msra.mxu0 0.0
        %2773 = vmatprep.subr.mxu0 0.0
        %2774 = vmatpush1.msra.mxu0 0.0
        %2775 = vmatprep.subr.mxu0 0.0
        %2776 = vmatpush1.msra.mxu0 0.0
        %2777 = vmatprep.subr.mxu0 0.0
        %2778 = vmatpush1.msra.mxu0 0.0
        %2779 = vmatprep.subr.mxu0 0.0
        %2780 = vmatpush1.msra.mxu0 0.0
        %2781 = vmatprep.subr.mxu0 0.0
        %2782 = vmatpush1.msra.mxu0 0.0
        %2783 = vmatprep.subr.mxu0 0.0
        %2784 = vmatpush1.msra.mxu0 0.0
        %2785 = vmatprep.subr.mxu0 0.0
        %2786 = vmatpush1.msra.mxu0 0.0
        %2787 = vmatprep.subr.mxu0 0.0
        %2788 = vmatpush1.msra.mxu0 0.0
        %2789 = vmatprep.mubr.f32.mxu0 0.0
        %2790 = vmatmul.mubr.f32.gmra.mrb[0].mxu0 %v2723
        %v2791 = vpop.f32.mrb[0].mxu0
        %v2792 = vadd.f32 0.0, %v2791
        %v2793 = vpop.f32.mrb[0].mxu0
        %v2794 = vadd.f32 0.0, %v2793
        %2795 = vdwg.mxu0
        %v2796 = vadd.f32 %v2706, %v2792
        %v2797 = vadd.f32 %v2708, %v2794
        %s2798 = scalar_lea.vmem %s4, 24
        %v2799 = vld [vmem:[%s2798] sm:$0xff]
        %2800 = vrot.lane.b32.xlu0 %v2534, 1
        %v2801 = vpop.permute.xlu0 %2800
        %2802 = vrot.lane.b32.xlu0 %v2535, 1
        %v2803 = vpop.permute.xlu0 %2802
        %2804 = vrot.lane.b32.xlu0 %v2536, 1
        %v2805 = vpop.permute.xlu0 %2804
        %v2806 = vsel %vm772, %v2801, %v2803
        %v2807 = vsel %vm772, %v2803, %v2805
        %v2811 = vsel %vm337, %v2799, 0
        %2813 = vmatprep.subr.mxu0 %v2807
        %2814 = vmatpush1.msra.mxu0 %v2806
        %2815 = vmatprep.subr.mxu0 0.0
        %2816 = vmatpush1.msra.mxu0 0.0
        %2817 = vmatprep.subr.mxu0 0.0
        %2818 = vmatpush1.msra.mxu0 0.0
        %2819 = vmatprep.subr.mxu0 0.0
        %2820 = vmatpush1.msra.mxu0 0.0
        %2821 = vmatprep.subr.mxu0 0.0
        %2822 = vmatpush1.msra.mxu0 0.0
        %2823 = vmatprep.subr.mxu0 0.0
        %2824 = vmatpush1.msra.mxu0 0.0
        %2825 = vmatprep.subr.mxu0 0.0
        %2826 = vmatpush1.msra.mxu0 0.0
        %2827 = vmatprep.subr.mxu0 0.0
        %2828 = vmatpush1.msra.mxu0 0.0
        %2829 = vmatprep.subr.mxu0 0.0
        %2830 = vmatpush1.msra.mxu0 0.0
        %2831 = vmatprep.subr.mxu0 0.0
        %2832 = vmatpush1.msra.mxu0 0.0
        %2833 = vmatprep.subr.mxu0 0.0
        %2834 = vmatpush1.msra.mxu0 0.0
        %2835 = vmatprep.subr.mxu0 0.0
        %2836 = vmatpush1.msra.mxu0 0.0
        %2837 = vmatprep.subr.mxu0 0.0
        %2838 = vmatpush1.msra.mxu0 0.0
        %2839 = vmatprep.subr.mxu0 0.0
        %2840 = vmatpush1.msra.mxu0 0.0
        %2841 = vmatprep.subr.mxu0 0.0
        %2842 = vmatpush1.msra.mxu0 0.0
        %2843 = vmatprep.subr.mxu0 0.0
        %2844 = vmatpush1.msra.mxu0 0.0
        %2845 = vmatprep.subr.mxu0 0.0
        %2846 = vmatpush1.msra.mxu0 0.0
        %2847 = vmatprep.subr.mxu0 0.0
        %2848 = vmatpush1.msra.mxu0 0.0
        %2849 = vmatprep.subr.mxu0 0.0
        %2850 = vmatpush1.msra.mxu0 0.0
        %2851 = vmatprep.subr.mxu0 0.0
        %2852 = vmatpush1.msra.mxu0 0.0
        %2853 = vmatprep.subr.mxu0 0.0
        %2854 = vmatpush1.msra.mxu0 0.0
        %2855 = vmatprep.subr.mxu0 0.0
        %2856 = vmatpush1.msra.mxu0 0.0
        %2857 = vmatprep.subr.mxu0 0.0
        %2858 = vmatpush1.msra.mxu0 0.0
        %2859 = vmatprep.subr.mxu0 0.0
        %2860 = vmatpush1.msra.mxu0 0.0
        %2861 = vmatprep.subr.mxu0 0.0
        %2862 = vmatpush1.msra.mxu0 0.0
        %2863 = vmatprep.subr.mxu0 0.0
        %2864 = vmatpush1.msra.mxu0 0.0
        %2865 = vmatprep.subr.mxu0 0.0
        %2866 = vmatpush1.msra.mxu0 0.0
        %2867 = vmatprep.subr.mxu0 0.0
        %2868 = vmatpush1.msra.mxu0 0.0
        %2869 = vmatprep.subr.mxu0 0.0
        %2870 = vmatpush1.msra.mxu0 0.0
        %2871 = vmatprep.subr.mxu0 0.0
        %2872 = vmatpush1.msra.mxu0 0.0
        %2873 = vmatprep.subr.mxu0 0.0
        %2874 = vmatpush1.msra.mxu0 0.0
        %2875 = vmatprep.subr.mxu0 0.0
        %2876 = vmatpush1.msra.mxu0 0.0
        %2877 = vmatprep.mubr.f32.mxu0 0.0
        %2878 = vmatmul.mubr.f32.gmra.mrb[0].mxu0 %v2811
        %v2879 = vpop.f32.mrb[0].mxu0
        %v2880 = vadd.f32 0.0, %v2879
        %v2881 = vpop.f32.mrb[0].mxu0
        %v2882 = vadd.f32 0.0, %v2881
        %2883 = vdwg.mxu0
        %v2884 = vadd.f32 %v2796, %v2880
        %v2885 = vadd.f32 %v2797, %v2882
        %s2886 = scalar_lea.vmem %s4, 32
        %v2887 = vld [vmem:[%s2886] sm:$0xff]
        %v2889 = vsel %vm337, %v2887, 0
        %2891 = vmatprep.subr.mxu0 %v2536
        %2892 = vmatpush1.msra.mxu0 %v2535
        %2893 = vmatprep.subr.mxu0 0.0
        %2894 = vmatpush1.msra.mxu0 0.0
        %2895 = vmatprep.subr.mxu0 0.0
        %2896 = vmatpush1.msra.mxu0 0.0
        %2897 = vmatprep.subr.mxu0 0.0
        %2898 = vmatpush1.msra.mxu0 0.0
        %2899 = vmatprep.subr.mxu0 0.0
        %2900 = vmatpush1.msra.mxu0 0.0
        %2901 = vmatprep.subr.mxu0 0.0
        %2902 = vmatpush1.msra.mxu0 0.0
        %2903 = vmatprep.subr.mxu0 0.0
        %2904 = vmatpush1.msra.mxu0 0.0
        %2905 = vmatprep.subr.mxu0 0.0
        %2906 = vmatpush1.msra.mxu0 0.0
        %2907 = vmatprep.subr.mxu0 0.0
        %2908 = vmatpush1.msra.mxu0 0.0
        %2909 = vmatprep.subr.mxu0 0.0
        %2910 = vmatpush1.msra.mxu0 0.0
        %2911 = vmatprep.subr.mxu0 0.0
        %2912 = vmatpush1.msra.mxu0 0.0
        %2913 = vmatprep.subr.mxu0 0.0
        %2914 = vmatpush1.msra.mxu0 0.0
        %2915 = vmatprep.subr.mxu0 0.0
        %2916 = vmatpush1.msra.mxu0 0.0
        %2917 = vmatprep.subr.mxu0 0.0
        %2918 = vmatpush1.msra.mxu0 0.0
        %2919 = vmatprep.subr.mxu0 0.0
        %2920 = vmatpush1.msra.mxu0 0.0
        %2921 = vmatprep.subr.mxu0 0.0
        %2922 = vmatpush1.msra.mxu0 0.0
        %2923 = vmatprep.subr.mxu0 0.0
        %2924 = vmatpush1.msra.mxu0 0.0
        %2925 = vmatprep.subr.mxu0 0.0
        %2926 = vmatpush1.msra.mxu0 0.0
        %2927 = vmatprep.subr.mxu0 0.0
        %2928 = vmatpush1.msra.mxu0 0.0
        %2929 = vmatprep.subr.mxu0 0.0
        %2930 = vmatpush1.msra.mxu0 0.0
        %2931 = vmatprep.subr.mxu0 0.0
        %2932 = vmatpush1.msra.mxu0 0.0
        %2933 = vmatprep.subr.mxu0 0.0
        %2934 = vmatpush1.msra.mxu0 0.0
        %2935 = vmatprep.subr.mxu0 0.0
        %2936 = vmatpush1.msra.mxu0 0.0
        %2937 = vmatprep.subr.mxu0 0.0
        %2938 = vmatpush1.msra.mxu0 0.0
        %2939 = vmatprep.subr.mxu0 0.0
        %2940 = vmatpush1.msra.mxu0 0.0
        %2941 = vmatprep.subr.mxu0 0.0
        %2942 = vmatpush1.msra.mxu0 0.0
        %2943 = vmatprep.subr.mxu0 0.0
        %2944 = vmatpush1.msra.mxu0 0.0
        %2945 = vmatprep.subr.mxu0 0.0
        %2946 = vmatpush1.msra.mxu0 0.0
        %2947 = vmatprep.subr.mxu0 0.0
        %2948 = vmatpush1.msra.mxu0 0.0
        %2949 = vmatprep.subr.mxu0 0.0
        %2950 = vmatpush1.msra.mxu0 0.0
        %2951 = vmatprep.subr.mxu0 0.0
        %2952 = vmatpush1.msra.mxu0 0.0
        %2953 = vmatprep.subr.mxu0 0.0
        %2954 = vmatpush1.msra.mxu0 0.0
        %2955 = vmatprep.mubr.f32.mxu0 0.0
        %2956 = vmatmul.mubr.f32.gmra.mrb[0].mxu0 %v2889
        %v2957 = vpop.f32.mrb[0].mxu0
        %v2958 = vadd.f32 0.0, %v2957
        %v2959 = vpop.f32.mrb[0].mxu0
        %v2960 = vadd.f32 0.0, %v2959
        %2961 = vdwg.mxu0
        %v2962 = vadd.f32 %v2884, %v2958
        %v2963 = vadd.f32 %v2885, %v2960
        %s2964 = scalar_lea.vmem %s4, 40
        %v2965 = vld [vmem:[%s2964] sm:$0xff]
        %2966 = vrot.lane.b32.xlu0 %v2535, 127
        %v2967 = vpop.permute.xlu0 %2966
        %2968 = vrot.lane.b32.xlu0 %v2536, 127
        %v2969 = vpop.permute.xlu0 %2968
        %v2970 = vsel %vm937, %v2967, %v2969
        %v2974 = vsel %vm337, %v2965, 0
        %2976 = vmatprep.subr.mxu0 %v2969
        %2977 = vmatpush1.msra.mxu0 %v2970
        %2978 = vmatprep.subr.mxu0 0.0
        %2979 = vmatpush1.msra.mxu0 0.0
        %2980 = vmatprep.subr.mxu0 0.0
        %2981 = vmatpush1.msra.mxu0 0.0
        %2982 = vmatprep.subr.mxu0 0.0
        %2983 = vmatpush1.msra.mxu0 0.0
        %2984 = vmatprep.subr.mxu0 0.0
        %2985 = vmatpush1.msra.mxu0 0.0
        %2986 = vmatprep.subr.mxu0 0.0
        %2987 = vmatpush1.msra.mxu0 0.0
        %2988 = vmatprep.subr.mxu0 0.0
        %2989 = vmatpush1.msra.mxu0 0.0
        %2990 = vmatprep.subr.mxu0 0.0
        %2991 = vmatpush1.msra.mxu0 0.0
        %2992 = vmatprep.subr.mxu0 0.0
        %2993 = vmatpush1.msra.mxu0 0.0
        %2994 = vmatprep.subr.mxu0 0.0
        %2995 = vmatpush1.msra.mxu0 0.0
        %2996 = vmatprep.subr.mxu0 0.0
        %2997 = vmatpush1.msra.mxu0 0.0
        %2998 = vmatprep.subr.mxu0 0.0
        %2999 = vmatpush1.msra.mxu0 0.0
        %3000 = vmatprep.subr.mxu0 0.0
        %3001 = vmatpush1.msra.mxu0 0.0
        %3002 = vmatprep.subr.mxu0 0.0
        %3003 = vmatpush1.msra.mxu0 0.0
        %3004 = vmatprep.subr.mxu0 0.0
        %3005 = vmatpush1.msra.mxu0 0.0
        %3006 = vmatprep.subr.mxu0 0.0
        %3007 = vmatpush1.msra.mxu0 0.0
        %3008 = vmatprep.subr.mxu0 0.0
        %3009 = vmatpush1.msra.mxu0 0.0
        %3010 = vmatprep.subr.mxu0 0.0
        %3011 = vmatpush1.msra.mxu0 0.0
        %3012 = vmatprep.subr.mxu0 0.0
        %3013 = vmatpush1.msra.mxu0 0.0
        %3014 = vmatprep.subr.mxu0 0.0
        %3015 = vmatpush1.msra.mxu0 0.0
        %3016 = vmatprep.subr.mxu0 0.0
        %3017 = vmatpush1.msra.mxu0 0.0
        %3018 = vmatprep.subr.mxu0 0.0
        %3019 = vmatpush1.msra.mxu0 0.0
        %3020 = vmatprep.subr.mxu0 0.0
        %3021 = vmatpush1.msra.mxu0 0.0
        %3022 = vmatprep.subr.mxu0 0.0
        %3023 = vmatpush1.msra.mxu0 0.0
        %3024 = vmatprep.subr.mxu0 0.0
        %3025 = vmatpush1.msra.mxu0 0.0
        %3026 = vmatprep.subr.mxu0 0.0
        %3027 = vmatpush1.msra.mxu0 0.0
        %3028 = vmatprep.subr.mxu0 0.0
        %3029 = vmatpush1.msra.mxu0 0.0
        %3030 = vmatprep.subr.mxu0 0.0
        %3031 = vmatpush1.msra.mxu0 0.0
        %3032 = vmatprep.subr.mxu0 0.0
        %3033 = vmatpush1.msra.mxu0 0.0
        %3034 = vmatprep.subr.mxu0 0.0
        %3035 = vmatpush1.msra.mxu0 0.0
        %3036 = vmatprep.subr.mxu0 0.0
        %3037 = vmatpush1.msra.mxu0 0.0
        %3038 = vmatprep.subr.mxu0 0.0
        %3039 = vmatpush1.msra.mxu0 0.0
        %3040 = vmatprep.mubr.f32.mxu0 0.0
        %3041 = vmatmul.mubr.f32.gmra.mrb[0].mxu0 %v2974
        %v3042 = vpop.f32.mrb[0].mxu0
        %v3043 = vadd.f32 0.0, %v3042
        %v3044 = vpop.f32.mrb[0].mxu0
        %v3045 = vadd.f32 0.0, %v3044
        %3046 = vdwg.mxu0
        %v3047 = vadd.f32 %v2962, %v3043
        %v3048 = vadd.f32 %v2963, %v3045
        %s3049 = scalar_lea.vmem %s4, 48
        %v3050 = vld [vmem:[%s3049] sm:$0xff]
        %3051 = vrot.lane.b32.xlu0 %v2535, 114
        %v3052 = vpop.permute.xlu0 %3051
        %3053 = vrot.lane.b32.xlu0 %v2536, 114
        %v3054 = vpop.permute.xlu0 %3053
        %v3055 = vsel %vm1195, %v3052, %v3054
        %v3059 = vsel %vm337, %v3050, 0
        %3061 = vmatprep.subr.mxu0 %v3054
        %3062 = vmatpush1.msra.mxu0 %v3055
        %3063 = vmatprep.subr.mxu0 0.0
        %3064 = vmatpush1.msra.mxu0 0.0
        %3065 = vmatprep.subr.mxu0 0.0
        %3066 = vmatpush1.msra.mxu0 0.0
        %3067 = vmatprep.subr.mxu0 0.0
        %3068 = vmatpush1.msra.mxu0 0.0
        %3069 = vmatprep.subr.mxu0 0.0
        %3070 = vmatpush1.msra.mxu0 0.0
        %3071 = vmatprep.subr.mxu0 0.0
        %3072 = vmatpush1.msra.mxu0 0.0
        %3073 = vmatprep.subr.mxu0 0.0
        %3074 = vmatpush1.msra.mxu0 0.0
        %3075 = vmatprep.subr.mxu0 0.0
        %3076 = vmatpush1.msra.mxu0 0.0
        %3077 = vmatprep.subr.mxu0 0.0
        %3078 = vmatpush1.msra.mxu0 0.0
        %3079 = vmatprep.subr.mxu0 0.0
        %3080 = vmatpush1.msra.mxu0 0.0
        %3081 = vmatprep.subr.mxu0 0.0
        %3082 = vmatpush1.msra.mxu0 0.0
        %3083 = vmatprep.subr.mxu0 0.0
        %3084 = vmatpush1.msra.mxu0 0.0
        %3085 = vmatprep.subr.mxu0 0.0
        %3086 = vmatpush1.msra.mxu0 0.0
        %3087 = vmatprep.subr.mxu0 0.0
        %3088 = vmatpush1.msra.mxu0 0.0
        %3089 = vmatprep.subr.mxu0 0.0
        %3090 = vmatpush1.msra.mxu0 0.0
        %3091 = vmatprep.subr.mxu0 0.0
        %3092 = vmatpush1.msra.mxu0 0.0
        %3093 = vmatprep.subr.mxu0 0.0
        %3094 = vmatpush1.msra.mxu0 0.0
        %3095 = vmatprep.subr.mxu0 0.0
        %3096 = vmatpush1.msra.mxu0 0.0
        %3097 = vmatprep.subr.mxu0 0.0
        %3098 = vmatpush1.msra.mxu0 0.0
        %3099 = vmatprep.subr.mxu0 0.0
        %3100 = vmatpush1.msra.mxu0 0.0
        %3101 = vmatprep.subr.mxu0 0.0
        %3102 = vmatpush1.msra.mxu0 0.0
        %3103 = vmatprep.subr.mxu0 0.0
        %3104 = vmatpush1.msra.mxu0 0.0
        %3105 = vmatprep.subr.mxu0 0.0
        %3106 = vmatpush1.msra.mxu0 0.0
        %3107 = vmatprep.subr.mxu0 0.0
        %3108 = vmatpush1.msra.mxu0 0.0
        %3109 = vmatprep.subr.mxu0 0.0
        %3110 = vmatpush1.msra.mxu0 0.0
        %3111 = vmatprep.subr.mxu0 0.0
        %3112 = vmatpush1.msra.mxu0 0.0
        %3113 = vmatprep.subr.mxu0 0.0
        %3114 = vmatpush1.msra.mxu0 0.0
        %3115 = vmatprep.subr.mxu0 0.0
        %3116 = vmatpush1.msra.mxu0 0.0
        %3117 = vmatprep.subr.mxu0 0.0
        %3118 = vmatpush1.msra.mxu0 0.0
        %3119 = vmatprep.subr.mxu0 0.0
        %3120 = vmatpush1.msra.mxu0 0.0
        %3121 = vmatprep.subr.mxu0 0.0
        %3122 = vmatpush1.msra.mxu0 0.0
        %3123 = vmatprep.subr.mxu0 0.0
        %3124 = vmatpush1.msra.mxu0 0.0
        %3125 = vmatprep.mubr.f32.mxu0 0.0
        %3126 = vmatmul.mubr.f32.gmra.mrb[0].mxu0 %v3059
        %v3127 = vpop.f32.mrb[0].mxu0
        %v3128 = vadd.f32 0.0, %v3127
        %v3129 = vpop.f32.mrb[0].mxu0
        %v3130 = vadd.f32 0.0, %v3129
        %3131 = vdwg.mxu0
        %v3132 = vadd.f32 %v3047, %v3128
        %v3133 = vadd.f32 %v3048, %v3130
        %s3134 = scalar_lea.vmem %s4, 56
        %v3135 = vld [vmem:[%s3134] sm:$0xff]
        %3136 = vrot.lane.b32.xlu0 %v2535, 113
        %v3137 = vpop.permute.xlu0 %3136
        %3138 = vrot.lane.b32.xlu0 %v2536, 113
        %v3139 = vpop.permute.xlu0 %3138
        %v3140 = vsel %vm1281, %v3137, %v3139
        %v3144 = vsel %vm337, %v3135, 0
        %3146 = vmatprep.subr.mxu0 %v3139
        %3147 = vmatpush1.msra.mxu0 %v3140
        %3148 = vmatprep.subr.mxu0 0.0
        %3149 = vmatpush1.msra.mxu0 0.0
        %3150 = vmatprep.subr.mxu0 0.0
        %3151 = vmatpush1.msra.mxu0 0.0
        %3152 = vmatprep.subr.mxu0 0.0
        %3153 = vmatpush1.msra.mxu0 0.0
        %3154 = vmatprep.subr.mxu0 0.0
        %3155 = vmatpush1.msra.mxu0 0.0
        %3156 = vmatprep.subr.mxu0 0.0
        %3157 = vmatpush1.msra.mxu0 0.0
        %3158 = vmatprep.subr.mxu0 0.0
        %3159 = vmatpush1.msra.mxu0 0.0
        %3160 = vmatprep.subr.mxu0 0.0
        %3161 = vmatpush1.msra.mxu0 0.0
        %3162 = vmatprep.subr.mxu0 0.0
        %3163 = vmatpush1.msra.mxu0 0.0
        %3164 = vmatprep.subr.mxu0 0.0
        %3165 = vmatpush1.msra.mxu0 0.0
        %3166 = vmatprep.subr.mxu0 0.0
        %3167 = vmatpush1.msra.mxu0 0.0
        %3168 = vmatprep.subr.mxu0 0.0
        %3169 = vmatpush1.msra.mxu0 0.0
        %3170 = vmatprep.subr.mxu0 0.0
        %3171 = vmatpush1.msra.mxu0 0.0
        %3172 = vmatprep.subr.mxu0 0.0
        %3173 = vmatpush1.msra.mxu0 0.0
        %3174 = vmatprep.subr.mxu0 0.0
        %3175 = vmatpush1.msra.mxu0 0.0
        %3176 = vmatprep.subr.mxu0 0.0
        %3177 = vmatpush1.msra.mxu0 0.0
        %3178 = vmatprep.subr.mxu0 0.0
        %3179 = vmatpush1.msra.mxu0 0.0
        %3180 = vmatprep.subr.mxu0 0.0
        %3181 = vmatpush1.msra.mxu0 0.0
        %3182 = vmatprep.subr.mxu0 0.0
        %3183 = vmatpush1.msra.mxu0 0.0
        %3184 = vmatprep.subr.mxu0 0.0
        %3185 = vmatpush1.msra.mxu0 0.0
        %3186 = vmatprep.subr.mxu0 0.0
        %3187 = vmatpush1.msra.mxu0 0.0
        %3188 = vmatprep.subr.mxu0 0.0
        %3189 = vmatpush1.msra.mxu0 0.0
        %3190 = vmatprep.subr.mxu0 0.0
        %3191 = vmatpush1.msra.mxu0 0.0
        %3192 = vmatprep.subr.mxu0 0.0
        %3193 = vmatpush1.msra.mxu0 0.0
        %3194 = vmatprep.subr.mxu0 0.0
        %3195 = vmatpush1.msra.mxu0 0.0
        %3196 = vmatprep.subr.mxu0 0.0
        %3197 = vmatpush1.msra.mxu0 0.0
        %3198 = vmatprep.subr.mxu0 0.0
        %3199 = vmatpush1.msra.mxu0 0.0
        %3200 = vmatprep.subr.mxu0 0.0
        %3201 = vmatpush1.msra.mxu0 0.0
        %3202 = vmatprep.subr.mxu0 0.0
        %3203 = vmatpush1.msra.mxu0 0.0
        %3204 = vmatprep.subr.mxu0 0.0
        %3205 = vmatpush1.msra.mxu0 0.0
        %3206 = vmatprep.subr.mxu0 0.0
        %3207 = vmatpush1.msra.mxu0 0.0
        %3208 = vmatprep.subr.mxu0 0.0
        %3209 = vmatpush1.msra.mxu0 0.0
        %3210 = vmatprep.mubr.f32.mxu0 0.0
        %3211 = vmatmul.mubr.f32.gmra.mrb[0].mxu0 %v3144
        %v3212 = vpop.f32.mrb[0].mxu0
        %v3213 = vadd.f32 0.0, %v3212
        %v3214 = vpop.f32.mrb[0].mxu0
        %v3215 = vadd.f32 0.0, %v3214
        %3216 = vdwg.mxu0
        %v3217 = vadd.f32 %v3132, %v3213
        %v3218 = vadd.f32 %v3133, %v3215
        %s3219 = scalar_lea.vmem %s4, 64
        %v3220 = vld [vmem:[%s3219] sm:$0xff]
        %3221 = vrot.lane.b32.xlu0 %v2535, 112
        %v3222 = vpop.permute.xlu0 %3221
        %3223 = vrot.lane.b32.xlu0 %v2536, 112
        %v3224 = vpop.permute.xlu0 %3223
        %v3225 = vsel %vm1367, %v3222, %v3224
        %v3229 = vsel %vm337, %v3220, 0
        %3231 = vmatprep.subr.mxu0 %v3224
        %3232 = vmatpush1.msra.mxu0 %v3225
        %3233 = vmatprep.subr.mxu0 0.0
        %3234 = vmatpush1.msra.mxu0 0.0
        %3235 = vmatprep.subr.mxu0 0.0
        %3236 = vmatpush1.msra.mxu0 0.0
        %3237 = vmatprep.subr.mxu0 0.0
        %3238 = vmatpush1.msra.mxu0 0.0
        %3239 = vmatprep.subr.mxu0 0.0
        %3240 = vmatpush1.msra.mxu0 0.0
        %3241 = vmatprep.subr.mxu0 0.0
        %3242 = vmatpush1.msra.mxu0 0.0
        %3243 = vmatprep.subr.mxu0 0.0
        %3244 = vmatpush1.msra.mxu0 0.0
        %3245 = vmatprep.subr.mxu0 0.0
        %3246 = vmatpush1.msra.mxu0 0.0
        %3247 = vmatprep.subr.mxu0 0.0
        %3248 = vmatpush1.msra.mxu0 0.0
        %3249 = vmatprep.subr.mxu0 0.0
        %3250 = vmatpush1.msra.mxu0 0.0
        %3251 = vmatprep.subr.mxu0 0.0
        %3252 = vmatpush1.msra.mxu0 0.0
        %3253 = vmatprep.subr.mxu0 0.0
        %3254 = vmatpush1.msra.mxu0 0.0
        %3255 = vmatprep.subr.mxu0 0.0
        %3256 = vmatpush1.msra.mxu0 0.0
        %3257 = vmatprep.subr.mxu0 0.0
        %3258 = vmatpush1.msra.mxu0 0.0
        %3259 = vmatprep.subr.mxu0 0.0
        %3260 = vmatpush1.msra.mxu0 0.0
        %3261 = vmatprep.subr.mxu0 0.0
        %3262 = vmatpush1.msra.mxu0 0.0
        %3263 = vmatprep.subr.mxu0 0.0
        %3264 = vmatpush1.msra.mxu0 0.0
        %3265 = vmatprep.subr.mxu0 0.0
        %3266 = vmatpush1.msra.mxu0 0.0
        %3267 = vmatprep.subr.mxu0 0.0
        %3268 = vmatpush1.msra.mxu0 0.0
        %3269 = vmatprep.subr.mxu0 0.0
        %3270 = vmatpush1.msra.mxu0 0.0
        %3271 = vmatprep.subr.mxu0 0.0
        %3272 = vmatpush1.msra.mxu0 0.0
        %3273 = vmatprep.subr.mxu0 0.0
        %3274 = vmatpush1.msra.mxu0 0.0
        %3275 = vmatprep.subr.mxu0 0.0
        %3276 = vmatpush1.msra.mxu0 0.0
        %3277 = vmatprep.subr.mxu0 0.0
        %3278 = vmatpush1.msra.mxu0 0.0
        %3279 = vmatprep.subr.mxu0 0.0
        %3280 = vmatpush1.msra.mxu0 0.0
        %3281 = vmatprep.subr.mxu0 0.0
        %3282 = vmatpush1.msra.mxu0 0.0
        %3283 = vmatprep.subr.mxu0 0.0
        %3284 = vmatpush1.msra.mxu0 0.0
        %3285 = vmatprep.subr.mxu0 0.0
        %3286 = vmatpush1.msra.mxu0 0.0
        %3287 = vmatprep.subr.mxu0 0.0
        %3288 = vmatpush1.msra.mxu0 0.0
        %3289 = vmatprep.subr.mxu0 0.0
        %3290 = vmatpush1.msra.mxu0 0.0
        %3291 = vmatprep.subr.mxu0 0.0
        %3292 = vmatpush1.msra.mxu0 0.0
        %3293 = vmatprep.subr.mxu0 0.0
        %3294 = vmatpush1.msra.mxu0 0.0
        %3295 = vmatprep.mubr.f32.mxu0 0.0
        %3296 = vmatmul.mubr.f32.gmra.mrb[0].mxu0 %v3229
        %v3297 = vpop.f32.mrb[0].mxu0
        %v3298 = vadd.f32 0.0, %v3297
        %v3299 = vpop.f32.mrb[0].mxu0
        %v3300 = vadd.f32 0.0, %v3299
        %3301 = vdwg.mxu0
        %v3302 = vadd.f32 %v3217, %v3298
        %v3303 = vadd.f32 %v3218, %v3300
        %v3304 = vld [vmem:[%s5] sm:$0xff]
        %3306 = vset.pattern.permute.xlu0 0
        %3307 = vperm.xlu0 %3306, %v3304
        %v3308 = vpop.permute.xlu0 %3307
        %v3310 = vadd.f32 %v3302, %v3308
        %v3311 = vadd.f32 %v3303, %v3308
        %v3312 = vmax.f32 %v3310, 0.0
        %v3313 = vmax.f32 %v3311, 0.0
        %v3314 = vmul.f32 %v3312, %v2519
        %v3315 = vmul.f32 %v3313, %v2523
        %3316 = vst [vmem:[#allocation3 + $0x8] sm:$0xff] %v3314
        %3317 = vst.msk [vmem:[#allocation3 + $0x10] sm:$0xff] %vm315, %v3315
        %s3318 = scalar_lea.vmem %s4, 72
        %v3319 = vld [vmem:[%s3318] sm:$0xff]
        %v3320 = vld [vmem:[#allocation3] sm:$0xff]
        %v3321 = vld [vmem:[#allocation3 + $0x8] sm:$0xff]
        %v3322 = vld [vmem:[#allocation3 + $0x10] sm:$0xff]
        %s3323 = scalar_lea.vmem %s4, 80
        %v3324 = vld [vmem:[%s3323] sm:$0xff]
        %3328 = vrot.lane.b32.xlu0 %v3320, 15
        %v3329 = vpop.permute.xlu0 %3328
        %3330 = vrot.lane.b32.xlu0 %v3321, 15
        %v3331 = vpop.permute.xlu0 %3330
        %3332 = vrot.lane.b32.xlu0 %v3322, 15
        %v3333 = vpop.permute.xlu0 %3332
        %v3334 = vsel %vm332, %v3329, %v3331
        %v3335 = vsel %vm332, %v3331, %v3333
        %v3339 = vsel %vm337, %v3324, 0
        %3341 = vmatprep.subr.mxu0 %v3335
        %3342 = vmatpush1.msra.mxu0 %v3334
        %3343 = vmatprep.subr.mxu0 0.0
        %3344 = vmatpush1.msra.mxu0 0.0
        %3345 = vmatprep.subr.mxu0 0.0
        %3346 = vmatpush1.msra.mxu0 0.0
        %3347 = vmatprep.subr.mxu0 0.0
        %3348 = vmatpush1.msra.mxu0 0.0
        %3349 = vmatprep.subr.mxu0 0.0
        %3350 = vmatpush1.msra.mxu0 0.0
        %3351 = vmatprep.subr.mxu0 0.0
        %3352 = vmatpush1.msra.mxu0 0.0
        %3353 = vmatprep.subr.mxu0 0.0
        %3354 = vmatpush1.msra.mxu0 0.0
        %3355 = vmatprep.subr.mxu0 0.0
        %3356 = vmatpush1.msra.mxu0 0.0
        %3357 = vmatprep.subr.mxu0 0.0
        %3358 = vmatpush1.msra.mxu0 0.0
        %3359 = vmatprep.subr.mxu0 0.0
        %3360 = vmatpush1.msra.mxu0 0.0
        %3361 = vmatprep.subr.mxu0 0.0
        %3362 = vmatpush1.msra.mxu0 0.0
        %3363 = vmatprep.subr.mxu0 0.0
        %3364 = vmatpush1.msra.mxu0 0.0
        %3365 = vmatprep.subr.mxu0 0.0
        %3366 = vmatpush1.msra.mxu0 0.0
        %3367 = vmatprep.subr.mxu0 0.0
        %3368 = vmatpush1.msra.mxu0 0.0
        %3369 = vmatprep.subr.mxu0 0.0
        %3370 = vmatpush1.msra.mxu0 0.0
        %3371 = vmatprep.subr.mxu0 0.0
        %3372 = vmatpush1.msra.mxu0 0.0
        %3373 = vmatprep.subr.mxu0 0.0
        %3374 = vmatpush1.msra.mxu0 0.0
        %3375 = vmatprep.subr.mxu0 0.0
        %3376 = vmatpush1.msra.mxu0 0.0
        %3377 = vmatprep.subr.mxu0 0.0
        %3378 = vmatpush1.msra.mxu0 0.0
        %3379 = vmatprep.subr.mxu0 0.0
        %3380 = vmatpush1.msra.mxu0 0.0
        %3381 = vmatprep.subr.mxu0 0.0
        %3382 = vmatpush1.msra.mxu0 0.0
        %3383 = vmatprep.subr.mxu0 0.0
        %3384 = vmatpush1.msra.mxu0 0.0
        %3385 = vmatprep.subr.mxu0 0.0
        %3386 = vmatpush1.msra.mxu0 0.0
        %3387 = vmatprep.subr.mxu0 0.0
        %3388 = vmatpush1.msra.mxu0 0.0
        %3389 = vmatprep.subr.mxu0 0.0
        %3390 = vmatpush1.msra.mxu0 0.0
        %3391 = vmatprep.subr.mxu0 0.0
        %3392 = vmatpush1.msra.mxu0 0.0
        %3393 = vmatprep.subr.mxu0 0.0
        %3394 = vmatpush1.msra.mxu0 0.0
        %3395 = vmatprep.subr.mxu0 0.0
        %3396 = vmatpush1.msra.mxu0 0.0
        %3397 = vmatprep.subr.mxu0 0.0
        %3398 = vmatpush1.msra.mxu0 0.0
        %3399 = vmatprep.subr.mxu0 0.0
        %3400 = vmatpush1.msra.mxu0 0.0
        %3401 = vmatprep.subr.mxu0 0.0
        %3402 = vmatpush1.msra.mxu0 0.0
        %3403 = vmatprep.subr.mxu0 0.0
        %3404 = vmatpush1.msra.mxu0 0.0
        %3405 = vmatprep.mubr.f32.mxu0 0.0
        %3406 = vmatmul.mubr.f32.gmra.mrb[0].mxu0 %v3339
        %v3407 = vpop.f32.mrb[0].mxu0
        %v3408 = vadd.f32 0.0, %v3407
        %v3409 = vpop.f32.mrb[0].mxu0
        %v3410 = vadd.f32 0.0, %v3409
        %3411 = vdwg.mxu0
        %3412 = vrot.lane.b32.xlu0 %v3320, 16
        %v3413 = vpop.permute.xlu0 %3412
        %3414 = vrot.lane.b32.xlu0 %v3321, 16
        %v3415 = vpop.permute.xlu0 %3414
        %3416 = vrot.lane.b32.xlu0 %v3322, 16
        %v3417 = vpop.permute.xlu0 %3416
        %v3418 = vsel %vm418, %v3413, %v3415
        %v3419 = vsel %vm418, %v3415, %v3417
        %v3423 = vsel %vm337, %v3319, 0
        %3425 = vmatprep.subr.mxu0 %v3419
        %3426 = vmatpush1.msra.mxu0 %v3418
        %3427 = vmatprep.subr.mxu0 0.0
        %3428 = vmatpush1.msra.mxu0 0.0
        %3429 = vmatprep.subr.mxu0 0.0
        %3430 = vmatpush1.msra.mxu0 0.0
        %3431 = vmatprep.subr.mxu0 0.0
        %3432 = vmatpush1.msra.mxu0 0.0
        %3433 = vmatprep.subr.mxu0 0.0
        %3434 = vmatpush1.msra.mxu0 0.0
        %3435 = vmatprep.subr.mxu0 0.0
        %3436 = vmatpush1.msra.mxu0 0.0
        %3437 = vmatprep.subr.mxu0 0.0
        %3438 = vmatpush1.msra.mxu0 0.0
        %3439 = vmatprep.subr.mxu0 0.0
        %3440 = vmatpush1.msra.mxu0 0.0
        %3441 = vmatprep.subr.mxu0 0.0
        %3442 = vmatpush1.msra.mxu0 0.0
        %3443 = vmatprep.subr.mxu0 0.0
        %3444 = vmatpush1.msra.mxu0 0.0
        %3445 = vmatprep.subr.mxu0 0.0
        %3446 = vmatpush1.msra.mxu0 0.0
        %3447 = vmatprep.subr.mxu0 0.0
        %3448 = vmatpush1.msra.mxu0 0.0
        %3449 = vmatprep.subr.mxu0 0.0
        %3450 = vmatpush1.msra.mxu0 0.0
        %3451 = vmatprep.subr.mxu0 0.0
        %3452 = vmatpush1.msra.mxu0 0.0
        %3453 = vmatprep.subr.mxu0 0.0
        %3454 = vmatpush1.msra.mxu0 0.0
        %3455 = vmatprep.subr.mxu0 0.0
        %3456 = vmatpush1.msra.mxu0 0.0
        %3457 = vmatprep.subr.mxu0 0.0
        %3458 = vmatpush1.msra.mxu0 0.0
        %3459 = vmatprep.subr.mxu0 0.0
        %3460 = vmatpush1.msra.mxu0 0.0
        %3461 = vmatprep.subr.mxu0 0.0
        %3462 = vmatpush1.msra.mxu0 0.0
        %3463 = vmatprep.subr.mxu0 0.0
        %3464 = vmatpush1.msra.mxu0 0.0
        %3465 = vmatprep.subr.mxu0 0.0
        %3466 = vmatpush1.msra.mxu0 0.0
        %3467 = vmatprep.subr.mxu0 0.0
        %3468 = vmatpush1.msra.mxu0 0.0
        %3469 = vmatprep.subr.mxu0 0.0
        %3470 = vmatpush1.msra.mxu0 0.0
        %3471 = vmatprep.subr.mxu0 0.0
        %3472 = vmatpush1.msra.mxu0 0.0
        %3473 = vmatprep.subr.mxu0 0.0
        %3474 = vmatpush1.msra.mxu0 0.0
        %3475 = vmatprep.subr.mxu0 0.0
        %3476 = vmatpush1.msra.mxu0 0.0
        %3477 = vmatprep.subr.mxu0 0.0
        %3478 = vmatpush1.msra.mxu0 0.0
        %3479 = vmatprep.subr.mxu0 0.0
        %3480 = vmatpush1.msra.mxu0 0.0
        %3481 = vmatprep.subr.mxu0 0.0
        %3482 = vmatpush1.msra.mxu0 0.0
        %3483 = vmatprep.subr.mxu0 0.0
        %3484 = vmatpush1.msra.mxu0 0.0
        %3485 = vmatprep.subr.mxu0 0.0
        %3486 = vmatpush1.msra.mxu0 0.0
        %3487 = vmatprep.subr.mxu0 0.0
        %3488 = vmatpush1.msra.mxu0 0.0
        %3489 = vmatprep.mubr.f32.mxu0 0.0
        %3490 = vmatmul.mubr.f32.gmra.mrb[0].mxu0 %v3423
        %v3491 = vpop.f32.mrb[0].mxu0
        %v3492 = vadd.f32 %v3408, %v3491
        %v3493 = vpop.f32.mrb[0].mxu0
        %v3494 = vadd.f32 %v3410, %v3493
        %3495 = vdwg.mxu0
        %s3496 = scalar_lea.vmem %s4, 88
        %v3497 = vld [vmem:[%s3496] sm:$0xff]
        %3498 = vrot.lane.b32.xlu0 %v3320, 14
        %v3499 = vpop.permute.xlu0 %3498
        %3500 = vrot.lane.b32.xlu0 %v3321, 14
        %v3501 = vpop.permute.xlu0 %3500
        %3502 = vrot.lane.b32.xlu0 %v3322, 14
        %v3503 = vpop.permute.xlu0 %3502
        %v3504 = vsel %vm505, %v3499, %v3501
        %v3505 = vsel %vm505, %v3501, %v3503
        %v3509 = vsel %vm337, %v3497, 0
        %3511 = vmatprep.subr.mxu0 %v3505
        %3512 = vmatpush1.msra.mxu0 %v3504
        %3513 = vmatprep.subr.mxu0 0.0
        %3514 = vmatpush1.msra.mxu0 0.0
        %3515 = vmatprep.subr.mxu0 0.0
        %3516 = vmatpush1.msra.mxu0 0.0
        %3517 = vmatprep.subr.mxu0 0.0
        %3518 = vmatpush1.msra.mxu0 0.0
        %3519 = vmatprep.subr.mxu0 0.0
        %3520 = vmatpush1.msra.mxu0 0.0
        %3521 = vmatprep.subr.mxu0 0.0
        %3522 = vmatpush1.msra.mxu0 0.0
        %3523 = vmatprep.subr.mxu0 0.0
        %3524 = vmatpush1.msra.mxu0 0.0
        %3525 = vmatprep.subr.mxu0 0.0
        %3526 = vmatpush1.msra.mxu0 0.0
        %3527 = vmatprep.subr.mxu0 0.0
        %3528 = vmatpush1.msra.mxu0 0.0
        %3529 = vmatprep.subr.mxu0 0.0
        %3530 = vmatpush1.msra.mxu0 0.0
        %3531 = vmatprep.subr.mxu0 0.0
        %3532 = vmatpush1.msra.mxu0 0.0
        %3533 = vmatprep.subr.mxu0 0.0
        %3534 = vmatpush1.msra.mxu0 0.0
        %3535 = vmatprep.subr.mxu0 0.0
        %3536 = vmatpush1.msra.mxu0 0.0
        %3537 = vmatprep.subr.mxu0 0.0
        %3538 = vmatpush1.msra.mxu0 0.0
        %3539 = vmatprep.subr.mxu0 0.0
        %3540 = vmatpush1.msra.mxu0 0.0
        %3541 = vmatprep.subr.mxu0 0.0
        %3542 = vmatpush1.msra.mxu0 0.0
        %3543 = vmatprep.subr.mxu0 0.0
        %3544 = vmatpush1.msra.mxu0 0.0
        %3545 = vmatprep.subr.mxu0 0.0
        %3546 = vmatpush1.msra.mxu0 0.0
        %3547 = vmatprep.subr.mxu0 0.0
        %3548 = vmatpush1.msra.mxu0 0.0
        %3549 = vmatprep.subr.mxu0 0.0
        %3550 = vmatpush1.msra.mxu0 0.0
        %3551 = vmatprep.subr.mxu0 0.0
        %3552 = vmatpush1.msra.mxu0 0.0
        %3553 = vmatprep.subr.mxu0 0.0
        %3554 = vmatpush1.msra.mxu0 0.0
        %3555 = vmatprep.subr.mxu0 0.0
        %3556 = vmatpush1.msra.mxu0 0.0
        %3557 = vmatprep.subr.mxu0 0.0
        %3558 = vmatpush1.msra.mxu0 0.0
        %3559 = vmatprep.subr.mxu0 0.0
        %3560 = vmatpush1.msra.mxu0 0.0
        %3561 = vmatprep.subr.mxu0 0.0
        %3562 = vmatpush1.msra.mxu0 0.0
        %3563 = vmatprep.subr.mxu0 0.0
        %3564 = vmatpush1.msra.mxu0 0.0
        %3565 = vmatprep.subr.mxu0 0.0
        %3566 = vmatpush1.msra.mxu0 0.0
        %3567 = vmatprep.subr.mxu0 0.0
        %3568 = vmatpush1.msra.mxu0 0.0
        %3569 = vmatprep.subr.mxu0 0.0
        %3570 = vmatpush1.msra.mxu0 0.0
        %3571 = vmatprep.subr.mxu0 0.0
        %3572 = vmatpush1.msra.mxu0 0.0
        %3573 = vmatprep.subr.mxu0 0.0
        %3574 = vmatpush1.msra.mxu0 0.0
        %3575 = vmatprep.mubr.f32.mxu0 0.0
        %3576 = vmatmul.mubr.f32.gmra.mrb[0].mxu0 %v3509
        %v3577 = vpop.f32.mrb[0].mxu0
        %v3578 = vadd.f32 0.0, %v3577
        %v3579 = vpop.f32.mrb[0].mxu0
        %v3580 = vadd.f32 0.0, %v3579
        %3581 = vdwg.mxu0
        %v3582 = vadd.f32 %v3492, %v3578
        %v3583 = vadd.f32 %v3494, %v3580
        %s3584 = scalar_lea.vmem %s4, 96
        %v3585 = vld [vmem:[%s3584] sm:$0xff]
        %3586 = vrot.lane.b32.xlu0 %v3320, 1
        %v3587 = vpop.permute.xlu0 %3586
        %3588 = vrot.lane.b32.xlu0 %v3321, 1
        %v3589 = vpop.permute.xlu0 %3588
        %3590 = vrot.lane.b32.xlu0 %v3322, 1
        %v3591 = vpop.permute.xlu0 %3590
        %v3592 = vsel %vm772, %v3587, %v3589
        %v3593 = vsel %vm772, %v3589, %v3591
        %v3597 = vsel %vm337, %v3585, 0
        %3599 = vmatprep.subr.mxu0 %v3593
        %3600 = vmatpush1.msra.mxu0 %v3592
        %3601 = vmatprep.subr.mxu0 0.0
        %3602 = vmatpush1.msra.mxu0 0.0
        %3603 = vmatprep.subr.mxu0 0.0
        %3604 = vmatpush1.msra.mxu0 0.0
        %3605 = vmatprep.subr.mxu0 0.0
        %3606 = vmatpush1.msra.mxu0 0.0
        %3607 = vmatprep.subr.mxu0 0.0
        %3608 = vmatpush1.msra.mxu0 0.0
        %3609 = vmatprep.subr.mxu0 0.0
        %3610 = vmatpush1.msra.mxu0 0.0
        %3611 = vmatprep.subr.mxu0 0.0
        %3612 = vmatpush1.msra.mxu0 0.0
        %3613 = vmatprep.subr.mxu0 0.0
        %3614 = vmatpush1.msra.mxu0 0.0
        %3615 = vmatprep.subr.mxu0 0.0
        %3616 = vmatpush1.msra.mxu0 0.0
        %3617 = vmatprep.subr.mxu0 0.0
        %3618 = vmatpush1.msra.mxu0 0.0
        %3619 = vmatprep.subr.mxu0 0.0
        %3620 = vmatpush1.msra.mxu0 0.0
        %3621 = vmatprep.subr.mxu0 0.0
        %3622 = vmatpush1.msra.mxu0 0.0
        %3623 = vmatprep.subr.mxu0 0.0
        %3624 = vmatpush1.msra.mxu0 0.0
        %3625 = vmatprep.subr.mxu0 0.0
        %3626 = vmatpush1.msra.mxu0 0.0
        %3627 = vmatprep.subr.mxu0 0.0
        %3628 = vmatpush1.msra.mxu0 0.0
        %3629 = vmatprep.subr.mxu0 0.0
        %3630 = vmatpush1.msra.mxu0 0.0
        %3631 = vmatprep.subr.mxu0 0.0
        %3632 = vmatpush1.msra.mxu0 0.0
        %3633 = vmatprep.subr.mxu0 0.0
        %3634 = vmatpush1.msra.mxu0 0.0
        %3635 = vmatprep.subr.mxu0 0.0
        %3636 = vmatpush1.msra.mxu0 0.0
        %3637 = vmatprep.subr.mxu0 0.0
        %3638 = vmatpush1.msra.mxu0 0.0
        %3639 = vmatprep.subr.mxu0 0.0
        %3640 = vmatpush1.msra.mxu0 0.0
        %3641 = vmatprep.subr.mxu0 0.0
        %3642 = vmatpush1.msra.mxu0 0.0
        %3643 = vmatprep.subr.mxu0 0.0
        %3644 = vmatpush1.msra.mxu0 0.0
        %3645 = vmatprep.subr.mxu0 0.0
        %3646 = vmatpush1.msra.mxu0 0.0
        %3647 = vmatprep.subr.mxu0 0.0
        %3648 = vmatpush1.msra.mxu0 0.0
        %3649 = vmatprep.subr.mxu0 0.0
        %3650 = vmatpush1.msra.mxu0 0.0
        %3651 = vmatprep.subr.mxu0 0.0
        %3652 = vmatpush1.msra.mxu0 0.0
        %3653 = vmatprep.subr.mxu0 0.0
        %3654 = vmatpush1.msra.mxu0 0.0
        %3655 = vmatprep.subr.mxu0 0.0
        %3656 = vmatpush1.msra.mxu0 0.0
        %3657 = vmatprep.subr.mxu0 0.0
        %3658 = vmatpush1.msra.mxu0 0.0
        %3659 = vmatprep.subr.mxu0 0.0
        %3660 = vmatpush1.msra.mxu0 0.0
        %3661 = vmatprep.subr.mxu0 0.0
        %3662 = vmatpush1.msra.mxu0 0.0
        %3663 = vmatprep.mubr.f32.mxu0 0.0
        %3664 = vmatmul.mubr.f32.gmra.mrb[0].mxu0 %v3597
        %v3665 = vpop.f32.mrb[0].mxu0
        %v3666 = vadd.f32 0.0, %v3665
        %v3667 = vpop.f32.mrb[0].mxu0
        %v3668 = vadd.f32 0.0, %v3667
        %3669 = vdwg.mxu0
        %v3670 = vadd.f32 %v3582, %v3666
        %v3671 = vadd.f32 %v3583, %v3668
        %s3672 = scalar_lea.vmem %s4, 104
        %v3673 = vld [vmem:[%s3672] sm:$0xff]
        %v3675 = vsel %vm337, %v3673, 0
        %3677 = vmatprep.subr.mxu0 %v3322
        %3678 = vmatpush1.msra.mxu0 %v3321
        %3679 = vmatprep.subr.mxu0 0.0
        %3680 = vmatpush1.msra.mxu0 0.0
        %3681 = vmatprep.subr.mxu0 0.0
        %3682 = vmatpush1.msra.mxu0 0.0
        %3683 = vmatprep.subr.mxu0 0.0
        %3684 = vmatpush1.msra.mxu0 0.0
        %3685 = vmatprep.subr.mxu0 0.0
        %3686 = vmatpush1.msra.mxu0 0.0
        %3687 = vmatprep.subr.mxu0 0.0
        %3688 = vmatpush1.msra.mxu0 0.0
        %3689 = vmatprep.subr.mxu0 0.0
        %3690 = vmatpush1.msra.mxu0 0.0
        %3691 = vmatprep.subr.mxu0 0.0
        %3692 = vmatpush1.msra.mxu0 0.0
        %3693 = vmatprep.subr.mxu0 0.0
        %3694 = vmatpush1.msra.mxu0 0.0
        %3695 = vmatprep.subr.mxu0 0.0
        %3696 = vmatpush1.msra.mxu0 0.0
        %3697 = vmatprep.subr.mxu0 0.0
        %3698 = vmatpush1.msra.mxu0 0.0
        %3699 = vmatprep.subr.mxu0 0.0
        %3700 = vmatpush1.msra.mxu0 0.0
        %3701 = vmatprep.subr.mxu0 0.0
        %3702 = vmatpush1.msra.mxu0 0.0
        %3703 = vmatprep.subr.mxu0 0.0
        %3704 = vmatpush1.msra.mxu0 0.0
        %3705 = vmatprep.subr.mxu0 0.0
        %3706 = vmatpush1.msra.mxu0 0.0
        %3707 = vmatprep.subr.mxu0 0.0
        %3708 = vmatpush1.msra.mxu0 0.0
        %3709 = vmatprep.subr.mxu0 0.0
        %3710 = vmatpush1.msra.mxu0 0.0
        %3711 = vmatprep.subr.mxu0 0.0
        %3712 = vmatpush1.msra.mxu0 0.0
        %3713 = vmatprep.subr.mxu0 0.0
        %3714 = vmatpush1.msra.mxu0 0.0
        %3715 = vmatprep.subr.mxu0 0.0
        %3716 = vmatpush1.msra.mxu0 0.0
        %3717 = vmatprep.subr.mxu0 0.0
        %3718 = vmatpush1.msra.mxu0 0.0
        %3719 = vmatprep.subr.mxu0 0.0
        %3720 = vmatpush1.msra.mxu0 0.0
        %3721 = vmatprep.subr.mxu0 0.0
        %3722 = vmatpush1.msra.mxu0 0.0
        %3723 = vmatprep.subr.mxu0 0.0
        %3724 = vmatpush1.msra.mxu0 0.0
        %3725 = vmatprep.subr.mxu0 0.0
        %3726 = vmatpush1.msra.mxu0 0.0
        %3727 = vmatprep.subr.mxu0 0.0
        %3728 = vmatpush1.msra.mxu0 0.0
        %3729 = vmatprep.subr.mxu0 0.0
        %3730 = vmatpush1.msra.mxu0 0.0
        %3731 = vmatprep.subr.mxu0 0.0
        %3732 = vmatpush1.msra.mxu0 0.0
        %3733 = vmatprep.subr.mxu0 0.0
        %3734 = vmatpush1.msra.mxu0 0.0
        %3735 = vmatprep.subr.mxu0 0.0
        %3736 = vmatpush1.msra.mxu0 0.0
        %3737 = vmatprep.subr.mxu0 0.0
        %3738 = vmatpush1.msra.mxu0 0.0
        %3739 = vmatprep.subr.mxu0 0.0
        %3740 = vmatpush1.msra.mxu0 0.0
        %3741 = vmatprep.mubr.f32.mxu0 0.0
        %3742 = vmatmul.mubr.f32.gmra.mrb[0].mxu0 %v3675
        %v3743 = vpop.f32.mrb[0].mxu0
        %v3744 = vadd.f32 0.0, %v3743
        %v3745 = vpop.f32.mrb[0].mxu0
        %v3746 = vadd.f32 0.0, %v3745
        %3747 = vdwg.mxu0
        %v3748 = vadd.f32 %v3670, %v3744
        %v3749 = vadd.f32 %v3671, %v3746
        %s3750 = scalar_lea.vmem %s4, 112
        %v3751 = vld [vmem:[%s3750] sm:$0xff]
        %3752 = vrot.lane.b32.xlu0 %v3321, 127
        %v3753 = vpop.permute.xlu0 %3752
        %3754 = vrot.lane.b32.xlu0 %v3322, 127
        %v3755 = vpop.permute.xlu0 %3754
        %v3756 = vsel %vm937, %v3753, %v3755
        %v3760 = vsel %vm337, %v3751, 0
        %3762 = vmatprep.subr.mxu0 %v3755
        %3763 = vmatpush1.msra.mxu0 %v3756
        %3764 = vmatprep.subr.mxu0 0.0
        %3765 = vmatpush1.msra.mxu0 0.0
        %3766 = vmatprep.subr.mxu0 0.0
        %3767 = vmatpush1.msra.mxu0 0.0
        %3768 = vmatprep.subr.mxu0 0.0
        %3769 = vmatpush1.msra.mxu0 0.0
        %3770 = vmatprep.subr.mxu0 0.0
        %3771 = vmatpush1.msra.mxu0 0.0
        %3772 = vmatprep.subr.mxu0 0.0
        %3773 = vmatpush1.msra.mxu0 0.0
        %3774 = vmatprep.subr.mxu0 0.0
        %3775 = vmatpush1.msra.mxu0 0.0
        %3776 = vmatprep.subr.mxu0 0.0
        %3777 = vmatpush1.msra.mxu0 0.0
        %3778 = vmatprep.subr.mxu0 0.0
        %3779 = vmatpush1.msra.mxu0 0.0
        %3780 = vmatprep.subr.mxu0 0.0
        %3781 = vmatpush1.msra.mxu0 0.0
        %3782 = vmatprep.subr.mxu0 0.0
        %3783 = vmatpush1.msra.mxu0 0.0
        %3784 = vmatprep.subr.mxu0 0.0
        %3785 = vmatpush1.msra.mxu0 0.0
        %3786 = vmatprep.subr.mxu0 0.0
        %3787 = vmatpush1.msra.mxu0 0.0
        %3788 = vmatprep.subr.mxu0 0.0
        %3789 = vmatpush1.msra.mxu0 0.0
        %3790 = vmatprep.subr.mxu0 0.0
        %3791 = vmatpush1.msra.mxu0 0.0
        %3792 = vmatprep.subr.mxu0 0.0
        %3793 = vmatpush1.msra.mxu0 0.0
        %3794 = vmatprep.subr.mxu0 0.0
        %3795 = vmatpush1.msra.mxu0 0.0
        %3796 = vmatprep.subr.mxu0 0.0
        %3797 = vmatpush1.msra.mxu0 0.0
        %3798 = vmatprep.subr.mxu0 0.0
        %3799 = vmatpush1.msra.mxu0 0.0
        %3800 = vmatprep.subr.mxu0 0.0
        %3801 = vmatpush1.msra.mxu0 0.0
        %3802 = vmatprep.subr.mxu0 0.0
        %3803 = vmatpush1.msra.mxu0 0.0
        %3804 = vmatprep.subr.mxu0 0.0
        %3805 = vmatpush1.msra.mxu0 0.0
        %3806 = vmatprep.subr.mxu0 0.0
        %3807 = vmatpush1.msra.mxu0 0.0
        %3808 = vmatprep.subr.mxu0 0.0
        %3809 = vmatpush1.msra.mxu0 0.0
        %3810 = vmatprep.subr.mxu0 0.0
        %3811 = vmatpush1.msra.mxu0 0.0
        %3812 = vmatprep.subr.mxu0 0.0
        %3813 = vmatpush1.msra.mxu0 0.0
        %3814 = vmatprep.subr.mxu0 0.0
        %3815 = vmatpush1.msra.mxu0 0.0
        %3816 = vmatprep.subr.mxu0 0.0
        %3817 = vmatpush1.msra.mxu0 0.0
        %3818 = vmatprep.subr.mxu0 0.0
        %3819 = vmatpush1.msra.mxu0 0.0
        %3820 = vmatprep.subr.mxu0 0.0
        %3821 = vmatpush1.msra.mxu0 0.0
        %3822 = vmatprep.subr.mxu0 0.0
        %3823 = vmatpush1.msra.mxu0 0.0
        %3824 = vmatprep.subr.mxu0 0.0
        %3825 = vmatpush1.msra.mxu0 0.0
        %3826 = vmatprep.mubr.f32.mxu0 0.0
        %3827 = vmatmul.mubr.f32.gmra.mrb[0].mxu0 %v3760
        %v3828 = vpop.f32.mrb[0].mxu0
        %v3829 = vadd.f32 0.0, %v3828
        %v3830 = vpop.f32.mrb[0].mxu0
        %v3831 = vadd.f32 0.0, %v3830
        %3832 = vdwg.mxu0
        %v3833 = vadd.f32 %v3748, %v3829
        %v3834 = vadd.f32 %v3749, %v3831
        %s3835 = scalar_lea.vmem %s4, 120
        %v3836 = vld [vmem:[%s3835] sm:$0xff]
        %3837 = vrot.lane.b32.xlu0 %v3321, 114
        %v3838 = vpop.permute.xlu0 %3837
        %3839 = vrot.lane.b32.xlu0 %v3322, 114
        %v3840 = vpop.permute.xlu0 %3839
        %v3841 = vsel %vm1195, %v3838, %v3840
        %v3845 = vsel %vm337, %v3836, 0
        %3847 = vmatprep.subr.mxu0 %v3840
        %3848 = vmatpush1.msra.mxu0 %v3841
        %3849 = vmatprep.subr.mxu0 0.0
        %3850 = vmatpush1.msra.mxu0 0.0
        %3851 = vmatprep.subr.mxu0 0.0
        %3852 = vmatpush1.msra.mxu0 0.0
        %3853 = vmatprep.subr.mxu0 0.0
        %3854 = vmatpush1.msra.mxu0 0.0
        %3855 = vmatprep.subr.mxu0 0.0
        %3856 = vmatpush1.msra.mxu0 0.0
        %3857 = vmatprep.subr.mxu0 0.0
        %3858 = vmatpush1.msra.mxu0 0.0
        %3859 = vmatprep.subr.mxu0 0.0
        %3860 = vmatpush1.msra.mxu0 0.0
        %3861 = vmatprep.subr.mxu0 0.0
        %3862 = vmatpush1.msra.mxu0 0.0
        %3863 = vmatprep.subr.mxu0 0.0
        %3864 = vmatpush1.msra.mxu0 0.0
        %3865 = vmatprep.subr.mxu0 0.0
        %3866 = vmatpush1.msra.mxu0 0.0
        %3867 = vmatprep.subr.mxu0 0.0
        %3868 = vmatpush1.msra.mxu0 0.0
        %3869 = vmatprep.subr.mxu0 0.0
        %3870 = vmatpush1.msra.mxu0 0.0
        %3871 = vmatprep.subr.mxu0 0.0
        %3872 = vmatpush1.msra.mxu0 0.0
        %3873 = vmatprep.subr.mxu0 0.0
        %3874 = vmatpush1.msra.mxu0 0.0
        %3875 = vmatprep.subr.mxu0 0.0
        %3876 = vmatpush1.msra.mxu0 0.0
        %3877 = vmatprep.subr.mxu0 0.0
        %3878 = vmatpush1.msra.mxu0 0.0
        %3879 = vmatprep.subr.mxu0 0.0
        %3880 = vmatpush1.msra.mxu0 0.0
        %3881 = vmatprep.subr.mxu0 0.0
        %3882 = vmatpush1.msra.mxu0 0.0
        %3883 = vmatprep.subr.mxu0 0.0
        %3884 = vmatpush1.msra.mxu0 0.0
        %3885 = vmatprep.subr.mxu0 0.0
        %3886 = vmatpush1.msra.mxu0 0.0
        %3887 = vmatprep.subr.mxu0 0.0
        %3888 = vmatpush1.msra.mxu0 0.0
        %3889 = vmatprep.subr.mxu0 0.0
        %3890 = vmatpush1.msra.mxu0 0.0
        %3891 = vmatprep.subr.mxu0 0.0
        %3892 = vmatpush1.msra.mxu0 0.0
        %3893 = vmatprep.subr.mxu0 0.0
        %3894 = vmatpush1.msra.mxu0 0.0
        %3895 = vmatprep.subr.mxu0 0.0
        %3896 = vmatpush1.msra.mxu0 0.0
        %3897 = vmatprep.subr.mxu0 0.0
        %3898 = vmatpush1.msra.mxu0 0.0
        %3899 = vmatprep.subr.mxu0 0.0
        %3900 = vmatpush1.msra.mxu0 0.0
        %3901 = vmatprep.subr.mxu0 0.0
        %3902 = vmatpush1.msra.mxu0 0.0
        %3903 = vmatprep.subr.mxu0 0.0
        %3904 = vmatpush1.msra.mxu0 0.0
        %3905 = vmatprep.subr.mxu0 0.0
        %3906 = vmatpush1.msra.mxu0 0.0
        %3907 = vmatprep.subr.mxu0 0.0
        %3908 = vmatpush1.msra.mxu0 0.0
        %3909 = vmatprep.subr.mxu0 0.0
        %3910 = vmatpush1.msra.mxu0 0.0
        %3911 = vmatprep.mubr.f32.mxu0 0.0
        %3912 = vmatmul.mubr.f32.gmra.mrb[0].mxu0 %v3845
        %v3913 = vpop.f32.mrb[0].mxu0
        %v3914 = vadd.f32 0.0, %v3913
        %v3915 = vpop.f32.mrb[0].mxu0
        %v3916 = vadd.f32 0.0, %v3915
        %3917 = vdwg.mxu0
        %v3918 = vadd.f32 %v3833, %v3914
        %v3919 = vadd.f32 %v3834, %v3916
        %s3920 = scalar_lea.vmem %s4, 128
        %v3921 = vld [vmem:[%s3920] sm:$0xff]
        %3922 = vrot.lane.b32.xlu0 %v3321, 113
        %v3923 = vpop.permute.xlu0 %3922
        %3924 = vrot.lane.b32.xlu0 %v3322, 113
        %v3925 = vpop.permute.xlu0 %3924
        %v3926 = vsel %vm1281, %v3923, %v3925
        %v3930 = vsel %vm337, %v3921, 0
        %3932 = vmatprep.subr.mxu0 %v3925
        %3933 = vmatpush1.msra.mxu0 %v3926
        %3934 = vmatprep.subr.mxu0 0.0
        %3935 = vmatpush1.msra.mxu0 0.0
        %3936 = vmatprep.subr.mxu0 0.0
        %3937 = vmatpush1.msra.mxu0 0.0
        %3938 = vmatprep.subr.mxu0 0.0
        %3939 = vmatpush1.msra.mxu0 0.0
        %3940 = vmatprep.subr.mxu0 0.0
        %3941 = vmatpush1.msra.mxu0 0.0
        %3942 = vmatprep.subr.mxu0 0.0
        %3943 = vmatpush1.msra.mxu0 0.0
        %3944 = vmatprep.subr.mxu0 0.0
        %3945 = vmatpush1.msra.mxu0 0.0
        %3946 = vmatprep.subr.mxu0 0.0
        %3947 = vmatpush1.msra.mxu0 0.0
        %3948 = vmatprep.subr.mxu0 0.0
        %3949 = vmatpush1.msra.mxu0 0.0
        %3950 = vmatprep.subr.mxu0 0.0
        %3951 = vmatpush1.msra.mxu0 0.0
        %3952 = vmatprep.subr.mxu0 0.0
        %3953 = vmatpush1.msra.mxu0 0.0
        %3954 = vmatprep.subr.mxu0 0.0
        %3955 = vmatpush1.msra.mxu0 0.0
        %3956 = vmatprep.subr.mxu0 0.0
        %3957 = vmatpush1.msra.mxu0 0.0
        %3958 = vmatprep.subr.mxu0 0.0
        %3959 = vmatpush1.msra.mxu0 0.0
        %3960 = vmatprep.subr.mxu0 0.0
        %3961 = vmatpush1.msra.mxu0 0.0
        %3962 = vmatprep.subr.mxu0 0.0
        %3963 = vmatpush1.msra.mxu0 0.0
        %3964 = vmatprep.subr.mxu0 0.0
        %3965 = vmatpush1.msra.mxu0 0.0
        %3966 = vmatprep.subr.mxu0 0.0
        %3967 = vmatpush1.msra.mxu0 0.0
        %3968 = vmatprep.subr.mxu0 0.0
        %3969 = vmatpush1.msra.mxu0 0.0
        %3970 = vmatprep.subr.mxu0 0.0
        %3971 = vmatpush1.msra.mxu0 0.0
        %3972 = vmatprep.subr.mxu0 0.0
        %3973 = vmatpush1.msra.mxu0 0.0
        %3974 = vmatprep.subr.mxu0 0.0
        %3975 = vmatpush1.msra.mxu0 0.0
        %3976 = vmatprep.subr.mxu0 0.0
        %3977 = vmatpush1.msra.mxu0 0.0
        %3978 = vmatprep.subr.mxu0 0.0
        %3979 = vmatpush1.msra.mxu0 0.0
        %3980 = vmatprep.subr.mxu0 0.0
        %3981 = vmatpush1.msra.mxu0 0.0
        %3982 = vmatprep.subr.mxu0 0.0
        %3983 = vmatpush1.msra.mxu0 0.0
        %3984 = vmatprep.subr.mxu0 0.0
        %3985 = vmatpush1.msra.mxu0 0.0
        %3986 = vmatprep.subr.mxu0 0.0
        %3987 = vmatpush1.msra.mxu0 0.0
        %3988 = vmatprep.subr.mxu0 0.0
        %3989 = vmatpush1.msra.mxu0 0.0
        %3990 = vmatprep.subr.mxu0 0.0
        %3991 = vmatpush1.msra.mxu0 0.0
        %3992 = vmatprep.subr.mxu0 0.0
        %3993 = vmatpush1.msra.mxu0 0.0
        %3994 = vmatprep.subr.mxu0 0.0
        %3995 = vmatpush1.msra.mxu0 0.0
        %3996 = vmatprep.mubr.f32.mxu0 0.0
        %3997 = vmatmul.mubr.f32.gmra.mrb[0].mxu0 %v3930
        %v3998 = vpop.f32.mrb[0].mxu0
        %v3999 = vadd.f32 0.0, %v3998
        %v4000 = vpop.f32.mrb[0].mxu0
        %v4001 = vadd.f32 0.0, %v4000
        %4002 = vdwg.mxu0
        %v4003 = vadd.f32 %v3918, %v3999
        %v4004 = vadd.f32 %v3919, %v4001
        %s4005 = scalar_lea.vmem %s4, 136
        %v4006 = vld [vmem:[%s4005] sm:$0xff]
        %4007 = vrot.lane.b32.xlu0 %v3321, 112
        %v4008 = vpop.permute.xlu0 %4007
        %4009 = vrot.lane.b32.xlu0 %v3322, 112
        %v4010 = vpop.permute.xlu0 %4009
        %v4011 = vsel %vm1367, %v4008, %v4010
        %v4015 = vsel %vm337, %v4006, 0
        %4017 = vmatprep.subr.mxu0 %v4010
        %4018 = vmatpush1.msra.mxu0 %v4011
        %4019 = vmatprep.subr.mxu0 0.0
        %4020 = vmatpush1.msra.mxu0 0.0
        %4021 = vmatprep.subr.mxu0 0.0
        %4022 = vmatpush1.msra.mxu0 0.0
        %4023 = vmatprep.subr.mxu0 0.0
        %4024 = vmatpush1.msra.mxu0 0.0
        %4025 = vmatprep.subr.mxu0 0.0
        %4026 = vmatpush1.msra.mxu0 0.0
        %4027 = vmatprep.subr.mxu0 0.0
        %4028 = vmatpush1.msra.mxu0 0.0
        %4029 = vmatprep.subr.mxu0 0.0
        %4030 = vmatpush1.msra.mxu0 0.0
        %4031 = vmatprep.subr.mxu0 0.0
        %4032 = vmatpush1.msra.mxu0 0.0
        %4033 = vmatprep.subr.mxu0 0.0
        %4034 = vmatpush1.msra.mxu0 0.0
        %4035 = vmatprep.subr.mxu0 0.0
        %4036 = vmatpush1.msra.mxu0 0.0
        %4037 = vmatprep.subr.mxu0 0.0
        %4038 = vmatpush1.msra.mxu0 0.0
        %4039 = vmatprep.subr.mxu0 0.0
        %4040 = vmatpush1.msra.mxu0 0.0
        %4041 = vmatprep.subr.mxu0 0.0
        %4042 = vmatpush1.msra.mxu0 0.0
        %4043 = vmatprep.subr.mxu0 0.0
        %4044 = vmatpush1.msra.mxu0 0.0
        %4045 = vmatprep.subr.mxu0 0.0
        %4046 = vmatpush1.msra.mxu0 0.0
        %4047 = vmatprep.subr.mxu0 0.0
        %4048 = vmatpush1.msra.mxu0 0.0
        %4049 = vmatprep.subr.mxu0 0.0
        %4050 = vmatpush1.msra.mxu0 0.0
        %4051 = vmatprep.subr.mxu0 0.0
        %4052 = vmatpush1.msra.mxu0 0.0
        %4053 = vmatprep.subr.mxu0 0.0
        %4054 = vmatpush1.msra.mxu0 0.0
        %4055 = vmatprep.subr.mxu0 0.0
        %4056 = vmatpush1.msra.mxu0 0.0
        %4057 = vmatprep.subr.mxu0 0.0
        %4058 = vmatpush1.msra.mxu0 0.0
        %4059 = vmatprep.subr.mxu0 0.0
        %4060 = vmatpush1.msra.mxu0 0.0
        %4061 = vmatprep.subr.mxu0 0.0
        %4062 = vmatpush1.msra.mxu0 0.0
        %4063 = vmatprep.subr.mxu0 0.0
        %4064 = vmatpush1.msra.mxu0 0.0
        %4065 = vmatprep.subr.mxu0 0.0
        %4066 = vmatpush1.msra.mxu0 0.0
        %4067 = vmatprep.subr.mxu0 0.0
        %4068 = vmatpush1.msra.mxu0 0.0
        %4069 = vmatprep.subr.mxu0 0.0
        %4070 = vmatpush1.msra.mxu0 0.0
        %4071 = vmatprep.subr.mxu0 0.0
        %4072 = vmatpush1.msra.mxu0 0.0
        %4073 = vmatprep.subr.mxu0 0.0
        %4074 = vmatpush1.msra.mxu0 0.0
        %4075 = vmatprep.subr.mxu0 0.0
        %4076 = vmatpush1.msra.mxu0 0.0
        %4077 = vmatprep.subr.mxu0 0.0
        %4078 = vmatpush1.msra.mxu0 0.0
        %4079 = vmatprep.subr.mxu0 0.0
        %4080 = vmatpush1.msra.mxu0 0.0
        %4081 = vmatprep.mubr.f32.mxu0 0.0
        %4082 = vmatmul.mubr.f32.gmra.mrb[0].mxu0 %v4015
        %v4083 = vpop.f32.mrb[0].mxu0
        %v4084 = vadd.f32 0.0, %v4083
        %v4085 = vpop.f32.mrb[0].mxu0
        %v4086 = vadd.f32 0.0, %v4085
        %4087 = vdwg.mxu0
        %v4088 = vadd.f32 %v4003, %v4084
        %v4089 = vadd.f32 %v4004, %v4086
        %s4090 = scalar_lea.vmem %s5, 8
        %v4091 = vld [vmem:[%s4090] sm:$0xff]
        %4093 = vset.pattern.permute.xlu0 0
        %4094 = vperm.xlu0 %4093, %v4091
        %v4095 = vpop.permute.xlu0 %4094
        %v4097 = vadd.f32 %v4088, %v4095
        %v4098 = vadd.f32 %v4089, %v4095
        %v4099 = vmax.f32 %v4097, 0.0
        %v4100 = vmax.f32 %v4098, 0.0
        %v4101 = vmul.f32 %v4099, %v2519
        %v4102 = vmul.f32 %v4100, %v2523
        %v4103 = vld [vmem:[%s6] sm:$0x1]
        %v4104 = vld [vmem:[#allocation4] sm:$0x1]
        %4106 = vset.pattern.permute.xlu0 0
        %4107 = vperm.xlu0 %4106, %v4104
        %v4108 = vpop.permute.xlu0 %4107
        %v4110 = vlaneseq
        %v4111 = vshrl.u32 %v4110, 7
        %v4112 = vsub.s32 0, %v4111
        %v4113 = vrot.slane %v4108, %v4112
        %v4115 = vsel %vm337, %v4103, 0
        %4117 = vmatprep.subr.mxu0 %v4102
        %4118 = vmatpush1.msra.mxu0 %v4101
        %4119 = vmatprep.subr.mxu0 0.0
        %4120 = vmatpush1.msra.mxu0 0.0
        %4121 = vmatprep.subr.mxu0 0.0
        %4122 = vmatpush1.msra.mxu0 0.0
        %4123 = vmatprep.subr.mxu0 0.0
        %4124 = vmatpush1.msra.mxu0 0.0
        %4125 = vmatprep.subr.mxu0 0.0
        %4126 = vmatpush1.msra.mxu0 0.0
        %4127 = vmatprep.subr.mxu0 0.0
        %4128 = vmatpush1.msra.mxu0 0.0
        %4129 = vmatprep.subr.mxu0 0.0
        %4130 = vmatpush1.msra.mxu0 0.0
        %4131 = vmatprep.subr.mxu0 0.0
        %4132 = vmatpush1.msra.mxu0 0.0
        %4133 = vmatprep.subr.mxu0 0.0
        %4134 = vmatpush1.msra.mxu0 0.0
        %4135 = vmatprep.subr.mxu0 0.0
        %4136 = vmatpush1.msra.mxu0 0.0
        %4137 = vmatprep.subr.mxu0 0.0
        %4138 = vmatpush1.msra.mxu0 0.0
        %4139 = vmatprep.subr.mxu0 0.0
        %4140 = vmatpush1.msra.mxu0 0.0
        %4141 = vmatprep.subr.mxu0 0.0
        %4142 = vmatpush1.msra.mxu0 0.0
        %4143 = vmatprep.subr.mxu0 0.0
        %4144 = vmatpush1.msra.mxu0 0.0
        %4145 = vmatprep.subr.mxu0 0.0
        %4146 = vmatpush1.msra.mxu0 0.0
        %4147 = vmatprep.subr.mxu0 0.0
        %4148 = vmatpush1.msra.mxu0 0.0
        %4149 = vmatprep.subr.mxu0 0.0
        %4150 = vmatpush1.msra.mxu0 0.0
        %4151 = vmatprep.subr.mxu0 0.0
        %4152 = vmatpush1.msra.mxu0 0.0
        %4153 = vmatprep.subr.mxu0 0.0
        %4154 = vmatpush1.msra.mxu0 0.0
        %4155 = vmatprep.subr.mxu0 0.0
        %4156 = vmatpush1.msra.mxu0 0.0
        %4157 = vmatprep.subr.mxu0 0.0
        %4158 = vmatpush1.msra.mxu0 0.0
        %4159 = vmatprep.subr.mxu0 0.0
        %4160 = vmatpush1.msra.mxu0 0.0
        %4161 = vmatprep.subr.mxu0 0.0
        %4162 = vmatpush1.msra.mxu0 0.0
        %4163 = vmatprep.subr.mxu0 0.0
        %4164 = vmatpush1.msra.mxu0 0.0
        %4165 = vmatprep.subr.mxu0 0.0
        %4166 = vmatpush1.msra.mxu0 0.0
        %4167 = vmatprep.subr.mxu0 0.0
        %4168 = vmatpush1.msra.mxu0 0.0
        %4169 = vmatprep.subr.mxu0 0.0
        %4170 = vmatpush1.msra.mxu0 0.0
        %4171 = vmatprep.subr.mxu0 0.0
        %4172 = vmatpush1.msra.mxu0 0.0
        %4173 = vmatprep.subr.mxu0 0.0
        %4174 = vmatpush1.msra.mxu0 0.0
        %4175 = vmatprep.subr.mxu0 0.0
        %4176 = vmatpush1.msra.mxu0 0.0
        %4177 = vmatprep.subr.mxu0 0.0
        %4178 = vmatpush1.msra.mxu0 0.0
        %4179 = vmatprep.subr.mxu0 0.0
        %4180 = vmatpush1.msra.mxu0 0.0
        %4181 = vmatprep.mubr.f32.mxu0 0.0
        %4182 = vmatmul.mubr.f32.gmra.mrb[0].mxu0 %v4115
        %v4183 = vpop.f32.mrb[0].mxu0
        %v4184 = vadd.f32 %v4113, %v4183
        %v4185 = vpop.f32.mrb[0].mxu0
        %v4186 = vadd.f32 %v4113, %v4185
        %4187 = vdwg.mxu0
        %v4190 = vcombine.low %v4184, %v4186
        %v4192 = vunpack.c.l.s4 1966171168
        %v4193 = vunpack.c.0.s8 %v4192
        %v4194 = vlaneseq
        %v4195 = vshrl.u32 %v4194, 7
        %v4196 = vsub.s32 %v4193, %v4195
        %v4197 = vrot.slane %v4190, %v4196
        %v4199 = vunpack.c.l.s4 1966171168
        %v4200 = vunpack.c.0.s8 %v4199
        %v4201 = vlaneseq
        %v4202 = vshrl.u32 %v4201, 7
        %v4203 = vsub.s32 %v4200, %v4202
        %v4204 = vrot.slane %v4197, %v4203
        %v4206 = vlaneseq
        %vm4207 = vcmp.ge.s32.totalorder %v4206, 0
        %vm4208 = vcmp.lt.s32.totalorder %v4206, 225
        %vm4209 = vmand %vm4207, %vm4208
        %4210 = vst.msk [vmem:[%s300] sm:$0x3] %vm4209, %v4204
        %s4211 = sand.u32 %s205, 1
        %s4212 = scalar_lea.sflag [#allocation6], %s4211
        %s4213 = sand.u32 %s205, 1
        %s4214 = smul.addr %s4213, 2
        %s4215 = scalar_lea.vmem [#allocation5], %s4214
        // Predicated region
        $region53: #{tpu_custom_call.1} parent=51 // pred_check
          %p4216 = pneg %p215
        $region54: #{tpu_custom_call.1} parent=51 // pred_check_branch
          %4218 = sbr.rel (%p4216) target = $region56
        $region55: #{tpu_custom_call.1} parent=51 // pred_region
          %s4220 = ssub.s32 32, 32
          %4221 = vsyncadd %s4212, %s4220
          %s4222 = smul.addr %s24, 2
          %s4223 = smul.addr %s4222, 16
          %s4224 = scalar_lea.hbm %s8, %s4223
          %s4226 = sshll.u32 %s4215, 4
          %s4227 = int_to_ptr.vmem [resolvable:$true] %s4226
          %4229 = dma.vmem_to_hbm [thread:$0]  %s4227, 32, %s4224, %s4212
        $region56: #{tpu_custom_call.1} parent=51 // pred_fallthru
          _
      $region52: #{tpu_custom_call.1} parent=5 // pred_fallthru
        _
      %p4230 = scmp.le.s32.totalorder 2, %s19
      // Predicated region
      $region57: #{tpu_custom_call.1} parent=5 // pred_check
        %p4231 = pneg %p4230
      $region58: #{tpu_custom_call.1} parent=5 // pred_check_branch
        %4233 = sbr.rel (%p4231) target = $region60
      $region59: #{tpu_custom_call.1} parent=5 // pred_region
        %s4234 = ssub.s32 %s19, 2
        // Predicated region
        $region61: #{tpu_custom_call.1} parent=59 // pred_check
          %p4235 = pneg %p221
        $region62: #{tpu_custom_call.1} parent=59 // pred_check_branch
          %4237 = sbr.rel (%p4235) target = $region64
        $region63: #{tpu_custom_call.1} parent=59 // pred_region
          %s4238 = sand.u32 %s206, 1
          %s4239 = scalar_lea.sflag [#allocation6], %s4238
          %s4240 = sand.u32 %s206, 1
          %s4241 = smul.addr %s4240, 2
          %s4242 = scalar_lea.vmem [#allocation5], %s4241
          %4243 = dma.done %s4239, 32
        $region64: #{tpu_custom_call.1} parent=59 // pred_fallthru
          _
      $region60: #{tpu_custom_call.1} parent=5 // pred_fallthru
        _
    $region6: #{tpu_custom_call.1} parent=1 // loop_footer
      %s23 = sadd.s32 1, %s19
    $region7: #{tpu_custom_call.1} parent=1 // loop_footer_branch
      %18 = sbr.rel target = $region3
    $region8: #{tpu_custom_call.1} parent=1 // loop_exit
      _
    %4244 = vsyncpa [#allocation6], 1
    %s4245 = scalar_lea.sflag [#allocation6], 1
    %4246 = vsyncpa %s4245, 1

</llo_original>
